<compile_context>
chip_gen: v5e
topology: v5e:2x2
jax: 0.10.0
libtpu: 0.0.40
codegen_flags: <defaults>
</compile_context>

<pallas_src>
import jax
import jax.numpy as jnp
from jax.experimental import pallas as pl
from jax.experimental.pallas import tpu as pltpu

jax.config.update("jax_default_matmul_precision", "highest")

HIDDEN = 100   # fixed by the module (nn.LSTM hidden_size=100, linear2: 100 -> 1)
HP = 128       # hidden padded to a full lane tile; padded lanes provably stay 0


def seqmodel_kernel(gidx_ref, gate_tab_ref, whh_ref, b_ref, w2_ref, b2_ref, out_ref):
    """Single-program kernel (everything fits comfortably in VMEM at these sizes).

    gidx_ref     : [3B, 1] int32 fused gather index: rows 0..B-1 = pos entity,
                   B..2B-1 = neg entity, 2B..3B-1 = path index offset by n_ent
    gate_tab_ref : [n_ent + n_path, 4*HP]  embedding tables pre-multiplied by the
                   stacked input->gate weights (i, f, g, o blocks of width HP)
    whh_ref      : [HP, 4*HP]  stacked hidden->gate weights (zero-padded)
    b_ref        : [1, 4*HP]   b_ih + b_hh, stacked / zero-padded
    w2_ref       : [1, HP]     linear2 weight row (zero-padded)
    b2_ref       : [1, 1]      linear2 bias
    out_ref      : [B, 2]      diff per timestep
    """
    b = out_ref.shape[0]
    n_rows = gate_tab_ref.shape[0]
    hi = jax.lax.Precision.HIGHEST

    # --- one fused one-hot gather straight into gate pre-activations ---------
    # (embedding tables are folded into W_ih on the host, so this single MXU
    #  pass replaces the previous gather matmuls + input-projection matmuls).
    # TODO(synk): for realistic vocabulary sizes drop the one-hot/VMEM-table
    # design: keep tables in HBM (memory_space=pl.ANY) and DMA-gather rows via
    # scalar-prefetched indices instead.
    gidx = gidx_ref[...]                                               # [3B, 1]
    iota = jax.lax.broadcasted_iota(jnp.int32, (3 * b, n_rows), 1)
    onehot = (iota == gidx).astype(jnp.float32)                        # [3B, n_rows]
    pre = jnp.dot(onehot, gate_tab_ref[...],
                  preferred_element_type=jnp.float32, precision=hi)    # [3B, 4*HP]

    bias = b_ref[...]                                                  # [1, 4*HP]

    # --- timestep 0: h0 == c0 == 0, so the recurrent matmul and the forget
    #     gate are skipped entirely. Rows 0..2B-1 of `pre` are pos;neg. -------
    g0 = pre[:2 * b] + bias                                            # [2B, 4*HP]
    i0 = jax.nn.sigmoid(g0[:, 0 * HP:1 * HP])
    gg0 = jnp.tanh(g0[:, 2 * HP:3 * HP])
    o0 = jax.nn.sigmoid(g0[:, 3 * HP:4 * HP])
    c1 = i0 * gg0
    h1 = o0 * jnp.tanh(c1)                                             # [2B, HP]

    # --- timestep 1: single recurrent matmul; path pre-activation computed
    #     once for B rows and broadcast onto both (pos, neg) halves. ----------
    path_pre = pre[2 * b:3 * b]                                        # [B, 4*HP]
    rec = jnp.dot(h1, whh_ref[...],
                  preferred_element_type=jnp.float32, precision=hi)    # [2B, 4*HP]
    g1 = (rec.reshape(2, b, 4 * HP) + path_pre[None] + bias).reshape(2 * b, 4 * HP)
    i1 = jax.nn.sigmoid(g1[:, 0 * HP:1 * HP])
    f1 = jax.nn.sigmoid(g1[:, 1 * HP:2 * HP])
    gg1 = jnp.tanh(g1[:, 2 * HP:3 * HP])
    o1 = jax.nn.sigmoid(g1[:, 3 * HP:4 * HP])
    c2 = f1 * c1 + i1 * gg1
    h2 = o1 * jnp.tanh(c2)                                             # [2B, HP]

    # --- linear2 head: one stacked VPU multiply + one lane reduction ---------
    h_all = jnp.concatenate([h1, h2], axis=0)                          # [4B, HP]
    y = jnp.sum(h_all * w2_ref[...], axis=-1, keepdims=True) + b2_ref[...]  # [4B, 1]

    # diff = pos - neg per timestep; assemble one [B, 2] block -> single store.
    d = jnp.concatenate([y[0:b] - y[b:2 * b],
                         y[2 * b:3 * b] - y[3 * b:4 * b]], axis=1)     # [B, 2]
    out_ref[...] = d


def init_params(key, ent_size, path_size, embed_size):
    """PyTorch-layout parameters (used by the plain-JAX reference)."""
    ks = jax.random.split(key, 8)
    h = HIDDEN
    bound = 1.0 / (h ** 0.5)
    emb_ent = 0.1 * jax.random.normal(ks[0], (ent_size, embed_size), jnp.float32)
    emb_path = 0.1 * jax.random.normal(ks[1], (path_size, embed_size), jnp.float32)
    wih = jax.random.uniform(ks[2], (4, embed_size, h), jnp.float32, -bound, bound)
    whh = jax.random.uniform(ks[3], (4, h, h), jnp.float32, -bound, bound)
    b_ih = jax.random.uniform(ks[4], (4, 1, h), jnp.float32, -bound, bound)
    b_hh = jax.random.uniform(ks[5], (4, 1, h), jnp.float32, -bound, bound)
    w2 = jax.random.uniform(ks[6], (h, 1), jnp.float32, -0.1, 0.1)
    b2 = jax.random.uniform(ks[7], (1, 1), jnp.float32, -0.1, 0.1)
    return {"emb_ent": emb_ent, "emb_path": emb_path,
            "wih": wih, "whh": whh, "b": b_ih + b_hh, "w2": w2, "b2": b2}


def prepare_kernel_params(params):
    """Zero-pad hidden 100 -> 128, stack the 4 gate blocks, and fold the
    embedding tables into the input->gate projection.

    Padded-lane invariant: gate pre-activation lanes 100..127 of every HP
    block are exactly 0 (W_ih output cols, W_hh, bias, w2 all zero-padded and
    h0 = c0 = 0), so c_pad = 0.5*0 + 0.5*tanh(0) terms stay 0 and h_pad = 0 —
    results are bit-identical to the unpadded recurrence."""
    pad = HP - HIDDEN
    e = params["wih"].shape[1]
    hi = jax.lax.Precision.HIGHEST
    wih_p = jnp.pad(params["wih"], ((0, 0), (0, 0), (0, pad)))       # [4, E, HP]
    whh_p = jnp.pad(params["whh"], ((0, 0), (0, pad), (0, pad)))     # [4, HP, HP]
    b_p = jnp.pad(params["b"], ((0, 0), (0, 0), (0, pad)))           # [4, 1, HP]
    wih_s = jnp.transpose(wih_p, (1, 0, 2)).reshape(e, 4 * HP)       # [E, 4*HP]
    whh_s = jnp.transpose(whh_p, (1, 0, 2)).reshape(HP, 4 * HP)      # [HP, 4*HP]
    # Fold: one-hot @ (emb @ W_ih) == emb[idx] @ W_ih (host-side, once).
    ent_tab = jnp.dot(params["emb_ent"], wih_s, precision=hi)        # [n_ent, 4*HP]
    path_tab = jnp.dot(params["emb_path"], wih_s, precision=hi)      # [n_path, 4*HP]
    return {
        "gate_tab": jnp.concatenate([ent_tab, path_tab], axis=0),    # [n_ent+n_path, 4*HP]
        "n_ent": params["emb_ent"].shape[0],
        "whh_s": whh_s,
        "b_s": b_p.reshape(1, 4 * HP),
        "w2_row": jnp.pad(params["w2"].T, ((0, 0), (0, pad))),       # [1, HP]
        "b2": params["b2"],
    }


@jax.jit
def seq_model_forward(ents_path_idxs, kparams):
    # Single program: all operands (<1 MiB) fit in VMEM at these sizes.
    # If batch grows, add a grid over batch blocks with
    # compiler_params=pltpu.CompilerParams(dimension_semantics=("parallel",))
    # so both v7x TensorCores are used, and size per-core tiles so 2B >= 256
    # to fill the MXU; budget VMEM against v7x's 64 MiB.
    batch = ents_path_idxs.shape[0]
    idx = ents_path_idxs.astype(jnp.int32)
    # Pre-stack/offset indices in the wrapper (free at trace time): rows are
    # [pos entities; neg entities; paths offset by n_ent] into the fused table.
    gidx = jnp.concatenate(
        [idx[:, 1], idx[:, 2], idx[:, 0] + kparams["n_ent"]], axis=0
    ).reshape(3 * batch, 1)

    vmem = pl.BlockSpec(memory_space=pltpu.MemorySpace.VMEM)
    diff = pl.pallas_call(
        seqmodel_kernel,
        out_shape=jax.ShapeDtypeStruct((batch, 2), jnp.float32),
        in_specs=[vmem] * 6,
        out_specs=vmem,
    )(gidx, kparams["gate_tab"], kparams["whh_s"], kparams["b_s"],
      kparams["w2_row"], kparams["b2"])
    return diff[:, :, None]  # [B, 2, 1] to match the PyTorch output shape


def _reference(ents_path_idxs, params):
    """Plain-JAX reference (unpadded, unstacked, unfolded weights)."""
    path_idx = ents_path_idxs[:, 0]
    pos_idx = ents_path_idxs[:, 1]
    neg_idx = ents_path_idxs[:, 2]
    pos_emb = params["emb_ent"][pos_idx]
    neg_emb = params["emb_ent"][neg_idx]
    path_emb = params["emb_path"][path_idx]

    def step(x, h, c):
        def g(k):
            return x @ params["wih"][k] + h @ params["whh"][k] + params["b"][k]
        i = jax.nn.sigmoid(g(0)); f = jax.nn.sigmoid(g(1))
        gg = jnp.tanh(g(2)); o = jax.nn.sigmoid(g(3))
        c_new = f * c + i * gg
        return o * jnp.tanh(c_new), c_new

    def branch(x0):
        b = x0.shape[0]
        h = jnp.zeros((b, HIDDEN)); c = jnp.zeros((b, HIDDEN))
        h1, c1 = step(x0, h, c)
        h2, _ = step(path_emb, h1, c1)
        y1 = h1 @ params["w2"] + params["b2"]
        y2 = h2 @ params["w2"] + params["b2"]
        return jnp.stack([y1, y2], axis=1)  # [B, 2, 1]

    return branch(pos_emb) - branch(neg_emb)


if __name__ == "__main__":
    ENT_SIZE, PATH_SIZE, EMBED_SIZE, BATCH = 50, 30, 32, 8

    key = jax.random.PRNGKey(0)
    k_params, k_path, k_pos, k_neg = jax.random.split(key, 4)
    params = init_params(k_params, ENT_SIZE, PATH_SIZE, EMBED_SIZE)
    kparams = prepare_kernel_params(params)

    ents_path_idxs = jnp.stack(
        [jax.random.randint(k_path, (BATCH,), 0, PATH_SIZE, dtype=jnp.int32),
         jax.random.randint(k_pos, (BATCH,), 0, ENT_SIZE, dtype=jnp.int32),
         jax.random.randint(k_neg, (BATCH,), 0, ENT_SIZE, dtype=jnp.int32)],
        axis=1)  # [B, 3]

    out = seq_model_forward(ents_path_idxs, kparams)
    out = jax.block_until_ready(out)

    ref = _reference(ents_path_idxs, params)
    assert out.shape == (BATCH, 2, 1), out.shape
    assert jnp.allclose(out, ref, atol=1e-4, rtol=1e-4), "mismatch vs reference"

    print("KERNEL_OK")
</pallas_src>

<mosaic_0001>
module attributes {stable_mosaic.version = 11 : i64} {
  func.func @seqmodel_kernel(%arg0: memref<24x1xi32, #tpu.memory_space<vmem>>, %arg1: memref<80x512xf32, #tpu.memory_space<vmem>>, %arg2: memref<128x512xf32, #tpu.memory_space<vmem>>, %arg3: memref<1x512xf32, #tpu.memory_space<vmem>>, %arg4: memref<1x128xf32, #tpu.memory_space<vmem>>, %arg5: memref<1x1xf32, #tpu.memory_space<vmem>>, %arg6: memref<8x2xf32, #tpu.memory_space<vmem>>) attributes {dimension_semantics = [], scalar_prefetch = 0 : i64, scratch_operands = 0 : i64, tpu.core_type = #tpu.core_type<tc>} {
    %c0 = arith.constant 0 : index
    %c0_0 = arith.constant 0 : index
    %0 = vector.load %arg0[%c0, %c0_0] : memref<24x1xi32, #tpu.memory_space<vmem>>, vector<24x1xi32>
    %1 = tpu.iota {dimensions = array<i32: 1>} : vector<24x80xi32>
    %2 = vector.broadcast %0 : vector<24x1xi32> to vector<24x80xi32>
    %3 = arith.cmpi eq, %1, %2 : vector<24x80xi32>
    %4 = arith.extui %3 : vector<24x80xi1> to vector<24x80xi32>
    %5 = arith.sitofp %4 : vector<24x80xi32> to vector<24x80xf32>
    %c0_1 = arith.constant 0 : index
    %c0_2 = arith.constant 0 : index
    %6 = vector.load %arg1[%c0_1, %c0_2] : memref<80x512xf32, #tpu.memory_space<vmem>>, vector<80x512xf32>
    %cst = arith.constant dense<0.000000e+00> : vector<24x512xf32>
    %7 = tpu.matmul %5, %6, %cst {dimension_numbers = #tpu.dot_dimension_numbers<[1], [0], [0], [1], [0, 0, 1, 1], [], []>, precision = #tpu.contract_precision<fp32>} : vector<24x80xf32>, vector<80x512xf32>, vector<24x512xf32> -> vector<24x512xf32>
    %c0_3 = arith.constant 0 : index
    %c0_4 = arith.constant 0 : index
    %8 = vector.load %arg3[%c0_3, %c0_4] : memref<1x512xf32, #tpu.memory_space<vmem>>, vector<1x512xf32>
    %9 = vector.extract_strided_slice %7 {offsets = [0, 0], sizes = [16, 512], strides = [1, 1]} : vector<24x512xf32> to vector<16x512xf32>
    %10 = vector.broadcast %8 : vector<1x512xf32> to vector<16x512xf32>
    %11 = arith.addf %9, %10 : vector<16x512xf32>
    %12 = vector.extract_strided_slice %11 {offsets = [0, 0], sizes = [16, 128], strides = [1, 1]} : vector<16x512xf32> to vector<16x128xf32>
    %13 = arith.negf %12 : vector<16x128xf32>
    %14 = math.exp %13 : vector<16x128xf32>
    %cst_5 = arith.constant 1.000000e+00 : f32
    %15 = vector.broadcast %cst_5 : f32 to vector<16x128xf32>
    %16 = arith.addf %15, %14 : vector<16x128xf32>
    %17 = arith.divf %15, %16 : vector<16x128xf32>
    %18 = vector.extract_strided_slice %11 {offsets = [0, 256], sizes = [16, 128], strides = [1, 1]} : vector<16x512xf32> to vector<16x128xf32>
    %19 = math.tanh %18 : vector<16x128xf32>
    %20 = vector.extract_strided_slice %11 {offsets = [0, 384], sizes = [16, 128], strides = [1, 1]} : vector<16x512xf32> to vector<16x128xf32>
    %21 = arith.negf %20 : vector<16x128xf32>
    %22 = math.exp %21 : vector<16x128xf32>
    %cst_6 = arith.constant 1.000000e+00 : f32
    %23 = vector.broadcast %cst_6 : f32 to vector<16x128xf32>
    %24 = arith.addf %23, %22 : vector<16x128xf32>
    %25 = arith.divf %23, %24 : vector<16x128xf32>
    %26 = arith.mulf %17, %19 : vector<16x128xf32>
    %27 = math.tanh %26 : vector<16x128xf32>
    %28 = arith.mulf %25, %27 : vector<16x128xf32>
    %29 = vector.extract_strided_slice %7 {offsets = [16, 0], sizes = [8, 512], strides = [1, 1]} : vector<24x512xf32> to vector<8x512xf32>
    %c0_7 = arith.constant 0 : index
    %c0_8 = arith.constant 0 : index
    %30 = vector.load %arg2[%c0_7, %c0_8] : memref<128x512xf32, #tpu.memory_space<vmem>>, vector<128x512xf32>
    %cst_9 = arith.constant dense<0.000000e+00> : vector<16x512xf32>
    %31 = tpu.matmul %28, %30, %cst_9 {dimension_numbers = #tpu.dot_dimension_numbers<[1], [0], [0], [1], [0, 0, 1, 1], [], []>, precision = #tpu.contract_precision<fp32>} : vector<16x128xf32>, vector<128x512xf32>, vector<16x512xf32> -> vector<16x512xf32>
    %32 = vector.shape_cast %31 : vector<16x512xf32> to vector<2x8x512xf32>
    %33 = vector.shape_cast %29 : vector<8x512xf32> to vector<1x8x512xf32>
    %34 = vector.broadcast %33 : vector<1x8x512xf32> to vector<2x8x512xf32>
    %35 = arith.addf %32, %34 : vector<2x8x512xf32>
    %36 = vector.shape_cast %8 : vector<1x512xf32> to vector<1x1x512xf32>
    %37 = vector.broadcast %36 : vector<1x1x512xf32> to vector<2x8x512xf32>
    %38 = arith.addf %35, %37 : vector<2x8x512xf32>
    %39 = vector.shape_cast %38 : vector<2x8x512xf32> to vector<16x512xf32>
    %40 = vector.extract_strided_slice %39 {offsets = [0, 0], sizes = [16, 128], strides = [1, 1]} : vector<16x512xf32> to vector<16x128xf32>
    %41 = arith.negf %40 : vector<16x128xf32>
    %42 = math.exp %41 : vector<16x128xf32>
    %cst_10 = arith.constant 1.000000e+00 : f32
    %43 = vector.broadcast %cst_10 : f32 to vector<16x128xf32>
    %44 = arith.addf %43, %42 : vector<16x128xf32>
    %45 = arith.divf %43, %44 : vector<16x128xf32>
    %46 = vector.extract_strided_slice %39 {offsets = [0, 128], sizes = [16, 128], strides = [1, 1]} : vector<16x512xf32> to vector<16x128xf32>
    %47 = arith.negf %46 : vector<16x128xf32>
    %48 = math.exp %47 : vector<16x128xf32>
    %cst_11 = arith.constant 1.000000e+00 : f32
    %49 = vector.broadcast %cst_11 : f32 to vector<16x128xf32>
    %50 = arith.addf %49, %48 : vector<16x128xf32>
    %51 = arith.divf %49, %50 : vector<16x128xf32>
    %52 = vector.extract_strided_slice %39 {offsets = [0, 256], sizes = [16, 128], strides = [1, 1]} : vector<16x512xf32> to vector<16x128xf32>
    %53 = math.tanh %52 : vector<16x128xf32>
    %54 = vector.extract_strided_slice %39 {offsets = [0, 384], sizes = [16, 128], strides = [1, 1]} : vector<16x512xf32> to vector<16x128xf32>
    %55 = arith.negf %54 : vector<16x128xf32>
    %56 = math.exp %55 : vector<16x128xf32>
    %cst_12 = arith.constant 1.000000e+00 : f32
    %57 = vector.broadcast %cst_12 : f32 to vector<16x128xf32>
    %58 = arith.addf %57, %56 : vector<16x128xf32>
    %59 = arith.divf %57, %58 : vector<16x128xf32>
    %60 = arith.mulf %51, %26 : vector<16x128xf32>
    %61 = arith.mulf %45, %53 : vector<16x128xf32>
    %62 = arith.addf %60, %61 : vector<16x128xf32>
    %63 = math.tanh %62 : vector<16x128xf32>
    %64 = arith.mulf %59, %63 : vector<16x128xf32>
    %65 = tpu.concatenate %28, %64 in 0 : vector<16x128xf32>, vector<16x128xf32> -> vector<32x128xf32>
    %c0_13 = arith.constant 0 : index
    %c0_14 = arith.constant 0 : index
    %66 = vector.load %arg4[%c0_13, %c0_14] : memref<1x128xf32, #tpu.memory_space<vmem>>, vector<1x128xf32>
    %67 = vector.broadcast %66 : vector<1x128xf32> to vector<32x128xf32>
    %68 = arith.mulf %65, %67 : vector<32x128xf32>
    %cst_15 = arith.constant dense<0.000000e+00> : vector<32xf32>
    %69 = vector.multi_reduction <add>, %68, %cst_15 [1] : vector<32x128xf32> to vector<32xf32>
    %70 = vector.shape_cast %69 : vector<32xf32> to vector<32x1xf32>
    %c0_16 = arith.constant 0 : index
    %c0_17 = arith.constant 0 : index
    %71 = vector.load %arg5[%c0_16, %c0_17] : memref<1x1xf32, #tpu.memory_space<vmem>>, vector<1x1xf32>
    %72 = vector.broadcast %71 : vector<1x1xf32> to vector<32x1xf32>
    %73 = arith.addf %70, %72 : vector<32x1xf32>
    %74 = vector.extract_strided_slice %73 {offsets = [0, 0], sizes = [8, 1], strides = [1, 1]} : vector<32x1xf32> to vector<8x1xf32>
    %75 = vector.extract_strided_slice %73 {offsets = [8, 0], sizes = [8, 1], strides = [1, 1]} : vector<32x1xf32> to vector<8x1xf32>
    %76 = arith.subf %74, %75 : vector<8x1xf32>
    %77 = vector.extract_strided_slice %73 {offsets = [16, 0], sizes = [8, 1], strides = [1, 1]} : vector<32x1xf32> to vector<8x1xf32>
    %78 = vector.extract_strided_slice %73 {offsets = [24, 0], sizes = [8, 1], strides = [1, 1]} : vector<32x1xf32> to vector<8x1xf32>
    %79 = arith.subf %77, %78 : vector<8x1xf32>
    %80 = tpu.concatenate %76, %79 in 1 : vector<8x1xf32>, vector<8x1xf32> -> vector<8x2xf32>
    %c0_18 = arith.constant 0 : index
    %c0_19 = arith.constant 0 : index
    %81 = vector.load %arg6[%c0_18, %c0_19] : memref<8x2xf32, #tpu.memory_space<vmem>>, vector<8x2xf32>
    tpu.vector_store %arg6[%c0_18, %c0_19], %80 {strides = array<i32>} : memref<8x2xf32, #tpu.memory_space<vmem>>, vector<8x2xf32>,
    return
  }
}

</mosaic_0001>

<llo_original>
// kernel: seq_model_forward.1
$region0: #{seq_model_forward.1}
  #allocation0 [shape = 'u32[]', space=smem, size = 0x4, offset = 0x4, fixed_abs, tag = 'smem constant byte address 0x4 - core index']
  #allocation1 [shape = 'u32[72,128]{1,0:T(1,128)}', space=vmem, size = 0x9000, scoped, tag = 'internal scratch']
  #allocation2 [shape = 'f32[1,1]{1,0:T(1,128)S(1)}', space=vmem, size = 0x200, scoped, tag = 'scoped memory for seq_model_forward.1']
  %s0 = inlined_call_operand.vmem [shape: s32[24,1], index: 0, kind: input, shape index: {}]
  %s1 = inlined_call_operand.hbm [shape: f32[80,512], index: 1, kind: input, shape index: {}]
  %s2 = inlined_call_operand.hbm [shape: f32[128,512], index: 2, kind: input, shape index: {}]
  %s3 = inlined_call_operand.vmem [shape: f32[1,512], index: 3, kind: input, shape index: {}]
  %s4 = inlined_call_operand.vmem [shape: f32[1,128], index: 4, kind: input, shape index: {}]
  %s5 = inlined_call_operand.<no memory space> [shape: f32[1,1], index: 5, kind: input, shape index: {}]
  %s6 = inlined_call_operand.vmem [shape: f32[8,2], index: 6, kind: output, shape index: {}]
  %s7 = sld [smem:[#allocation0]]
  $region42: #{seq_model_forward.1} parent=0
    _
  %s9 = ssub.s32 1, %s7
  %s10 = scalar_select 0, %s9, %s7
  %v11 = vstv %s5
  %12 = vst [vmem:[#allocation2] sm:$0x1] %v11
  $region1: #{seq_model_forward.1} parent=0
    #allocation3 [shape = 'u8[163840]{0}', space=vmem, size = 0x28000, scoped, tag = 'input window, operand 1, single buffered']
    #allocation4 [shape = 's32[1]{0}', space=sflag, size = 0x4, scoped, tag = 'scoped memory for seq_model_forward.1']
    #allocation5 [shape = 'u8[262144]{0}', space=vmem, size = 0x40000, scoped, tag = 'input window, operand 2, single buffered']
    #allocation6 [shape = 's32[1]{0}', space=sflag, size = 0x4, scoped, tag = 'scoped memory for seq_model_forward.1']
    %13 = vsyncpa [#allocation4], 0
    %14 = vsyncpa [#allocation6], 0
    // Predicated region
    $region2: #{seq_model_forward.1} parent=1 // pred_check
      _
    $region3: #{seq_model_forward.1} parent=1 // pred_check_branch
      %16 = sbr.rel (0) target = $region5
    $region4: #{seq_model_forward.1} parent=1 // pred_region
      _
    $region5: #{seq_model_forward.1} parent=1 // pred_fallthru
      _
    // Predicated region
    $region6: #{seq_model_forward.1} parent=1 // pred_check
      _
    $region7: #{seq_model_forward.1} parent=1 // pred_check_branch
      %18 = sbr.rel (0) target = $region9
    $region8: #{seq_model_forward.1} parent=1 // pred_region
      %20 = vsyncadd [#allocation4], 0
      %s21 = sshll.u32 %s1, 4
      %s22 = int_to_ptr.hbm [resolvable:$true] %s21
      %s23 = sshll.u32 [#allocation3], 4
      %s24 = int_to_ptr.vmem [resolvable:$true] %s23
      %29 = dma.hbm_to_vmem [thread:$0]  %s22, 5120, %s24, [#allocation4], 512, 512, 32
    $region9: #{seq_model_forward.1} parent=1 // pred_fallthru
      _
    // Predicated region
    $region10: #{seq_model_forward.1} parent=1 // pred_check
      _
    $region11: #{seq_model_forward.1} parent=1 // pred_check_branch
      %31 = sbr.rel (0) target = $region13
    $region12: #{seq_model_forward.1} parent=1 // pred_region
      %33 = vsyncadd [#allocation6], 0
      %s34 = sshll.u32 %s2, 4
      %s35 = int_to_ptr.hbm [resolvable:$true] %s34
      %s36 = sshll.u32 [#allocation5], 4
      %s37 = int_to_ptr.vmem [resolvable:$true] %s36
      %42 = dma.hbm_to_vmem [thread:$0]  %s35, 8192, %s37, [#allocation6], 512, 512, 32
    $region13: #{seq_model_forward.1} parent=1 // pred_fallthru
      _
    // Predicated region
    $region14: #{seq_model_forward.1} parent=1 // pred_check
      _
    $region15: #{seq_model_forward.1} parent=1 // pred_check_branch
      %44 = sbr.rel (0) target = $region17
    $region16: #{seq_model_forward.1} parent=1 // pred_region
      _
    $region17: #{seq_model_forward.1} parent=1 // pred_fallthru
      _
    // Predicated region
    $region18: #{seq_model_forward.1} parent=1 // pred_check
      _
    $region19: #{seq_model_forward.1} parent=1 // pred_check_branch
      %46 = sbr.rel (0) target = $region21
    $region20: #{seq_model_forward.1} parent=1 // pred_region
      _
    $region21: #{seq_model_forward.1} parent=1 // pred_fallthru
      _
    // Predicated region
    $region22: #{seq_model_forward.1} parent=1 // pred_check
      _
    $region23: #{seq_model_forward.1} parent=1 // pred_check_branch
      %48 = sbr.rel (0) target = $region25
    $region24: #{seq_model_forward.1} parent=1 // pred_region
      _
    $region25: #{seq_model_forward.1} parent=1 // pred_fallthru
      _
    // Predicated region
    $region26: #{seq_model_forward.1} parent=1 // pred_check
      _
    $region27: #{seq_model_forward.1} parent=1 // pred_check_branch
      %50 = sbr.rel (0) target = $region29
    $region28: #{seq_model_forward.1} parent=1 // pred_region
      %52 = dma.done [#allocation4], 5120
    $region29: #{seq_model_forward.1} parent=1 // pred_fallthru
      _
    // Predicated region
    $region30: #{seq_model_forward.1} parent=1 // pred_check
      _
    $region31: #{seq_model_forward.1} parent=1 // pred_check_branch
      %54 = sbr.rel (0) target = $region33
    $region32: #{seq_model_forward.1} parent=1 // pred_region
      %56 = dma.done [#allocation6], 8192
    $region33: #{seq_model_forward.1} parent=1 // pred_fallthru
      _
    %v57 = vld [vmem:[%s0] sm:$0xff]
    %v58 = vld [vmem:[%s0 + $0x8] sm:$0xff]
    %v59 = vld [vmem:[%s0 + $0x10] sm:$0xff]
    %v60 = vlaneseq
    %v61 = vand.u32 %v60, 127
    %62 = vset.pattern.permute.xlu0 0
    %63 = vperm.xlu0 %62, %v57
    %v64 = vpop.permute.xlu0 %63
    %65 = vset.pattern.permute.xlu0 0
    %66 = vperm.xlu0 %65, %v58
    %v67 = vpop.permute.xlu0 %66
    %68 = vset.pattern.permute.xlu0 0
    %69 = vperm.xlu0 %68, %v59
    %v70 = vpop.permute.xlu0 %69
    %vm71 = vcmp.eq.s32.totalorder %v61, %v64
    %vm72 = vcmp.eq.s32.totalorder %v61, %v67
    %vm73 = vcmp.eq.s32.totalorder %v61, %v70
    %v74 = vsel %vm71, 1, 0
    %v75 = vsel %vm72, 1, 0
    %v76 = vsel %vm73, 1, 0
    %v77 = vcvt.s32.f32 %v74
    %v78 = vcvt.s32.f32 %v75
    %v79 = vcvt.s32.f32 %v76
    %v80 = vld [vmem:[#allocation3] sm:$0xff]
    %v81 = vld [vmem:[#allocation3 + $0x8] sm:$0xff]
    %v82 = vld [vmem:[#allocation3 + $0x10] sm:$0xff]
    %v83 = vld [vmem:[#allocation3 + $0x18] sm:$0xff]
    %v84 = vld [vmem:[#allocation3 + $0x20] sm:$0xff]
    %v85 = vld [vmem:[#allocation3 + $0x28] sm:$0xff]
    %v86 = vld [vmem:[#allocation3 + $0x30] sm:$0xff]
    %v87 = vld [vmem:[#allocation3 + $0x38] sm:$0xff]
    %v88 = vld [vmem:[#allocation3 + $0x40] sm:$0xff]
    %v89 = vld [vmem:[#allocation3 + $0x48] sm:$0xff]
    %v90 = vld [vmem:[#allocation3 + $0x50] sm:$0xff]
    %v91 = vld [vmem:[#allocation3 + $0x58] sm:$0xff]
    %v92 = vld [vmem:[#allocation3 + $0x60] sm:$0xff]
    %v93 = vld [vmem:[#allocation3 + $0x68] sm:$0xff]
    %v94 = vld [vmem:[#allocation3 + $0x70] sm:$0xff]
    %v95 = vld [vmem:[#allocation3 + $0x78] sm:$0xff]
    %v96 = vld [vmem:[#allocation3 + $0x80] sm:$0xff]
    %v97 = vld [vmem:[#allocation3 + $0x88] sm:$0xff]
    %v98 = vld [vmem:[#allocation3 + $0x90] sm:$0xff]
    %v99 = vld [vmem:[#allocation3 + $0x98] sm:$0xff]
    %v100 = vld [vmem:[#allocation3 + $0xa0] sm:$0xff]
    %v101 = vld [vmem:[#allocation3 + $0xa8] sm:$0xff]
    %v102 = vld [vmem:[#allocation3 + $0xb0] sm:$0xff]
    %v103 = vld [vmem:[#allocation3 + $0xb8] sm:$0xff]
    %v104 = vld [vmem:[#allocation3 + $0xc0] sm:$0xff]
    %v105 = vld [vmem:[#allocation3 + $0xc8] sm:$0xff]
    %v106 = vld [vmem:[#allocation3 + $0xd0] sm:$0xff]
    %v107 = vld [vmem:[#allocation3 + $0xd8] sm:$0xff]
    %v108 = vld [vmem:[#allocation3 + $0xe0] sm:$0xff]
    %v109 = vld [vmem:[#allocation3 + $0xe8] sm:$0xff]
    %v110 = vld [vmem:[#allocation3 + $0xf0] sm:$0xff]
    %v111 = vld [vmem:[#allocation3 + $0xf8] sm:$0xff]
    %v112 = vld [vmem:[#allocation3 + $0x100] sm:$0xff]
    %v113 = vld [vmem:[#allocation3 + $0x108] sm:$0xff]
    %v114 = vld [vmem:[#allocation3 + $0x110] sm:$0xff]
    %v115 = vld [vmem:[#allocation3 + $0x118] sm:$0xff]
    %v116 = vld [vmem:[#allocation3 + $0x120] sm:$0xff]
    %v117 = vld [vmem:[#allocation3 + $0x128] sm:$0xff]
    %v118 = vld [vmem:[#allocation3 + $0x130] sm:$0xff]
    %v119 = vld [vmem:[#allocation3 + $0x138] sm:$0xff]
    %vm120 = vcmask 654336
    %v122 = vsel %vm120, %v77, 0
    %v125 = vsel %vm120, %v78, 0
    %v128 = vsel %vm120, %v79, 0
    %130 = vmatpush.msra.mxu0 0.0
    %131 = vmatpush.msra.mxu0 0.0
    %132 = vmatpush.msra.mxu0 0.0
    %133 = vmatpush.msra.mxu0 0.0
    %134 = vmatpush.msra.mxu0 0.0
    %135 = vmatpush.msra.mxu0 0.0
    %v136 = vand.u32 %v116, 4294901760
    %137 = vmatpush.msra.mxu0 %v136
    %v138 = vand.u32 %v112, 4294901760
    %139 = vmatpush.msra.mxu0 %v138
    %v140 = vand.u32 %v108, 4294901760
    %141 = vmatpush.msra.mxu0 %v140
    %v142 = vand.u32 %v104, 4294901760
    %143 = vmatpush.msra.mxu0 %v142
    %v144 = vand.u32 %v100, 4294901760
    %145 = vmatpush.msra.mxu0 %v144
    %v146 = vand.u32 %v96, 4294901760
    %147 = vmatpush.msra.mxu0 %v146
    %v148 = vand.u32 %v92, 4294901760
    %149 = vmatpush.msra.mxu0 %v148
    %v150 = vand.u32 %v88, 4294901760
    %151 = vmatpush.msra.mxu0 %v150
    %v152 = vand.u32 %v84, 4294901760
    %153 = vmatpush.msra.mxu0 %v152
    %v154 = vand.u32 %v80, 4294901760
    %155 = vmatpush.msra.mxu0 %v154
    %v156 = vand.u32 %v122, 4294901760
    %v157 = vsub.f32 %v122, %v156
    %v158 = vand.u32 %v157, 4294901760
    %v159 = vsub.f32 %v157, %v158
    %v160 = vand.u32 %v159, 4294901760
    %161 = vmatmul.f32.gmra.mxu0 %v160
    %v162 = vpop.f32.mrf.mxu0
    %v163 = vadd.f32 0.0, %v162
    %v164 = vand.u32 %v125, 4294901760
    %v165 = vsub.f32 %v125, %v164
    %v166 = vand.u32 %v165, 4294901760
    %v167 = vsub.f32 %v165, %v166
    %v168 = vand.u32 %v167, 4294901760
    %169 = vmatmul.f32.gmra.mxu0 %v168
    %v170 = vpop.f32.mrf.mxu0
    %v171 = vadd.f32 0.0, %v170
    %v172 = vand.u32 %v128, 4294901760
    %v173 = vsub.f32 %v128, %v172
    %v174 = vand.u32 %v173, 4294901760
    %v175 = vsub.f32 %v173, %v174
    %v176 = vand.u32 %v175, 4294901760
    %177 = vmatmul.f32.gmra.mxu0 %v176
    %v178 = vpop.f32.mrf.mxu0
    %v179 = vadd.f32 0.0, %v178
    %180 = vdwg.mxu0
    %181 = vmatpush.msra.mxu0 0.0
    %182 = vmatpush.msra.mxu0 0.0
    %183 = vmatpush.msra.mxu0 0.0
    %184 = vmatpush.msra.mxu0 0.0
    %185 = vmatpush.msra.mxu0 0.0
    %186 = vmatpush.msra.mxu0 0.0
    %v187 = vand.u32 %v116, 4294901760
    %v188 = vsub.f32 %v116, %v187
    %v189 = vand.u32 %v188, 4294901760
    %v190 = vsub.f32 %v188, %v189
    %v191 = vand.u32 %v190, 4294901760
    %192 = vmatpush.msra.mxu0 %v191
    %v193 = vand.u32 %v112, 4294901760
    %v194 = vsub.f32 %v112, %v193
    %v195 = vand.u32 %v194, 4294901760
    %v196 = vsub.f32 %v194, %v195
    %v197 = vand.u32 %v196, 4294901760
    %198 = vmatpush.msra.mxu0 %v197
    %v199 = vand.u32 %v108, 4294901760
    %v200 = vsub.f32 %v108, %v199
    %v201 = vand.u32 %v200, 4294901760
    %v202 = vsub.f32 %v200, %v201
    %v203 = vand.u32 %v202, 4294901760
    %204 = vmatpush.msra.mxu0 %v203
    %v205 = vand.u32 %v104, 4294901760
    %v206 = vsub.f32 %v104, %v205
    %v207 = vand.u32 %v206, 4294901760
    %v208 = vsub.f32 %v206, %v207
    %v209 = vand.u32 %v208, 4294901760
    %210 = vmatpush.msra.mxu0 %v209
    %v211 = vand.u32 %v100, 4294901760
    %v212 = vsub.f32 %v100, %v211
    %v213 = vand.u32 %v212, 4294901760
    %v214 = vsub.f32 %v212, %v213
    %v215 = vand.u32 %v214, 4294901760
    %216 = vmatpush.msra.mxu0 %v215
    %v217 = vand.u32 %v96, 4294901760
    %v218 = vsub.f32 %v96, %v217
    %v219 = vand.u32 %v218, 4294901760
    %v220 = vsub.f32 %v218, %v219
    %v221 = vand.u32 %v220, 4294901760
    %222 = vmatpush.msra.mxu0 %v221
    %v223 = vand.u32 %v92, 4294901760
    %v224 = vsub.f32 %v92, %v223
    %v225 = vand.u32 %v224, 4294901760
    %v226 = vsub.f32 %v224, %v225
    %v227 = vand.u32 %v226, 4294901760
    %228 = vmatpush.msra.mxu0 %v227
    %v229 = vand.u32 %v88, 4294901760
    %v230 = vsub.f32 %v88, %v229
    %v231 = vand.u32 %v230, 4294901760
    %v232 = vsub.f32 %v230, %v231
    %v233 = vand.u32 %v232, 4294901760
    %234 = vmatpush.msra.mxu0 %v233
    %v235 = vand.u32 %v84, 4294901760
    %v236 = vsub.f32 %v84, %v235
    %v237 = vand.u32 %v236, 4294901760
    %v238 = vsub.f32 %v236, %v237
    %v239 = vand.u32 %v238, 4294901760
    %240 = vmatpush.msra.mxu0 %v239
    %v241 = vand.u32 %v80, 4294901760
    %v242 = vsub.f32 %v80, %v241
    %v243 = vand.u32 %v242, 4294901760
    %v244 = vsub.f32 %v242, %v243
    %v245 = vand.u32 %v244, 4294901760
    %246 = vmatpush.msra.mxu0 %v245
    %v247 = vand.u32 %v122, 4294901760
    %248 = vmatmul.f32.gmra.mxu0 %v247
    %v249 = vpop.f32.mrf.mxu0
    %v250 = vadd.f32 %v163, %v249
    %v251 = vand.u32 %v125, 4294901760
    %252 = vmatmul.f32.gmra.mxu0 %v251
    %v253 = vpop.f32.mrf.mxu0
    %v254 = vadd.f32 %v171, %v253
    %v255 = vand.u32 %v128, 4294901760
    %256 = vmatmul.f32.gmra.mxu0 %v255
    %v257 = vpop.f32.mrf.mxu0
    %v258 = vadd.f32 %v179, %v257
    %259 = vdwg.mxu0
    %260 = vmatpush.msra.mxu0 0.0
    %261 = vmatpush.msra.mxu0 0.0
    %262 = vmatpush.msra.mxu0 0.0
    %263 = vmatpush.msra.mxu0 0.0
    %264 = vmatpush.msra.mxu0 0.0
    %265 = vmatpush.msra.mxu0 0.0
    %v266 = vand.u32 %v116, 4294901760
    %v267 = vsub.f32 %v116, %v266
    %268 = vmatpush.msra.mxu0 %v267
    %v269 = vand.u32 %v112, 4294901760
    %v270 = vsub.f32 %v112, %v269
    %271 = vmatpush.msra.mxu0 %v270
    %v272 = vand.u32 %v108, 4294901760
    %v273 = vsub.f32 %v108, %v272
    %274 = vmatpush.msra.mxu0 %v273
    %v275 = vand.u32 %v104, 4294901760
    %v276 = vsub.f32 %v104, %v275
    %277 = vmatpush.msra.mxu0 %v276
    %v278 = vand.u32 %v100, 4294901760
    %v279 = vsub.f32 %v100, %v278
    %280 = vmatpush.msra.mxu0 %v279
    %v281 = vand.u32 %v96, 4294901760
    %v282 = vsub.f32 %v96, %v281
    %283 = vmatpush.msra.mxu0 %v282
    %v284 = vand.u32 %v92, 4294901760
    %v285 = vsub.f32 %v92, %v284
    %286 = vmatpush.msra.mxu0 %v285
    %v287 = vand.u32 %v88, 4294901760
    %v288 = vsub.f32 %v88, %v287
    %289 = vmatpush.msra.mxu0 %v288
    %v290 = vand.u32 %v84, 4294901760
    %v291 = vsub.f32 %v84, %v290
    %292 = vmatpush.msra.mxu0 %v291
    %v293 = vand.u32 %v80, 4294901760
    %v294 = vsub.f32 %v80, %v293
    %295 = vmatpush.msra.mxu0 %v294
    %v296 = vand.u32 %v122, 4294901760
    %v297 = vsub.f32 %v122, %v296
    %298 = vmatmul.f32.gmra.mxu0 %v297
    %v299 = vpop.f32.mrf.mxu0
    %v300 = vadd.f32 %v250, %v299
    %v301 = vand.u32 %v125, 4294901760
    %v302 = vsub.f32 %v125, %v301
    %303 = vmatmul.f32.gmra.mxu0 %v302
    %v304 = vpop.f32.mrf.mxu0
    %v305 = vadd.f32 %v254, %v304
    %v306 = vand.u32 %v128, 4294901760
    %v307 = vsub.f32 %v128, %v306
    %308 = vmatmul.f32.gmra.mxu0 %v307
    %v309 = vpop.f32.mrf.mxu0
    %v310 = vadd.f32 %v258, %v309
    %311 = vdwg.mxu0
    %312 = vmatpush.msra.mxu0 0.0
    %313 = vmatpush.msra.mxu0 0.0
    %314 = vmatpush.msra.mxu0 0.0
    %315 = vmatpush.msra.mxu0 0.0
    %316 = vmatpush.msra.mxu0 0.0
    %317 = vmatpush.msra.mxu0 0.0
    %v318 = vand.u32 %v116, 4294901760
    %319 = vmatpush.msra.mxu0 %v318
    %v320 = vand.u32 %v112, 4294901760
    %321 = vmatpush.msra.mxu0 %v320
    %v322 = vand.u32 %v108, 4294901760
    %323 = vmatpush.msra.mxu0 %v322
    %v324 = vand.u32 %v104, 4294901760
    %325 = vmatpush.msra.mxu0 %v324
    %v326 = vand.u32 %v100, 4294901760
    %327 = vmatpush.msra.mxu0 %v326
    %v328 = vand.u32 %v96, 4294901760
    %329 = vmatpush.msra.mxu0 %v328
    %v330 = vand.u32 %v92, 4294901760
    %331 = vmatpush.msra.mxu0 %v330
    %v332 = vand.u32 %v88, 4294901760
    %333 = vmatpush.msra.mxu0 %v332
    %v334 = vand.u32 %v84, 4294901760
    %335 = vmatpush.msra.mxu0 %v334
    %v336 = vand.u32 %v80, 4294901760
    %337 = vmatpush.msra.mxu0 %v336
    %v338 = vand.u32 %v122, 4294901760
    %v339 = vsub.f32 %v122, %v338
    %v340 = vand.u32 %v339, 4294901760
    %341 = vmatmul.f32.gmra.mxu0 %v340
    %v342 = vpop.f32.mrf.mxu0
    %v343 = vadd.f32 %v300, %v342
    %v344 = vand.u32 %v125, 4294901760
    %v345 = vsub.f32 %v125, %v344
    %v346 = vand.u32 %v345, 4294901760
    %347 = vmatmul.f32.gmra.mxu0 %v346
    %v348 = vpop.f32.mrf.mxu0
    %v349 = vadd.f32 %v305, %v348
    %v350 = vand.u32 %v128, 4294901760
    %v351 = vsub.f32 %v128, %v350
    %v352 = vand.u32 %v351, 4294901760
    %353 = vmatmul.f32.gmra.mxu0 %v352
    %v354 = vpop.f32.mrf.mxu0
    %v355 = vadd.f32 %v310, %v354
    %356 = vdwg.mxu0
    %357 = vmatpush.msra.mxu0 0.0
    %358 = vmatpush.msra.mxu0 0.0
    %359 = vmatpush.msra.mxu0 0.0
    %360 = vmatpush.msra.mxu0 0.0
    %361 = vmatpush.msra.mxu0 0.0
    %362 = vmatpush.msra.mxu0 0.0
    %v363 = vand.u32 %v116, 4294901760
    %v364 = vsub.f32 %v116, %v363
    %v365 = vand.u32 %v364, 4294901760
    %366 = vmatpush.msra.mxu0 %v365
    %v367 = vand.u32 %v112, 4294901760
    %v368 = vsub.f32 %v112, %v367
    %v369 = vand.u32 %v368, 4294901760
    %370 = vmatpush.msra.mxu0 %v369
    %v371 = vand.u32 %v108, 4294901760
    %v372 = vsub.f32 %v108, %v371
    %v373 = vand.u32 %v372, 4294901760
    %374 = vmatpush.msra.mxu0 %v373
    %v375 = vand.u32 %v104, 4294901760
    %v376 = vsub.f32 %v104, %v375
    %v377 = vand.u32 %v376, 4294901760
    %378 = vmatpush.msra.mxu0 %v377
    %v379 = vand.u32 %v100, 4294901760
    %v380 = vsub.f32 %v100, %v379
    %v381 = vand.u32 %v380, 4294901760
    %382 = vmatpush.msra.mxu0 %v381
    %v383 = vand.u32 %v96, 4294901760
    %v384 = vsub.f32 %v96, %v383
    %v385 = vand.u32 %v384, 4294901760
    %386 = vmatpush.msra.mxu0 %v385
    %v387 = vand.u32 %v92, 4294901760
    %v388 = vsub.f32 %v92, %v387
    %v389 = vand.u32 %v388, 4294901760
    %390 = vmatpush.msra.mxu0 %v389
    %v391 = vand.u32 %v88, 4294901760
    %v392 = vsub.f32 %v88, %v391
    %v393 = vand.u32 %v392, 4294901760
    %394 = vmatpush.msra.mxu0 %v393
    %v395 = vand.u32 %v84, 4294901760
    %v396 = vsub.f32 %v84, %v395
    %v397 = vand.u32 %v396, 4294901760
    %398 = vmatpush.msra.mxu0 %v397
    %v399 = vand.u32 %v80, 4294901760
    %v400 = vsub.f32 %v80, %v399
    %v401 = vand.u32 %v400, 4294901760
    %402 = vmatpush.msra.mxu0 %v401
    %v403 = vand.u32 %v122, 4294901760
    %404 = vmatmul.f32.gmra.mxu0 %v403
    %v405 = vpop.f32.mrf.mxu0
    %v406 = vadd.f32 %v343, %v405
    %v407 = vand.u32 %v125, 4294901760
    %408 = vmatmul.f32.gmra.mxu0 %v407
    %v409 = vpop.f32.mrf.mxu0
    %v410 = vadd.f32 %v349, %v409
    %v411 = vand.u32 %v128, 4294901760
    %412 = vmatmul.f32.gmra.mxu0 %v411
    %v413 = vpop.f32.mrf.mxu0
    %v414 = vadd.f32 %v355, %v413
    %415 = vdwg.mxu0
    %416 = vmatpush.msra.mxu0 0.0
    %417 = vmatpush.msra.mxu0 0.0
    %418 = vmatpush.msra.mxu0 0.0
    %419 = vmatpush.msra.mxu0 0.0
    %420 = vmatpush.msra.mxu0 0.0
    %421 = vmatpush.msra.mxu0 0.0
    %v422 = vand.u32 %v116, 4294901760
    %423 = vmatpush.msra.mxu0 %v422
    %v424 = vand.u32 %v112, 4294901760
    %425 = vmatpush.msra.mxu0 %v424
    %v426 = vand.u32 %v108, 4294901760
    %427 = vmatpush.msra.mxu0 %v426
    %v428 = vand.u32 %v104, 4294901760
    %429 = vmatpush.msra.mxu0 %v428
    %v430 = vand.u32 %v100, 4294901760
    %431 = vmatpush.msra.mxu0 %v430
    %v432 = vand.u32 %v96, 4294901760
    %433 = vmatpush.msra.mxu0 %v432
    %v434 = vand.u32 %v92, 4294901760
    %435 = vmatpush.msra.mxu0 %v434
    %v436 = vand.u32 %v88, 4294901760
    %437 = vmatpush.msra.mxu0 %v436
    %v438 = vand.u32 %v84, 4294901760
    %439 = vmatpush.msra.mxu0 %v438
    %v440 = vand.u32 %v80, 4294901760
    %441 = vmatpush.msra.mxu0 %v440
    %v442 = vand.u32 %v122, 4294901760
    %443 = vmatmul.f32.gmra.mxu0 %v442
    %v444 = vpop.f32.mrf.mxu0
    %v445 = vadd.f32 %v406, %v444
    %v446 = vand.u32 %v125, 4294901760
    %447 = vmatmul.f32.gmra.mxu0 %v446
    %v448 = vpop.f32.mrf.mxu0
    %v449 = vadd.f32 %v410, %v448
    %v450 = vand.u32 %v128, 4294901760
    %451 = vmatmul.f32.gmra.mxu0 %v450
    %v452 = vpop.f32.mrf.mxu0
    %v453 = vadd.f32 %v414, %v452
    %454 = vdwg.mxu0
    %455 = vmatpush.msra.mxu0 0.0
    %456 = vmatpush.msra.mxu0 0.0
    %457 = vmatpush.msra.mxu0 0.0
    %458 = vmatpush.msra.mxu0 0.0
    %459 = vmatpush.msra.mxu0 0.0
    %460 = vmatpush.msra.mxu0 0.0
    %v461 = vand.u32 %v117, 4294901760
    %462 = vmatpush.msra.mxu0 %v461
    %v463 = vand.u32 %v113, 4294901760
    %464 = vmatpush.msra.mxu0 %v463
    %v465 = vand.u32 %v109, 4294901760
    %466 = vmatpush.msra.mxu0 %v465
    %v467 = vand.u32 %v105, 4294901760
    %468 = vmatpush.msra.mxu0 %v467
    %v469 = vand.u32 %v101, 4294901760
    %470 = vmatpush.msra.mxu0 %v469
    %v471 = vand.u32 %v97, 4294901760
    %472 = vmatpush.msra.mxu0 %v471
    %v473 = vand.u32 %v93, 4294901760
    %474 = vmatpush.msra.mxu0 %v473
    %v475 = vand.u32 %v89, 4294901760
    %476 = vmatpush.msra.mxu0 %v475
    %v477 = vand.u32 %v85, 4294901760
    %478 = vmatpush.msra.mxu0 %v477
    %v479 = vand.u32 %v81, 4294901760
    %480 = vmatpush.msra.mxu0 %v479
    %v481 = vand.u32 %v122, 4294901760
    %v482 = vsub.f32 %v122, %v481
    %v483 = vand.u32 %v482, 4294901760
    %v484 = vsub.f32 %v482, %v483
    %v485 = vand.u32 %v484, 4294901760
    %486 = vmatmul.f32.gmra.mxu0 %v485
    %v487 = vpop.f32.mrf.mxu0
    %v488 = vand.u32 %v125, 4294901760
    %v489 = vsub.f32 %v125, %v488
    %v490 = vand.u32 %v489, 4294901760
    %v491 = vsub.f32 %v489, %v490
    %v492 = vand.u32 %v491, 4294901760
    %493 = vmatmul.f32.gmra.mxu0 %v492
    %v494 = vpop.f32.mrf.mxu0
    %v495 = vand.u32 %v128, 4294901760
    %v496 = vsub.f32 %v128, %v495
    %v497 = vand.u32 %v496, 4294901760
    %v498 = vsub.f32 %v496, %v497
    %v499 = vand.u32 %v498, 4294901760
    %500 = vmatmul.f32.gmra.mxu0 %v499
    %v501 = vpop.f32.mrf.mxu0
    %v502 = vadd.f32 0.0, %v501
    %503 = vdwg.mxu0
    %504 = vmatpush.msra.mxu0 0.0
    %505 = vmatpush.msra.mxu0 0.0
    %506 = vmatpush.msra.mxu0 0.0
    %507 = vmatpush.msra.mxu0 0.0
    %508 = vmatpush.msra.mxu0 0.0
    %509 = vmatpush.msra.mxu0 0.0
    %v510 = vand.u32 %v117, 4294901760
    %v511 = vsub.f32 %v117, %v510
    %v512 = vand.u32 %v511, 4294901760
    %v513 = vsub.f32 %v511, %v512
    %v514 = vand.u32 %v513, 4294901760
    %515 = vmatpush.msra.mxu0 %v514
    %v516 = vand.u32 %v113, 4294901760
    %v517 = vsub.f32 %v113, %v516
    %v518 = vand.u32 %v517, 4294901760
    %v519 = vsub.f32 %v517, %v518
    %v520 = vand.u32 %v519, 4294901760
    %521 = vmatpush.msra.mxu0 %v520
    %v522 = vand.u32 %v109, 4294901760
    %v523 = vsub.f32 %v109, %v522
    %v524 = vand.u32 %v523, 4294901760
    %v525 = vsub.f32 %v523, %v524
    %v526 = vand.u32 %v525, 4294901760
    %527 = vmatpush.msra.mxu0 %v526
    %v528 = vand.u32 %v105, 4294901760
    %v529 = vsub.f32 %v105, %v528
    %v530 = vand.u32 %v529, 4294901760
    %v531 = vsub.f32 %v529, %v530
    %v532 = vand.u32 %v531, 4294901760
    %533 = vmatpush.msra.mxu0 %v532
    %v534 = vand.u32 %v101, 4294901760
    %v535 = vsub.f32 %v101, %v534
    %v536 = vand.u32 %v535, 4294901760
    %v537 = vsub.f32 %v535, %v536
    %v538 = vand.u32 %v537, 4294901760
    %539 = vmatpush.msra.mxu0 %v538
    %v540 = vand.u32 %v97, 4294901760
    %v541 = vsub.f32 %v97, %v540
    %v542 = vand.u32 %v541, 4294901760
    %v543 = vsub.f32 %v541, %v542
    %v544 = vand.u32 %v543, 4294901760
    %545 = vmatpush.msra.mxu0 %v544
    %v546 = vand.u32 %v93, 4294901760
    %v547 = vsub.f32 %v93, %v546
    %v548 = vand.u32 %v547, 4294901760
    %v549 = vsub.f32 %v547, %v548
    %v550 = vand.u32 %v549, 4294901760
    %551 = vmatpush.msra.mxu0 %v550
    %v552 = vand.u32 %v89, 4294901760
    %v553 = vsub.f32 %v89, %v552
    %v554 = vand.u32 %v553, 4294901760
    %v555 = vsub.f32 %v553, %v554
    %v556 = vand.u32 %v555, 4294901760
    %557 = vmatpush.msra.mxu0 %v556
    %v558 = vand.u32 %v85, 4294901760
    %v559 = vsub.f32 %v85, %v558
    %v560 = vand.u32 %v559, 4294901760
    %v561 = vsub.f32 %v559, %v560
    %v562 = vand.u32 %v561, 4294901760
    %563 = vmatpush.msra.mxu0 %v562
    %v564 = vand.u32 %v81, 4294901760
    %v565 = vsub.f32 %v81, %v564
    %v566 = vand.u32 %v565, 4294901760
    %v567 = vsub.f32 %v565, %v566
    %v568 = vand.u32 %v567, 4294901760
    %569 = vmatpush.msra.mxu0 %v568
    %v570 = vand.u32 %v122, 4294901760
    %571 = vmatmul.f32.gmra.mxu0 %v570
    %v572 = vpop.f32.mrf.mxu0
    %v573 = vand.u32 %v125, 4294901760
    %574 = vmatmul.f32.gmra.mxu0 %v573
    %v575 = vpop.f32.mrf.mxu0
    %v576 = vand.u32 %v128, 4294901760
    %577 = vmatmul.f32.gmra.mxu0 %v576
    %v578 = vpop.f32.mrf.mxu0
    %v579 = vadd.f32 %v502, %v578
    %580 = vdwg.mxu0
    %581 = vmatpush.msra.mxu0 0.0
    %582 = vmatpush.msra.mxu0 0.0
    %583 = vmatpush.msra.mxu0 0.0
    %584 = vmatpush.msra.mxu0 0.0
    %585 = vmatpush.msra.mxu0 0.0
    %586 = vmatpush.msra.mxu0 0.0
    %v587 = vand.u32 %v117, 4294901760
    %v588 = vsub.f32 %v117, %v587
    %589 = vmatpush.msra.mxu0 %v588
    %v590 = vand.u32 %v113, 4294901760
    %v591 = vsub.f32 %v113, %v590
    %592 = vmatpush.msra.mxu0 %v591
    %v593 = vand.u32 %v109, 4294901760
    %v594 = vsub.f32 %v109, %v593
    %595 = vmatpush.msra.mxu0 %v594
    %v596 = vand.u32 %v105, 4294901760
    %v597 = vsub.f32 %v105, %v596
    %598 = vmatpush.msra.mxu0 %v597
    %v599 = vand.u32 %v101, 4294901760
    %v600 = vsub.f32 %v101, %v599
    %601 = vmatpush.msra.mxu0 %v600
    %v602 = vand.u32 %v97, 4294901760
    %v603 = vsub.f32 %v97, %v602
    %604 = vmatpush.msra.mxu0 %v603
    %v605 = vand.u32 %v93, 4294901760
    %v606 = vsub.f32 %v93, %v605
    %607 = vmatpush.msra.mxu0 %v606
    %v608 = vand.u32 %v89, 4294901760
    %v609 = vsub.f32 %v89, %v608
    %610 = vmatpush.msra.mxu0 %v609
    %v611 = vand.u32 %v85, 4294901760
    %v612 = vsub.f32 %v85, %v611
    %613 = vmatpush.msra.mxu0 %v612
    %v614 = vand.u32 %v81, 4294901760
    %v615 = vsub.f32 %v81, %v614
    %616 = vmatpush.msra.mxu0 %v615
    %v617 = vand.u32 %v122, 4294901760
    %v618 = vsub.f32 %v122, %v617
    %619 = vmatmul.f32.gmra.mxu0 %v618
    %v620 = vpop.f32.mrf.mxu0
    %v621 = vand.u32 %v125, 4294901760
    %v622 = vsub.f32 %v125, %v621
    %623 = vmatmul.f32.gmra.mxu0 %v622
    %v624 = vpop.f32.mrf.mxu0
    %v625 = vand.u32 %v128, 4294901760
    %v626 = vsub.f32 %v128, %v625
    %627 = vmatmul.f32.gmra.mxu0 %v626
    %v628 = vpop.f32.mrf.mxu0
    %v629 = vadd.f32 %v579, %v628
    %630 = vdwg.mxu0
    %631 = vmatpush.msra.mxu0 0.0
    %632 = vmatpush.msra.mxu0 0.0
    %633 = vmatpush.msra.mxu0 0.0
    %634 = vmatpush.msra.mxu0 0.0
    %635 = vmatpush.msra.mxu0 0.0
    %636 = vmatpush.msra.mxu0 0.0
    %v637 = vand.u32 %v117, 4294901760
    %638 = vmatpush.msra.mxu0 %v637
    %v639 = vand.u32 %v113, 4294901760
    %640 = vmatpush.msra.mxu0 %v639
    %v641 = vand.u32 %v109, 4294901760
    %642 = vmatpush.msra.mxu0 %v641
    %v643 = vand.u32 %v105, 4294901760
    %644 = vmatpush.msra.mxu0 %v643
    %v645 = vand.u32 %v101, 4294901760
    %646 = vmatpush.msra.mxu0 %v645
    %v647 = vand.u32 %v97, 4294901760
    %648 = vmatpush.msra.mxu0 %v647
    %v649 = vand.u32 %v93, 4294901760
    %650 = vmatpush.msra.mxu0 %v649
    %v651 = vand.u32 %v89, 4294901760
    %652 = vmatpush.msra.mxu0 %v651
    %v653 = vand.u32 %v85, 4294901760
    %654 = vmatpush.msra.mxu0 %v653
    %v655 = vand.u32 %v81, 4294901760
    %656 = vmatpush.msra.mxu0 %v655
    %v657 = vand.u32 %v122, 4294901760
    %v658 = vsub.f32 %v122, %v657
    %v659 = vand.u32 %v658, 4294901760
    %660 = vmatmul.f32.gmra.mxu0 %v659
    %v661 = vpop.f32.mrf.mxu0
    %v662 = vand.u32 %v125, 4294901760
    %v663 = vsub.f32 %v125, %v662
    %v664 = vand.u32 %v663, 4294901760
    %665 = vmatmul.f32.gmra.mxu0 %v664
    %v666 = vpop.f32.mrf.mxu0
    %v667 = vand.u32 %v128, 4294901760
    %v668 = vsub.f32 %v128, %v667
    %v669 = vand.u32 %v668, 4294901760
    %670 = vmatmul.f32.gmra.mxu0 %v669
    %v671 = vpop.f32.mrf.mxu0
    %v672 = vadd.f32 %v629, %v671
    %673 = vdwg.mxu0
    %674 = vmatpush.msra.mxu0 0.0
    %675 = vmatpush.msra.mxu0 0.0
    %676 = vmatpush.msra.mxu0 0.0
    %677 = vmatpush.msra.mxu0 0.0
    %678 = vmatpush.msra.mxu0 0.0
    %679 = vmatpush.msra.mxu0 0.0
    %v680 = vand.u32 %v117, 4294901760
    %v681 = vsub.f32 %v117, %v680
    %v682 = vand.u32 %v681, 4294901760
    %683 = vmatpush.msra.mxu0 %v682
    %v684 = vand.u32 %v113, 4294901760
    %v685 = vsub.f32 %v113, %v684
    %v686 = vand.u32 %v685, 4294901760
    %687 = vmatpush.msra.mxu0 %v686
    %v688 = vand.u32 %v109, 4294901760
    %v689 = vsub.f32 %v109, %v688
    %v690 = vand.u32 %v689, 4294901760
    %691 = vmatpush.msra.mxu0 %v690
    %v692 = vand.u32 %v105, 4294901760
    %v693 = vsub.f32 %v105, %v692
    %v694 = vand.u32 %v693, 4294901760
    %695 = vmatpush.msra.mxu0 %v694
    %v696 = vand.u32 %v101, 4294901760
    %v697 = vsub.f32 %v101, %v696
    %v698 = vand.u32 %v697, 4294901760
    %699 = vmatpush.msra.mxu0 %v698
    %v700 = vand.u32 %v97, 4294901760
    %v701 = vsub.f32 %v97, %v700
    %v702 = vand.u32 %v701, 4294901760
    %703 = vmatpush.msra.mxu0 %v702
    %v704 = vand.u32 %v93, 4294901760
    %v705 = vsub.f32 %v93, %v704
    %v706 = vand.u32 %v705, 4294901760
    %707 = vmatpush.msra.mxu0 %v706
    %v708 = vand.u32 %v89, 4294901760
    %v709 = vsub.f32 %v89, %v708
    %v710 = vand.u32 %v709, 4294901760
    %711 = vmatpush.msra.mxu0 %v710
    %v712 = vand.u32 %v85, 4294901760
    %v713 = vsub.f32 %v85, %v712
    %v714 = vand.u32 %v713, 4294901760
    %715 = vmatpush.msra.mxu0 %v714
    %v716 = vand.u32 %v81, 4294901760
    %v717 = vsub.f32 %v81, %v716
    %v718 = vand.u32 %v717, 4294901760
    %719 = vmatpush.msra.mxu0 %v718
    %v720 = vand.u32 %v122, 4294901760
    %721 = vmatmul.f32.gmra.mxu0 %v720
    %v722 = vpop.f32.mrf.mxu0
    %v723 = vand.u32 %v125, 4294901760
    %724 = vmatmul.f32.gmra.mxu0 %v723
    %v725 = vpop.f32.mrf.mxu0
    %v726 = vand.u32 %v128, 4294901760
    %727 = vmatmul.f32.gmra.mxu0 %v726
    %v728 = vpop.f32.mrf.mxu0
    %v729 = vadd.f32 %v672, %v728
    %730 = vdwg.mxu0
    %731 = vmatpush.msra.mxu0 0.0
    %732 = vmatpush.msra.mxu0 0.0
    %733 = vmatpush.msra.mxu0 0.0
    %734 = vmatpush.msra.mxu0 0.0
    %735 = vmatpush.msra.mxu0 0.0
    %736 = vmatpush.msra.mxu0 0.0
    %v737 = vand.u32 %v117, 4294901760
    %738 = vmatpush.msra.mxu0 %v737
    %v739 = vand.u32 %v113, 4294901760
    %740 = vmatpush.msra.mxu0 %v739
    %v741 = vand.u32 %v109, 4294901760
    %742 = vmatpush.msra.mxu0 %v741
    %v743 = vand.u32 %v105, 4294901760
    %744 = vmatpush.msra.mxu0 %v743
    %v745 = vand.u32 %v101, 4294901760
    %746 = vmatpush.msra.mxu0 %v745
    %v747 = vand.u32 %v97, 4294901760
    %748 = vmatpush.msra.mxu0 %v747
    %v749 = vand.u32 %v93, 4294901760
    %750 = vmatpush.msra.mxu0 %v749
    %v751 = vand.u32 %v89, 4294901760
    %752 = vmatpush.msra.mxu0 %v751
    %v753 = vand.u32 %v85, 4294901760
    %754 = vmatpush.msra.mxu0 %v753
    %v755 = vand.u32 %v81, 4294901760
    %756 = vmatpush.msra.mxu0 %v755
    %v757 = vand.u32 %v122, 4294901760
    %758 = vmatmul.f32.gmra.mxu0 %v757
    %v759 = vpop.f32.mrf.mxu0
    %v760 = vand.u32 %v125, 4294901760
    %761 = vmatmul.f32.gmra.mxu0 %v760
    %v762 = vpop.f32.mrf.mxu0
    %v763 = vand.u32 %v128, 4294901760
    %764 = vmatmul.f32.gmra.mxu0 %v763
    %v765 = vpop.f32.mrf.mxu0
    %v766 = vadd.f32 %v729, %v765
    %767 = vdwg.mxu0
    %768 = vmatpush.msra.mxu0 0.0
    %769 = vmatpush.msra.mxu0 0.0
    %770 = vmatpush.msra.mxu0 0.0
    %771 = vmatpush.msra.mxu0 0.0
    %772 = vmatpush.msra.mxu0 0.0
    %773 = vmatpush.msra.mxu0 0.0
    %v774 = vand.u32 %v118, 4294901760
    %775 = vmatpush.msra.mxu0 %v774
    %v776 = vand.u32 %v114, 4294901760
    %777 = vmatpush.msra.mxu0 %v776
    %v778 = vand.u32 %v110, 4294901760
    %779 = vmatpush.msra.mxu0 %v778
    %v780 = vand.u32 %v106, 4294901760
    %781 = vmatpush.msra.mxu0 %v780
    %v782 = vand.u32 %v102, 4294901760
    %783 = vmatpush.msra.mxu0 %v782
    %v784 = vand.u32 %v98, 4294901760
    %785 = vmatpush.msra.mxu0 %v784
    %v786 = vand.u32 %v94, 4294901760
    %787 = vmatpush.msra.mxu0 %v786
    %v788 = vand.u32 %v90, 4294901760
    %789 = vmatpush.msra.mxu0 %v788
    %v790 = vand.u32 %v86, 4294901760
    %791 = vmatpush.msra.mxu0 %v790
    %v792 = vand.u32 %v82, 4294901760
    %793 = vmatpush.msra.mxu0 %v792
    %v794 = vand.u32 %v122, 4294901760
    %v795 = vsub.f32 %v122, %v794
    %v796 = vand.u32 %v795, 4294901760
    %v797 = vsub.f32 %v795, %v796
    %v798 = vand.u32 %v797, 4294901760
    %799 = vmatmul.f32.gmra.mxu0 %v798
    %v800 = vpop.f32.mrf.mxu0
    %v801 = vadd.f32 0.0, %v800
    %v802 = vand.u32 %v125, 4294901760
    %v803 = vsub.f32 %v125, %v802
    %v804 = vand.u32 %v803, 4294901760
    %v805 = vsub.f32 %v803, %v804
    %v806 = vand.u32 %v805, 4294901760
    %807 = vmatmul.f32.gmra.mxu0 %v806
    %v808 = vpop.f32.mrf.mxu0
    %v809 = vadd.f32 0.0, %v808
    %v810 = vand.u32 %v128, 4294901760
    %v811 = vsub.f32 %v128, %v810
    %v812 = vand.u32 %v811, 4294901760
    %v813 = vsub.f32 %v811, %v812
    %v814 = vand.u32 %v813, 4294901760
    %815 = vmatmul.f32.gmra.mxu0 %v814
    %v816 = vpop.f32.mrf.mxu0
    %v817 = vadd.f32 0.0, %v816
    %818 = vdwg.mxu0
    %819 = vmatpush.msra.mxu0 0.0
    %820 = vmatpush.msra.mxu0 0.0
    %821 = vmatpush.msra.mxu0 0.0
    %822 = vmatpush.msra.mxu0 0.0
    %823 = vmatpush.msra.mxu0 0.0
    %824 = vmatpush.msra.mxu0 0.0
    %v825 = vand.u32 %v118, 4294901760
    %v826 = vsub.f32 %v118, %v825
    %v827 = vand.u32 %v826, 4294901760
    %v828 = vsub.f32 %v826, %v827
    %v829 = vand.u32 %v828, 4294901760
    %830 = vmatpush.msra.mxu0 %v829
    %v831 = vand.u32 %v114, 4294901760
    %v832 = vsub.f32 %v114, %v831
    %v833 = vand.u32 %v832, 4294901760
    %v834 = vsub.f32 %v832, %v833
    %v835 = vand.u32 %v834, 4294901760
    %836 = vmatpush.msra.mxu0 %v835
    %v837 = vand.u32 %v110, 4294901760
    %v838 = vsub.f32 %v110, %v837
    %v839 = vand.u32 %v838, 4294901760
    %v840 = vsub.f32 %v838, %v839
    %v841 = vand.u32 %v840, 4294901760
    %842 = vmatpush.msra.mxu0 %v841
    %v843 = vand.u32 %v106, 4294901760
    %v844 = vsub.f32 %v106, %v843
    %v845 = vand.u32 %v844, 4294901760
    %v846 = vsub.f32 %v844, %v845
    %v847 = vand.u32 %v846, 4294901760
    %848 = vmatpush.msra.mxu0 %v847
    %v849 = vand.u32 %v102, 4294901760
    %v850 = vsub.f32 %v102, %v849
    %v851 = vand.u32 %v850, 4294901760
    %v852 = vsub.f32 %v850, %v851
    %v853 = vand.u32 %v852, 4294901760
    %854 = vmatpush.msra.mxu0 %v853
    %v855 = vand.u32 %v98, 4294901760
    %v856 = vsub.f32 %v98, %v855
    %v857 = vand.u32 %v856, 4294901760
    %v858 = vsub.f32 %v856, %v857
    %v859 = vand.u32 %v858, 4294901760
    %860 = vmatpush.msra.mxu0 %v859
    %v861 = vand.u32 %v94, 4294901760
    %v862 = vsub.f32 %v94, %v861
    %v863 = vand.u32 %v862, 4294901760
    %v864 = vsub.f32 %v862, %v863
    %v865 = vand.u32 %v864, 4294901760
    %866 = vmatpush.msra.mxu0 %v865
    %v867 = vand.u32 %v90, 4294901760
    %v868 = vsub.f32 %v90, %v867
    %v869 = vand.u32 %v868, 4294901760
    %v870 = vsub.f32 %v868, %v869
    %v871 = vand.u32 %v870, 4294901760
    %872 = vmatpush.msra.mxu0 %v871
    %v873 = vand.u32 %v86, 4294901760
    %v874 = vsub.f32 %v86, %v873
    %v875 = vand.u32 %v874, 4294901760
    %v876 = vsub.f32 %v874, %v875
    %v877 = vand.u32 %v876, 4294901760
    %878 = vmatpush.msra.mxu0 %v877
    %v879 = vand.u32 %v82, 4294901760
    %v880 = vsub.f32 %v82, %v879
    %v881 = vand.u32 %v880, 4294901760
    %v882 = vsub.f32 %v880, %v881
    %v883 = vand.u32 %v882, 4294901760
    %884 = vmatpush.msra.mxu0 %v883
    %v885 = vand.u32 %v122, 4294901760
    %886 = vmatmul.f32.gmra.mxu0 %v885
    %v887 = vpop.f32.mrf.mxu0
    %v888 = vadd.f32 %v801, %v887
    %v889 = vand.u32 %v125, 4294901760
    %890 = vmatmul.f32.gmra.mxu0 %v889
    %v891 = vpop.f32.mrf.mxu0
    %v892 = vadd.f32 %v809, %v891
    %v893 = vand.u32 %v128, 4294901760
    %894 = vmatmul.f32.gmra.mxu0 %v893
    %v895 = vpop.f32.mrf.mxu0
    %v896 = vadd.f32 %v817, %v895
    %897 = vdwg.mxu0
    %898 = vmatpush.msra.mxu0 0.0
    %899 = vmatpush.msra.mxu0 0.0
    %900 = vmatpush.msra.mxu0 0.0
    %901 = vmatpush.msra.mxu0 0.0
    %902 = vmatpush.msra.mxu0 0.0
    %903 = vmatpush.msra.mxu0 0.0
    %v904 = vand.u32 %v118, 4294901760
    %v905 = vsub.f32 %v118, %v904
    %906 = vmatpush.msra.mxu0 %v905
    %v907 = vand.u32 %v114, 4294901760
    %v908 = vsub.f32 %v114, %v907
    %909 = vmatpush.msra.mxu0 %v908
    %v910 = vand.u32 %v110, 4294901760
    %v911 = vsub.f32 %v110, %v910
    %912 = vmatpush.msra.mxu0 %v911
    %v913 = vand.u32 %v106, 4294901760
    %v914 = vsub.f32 %v106, %v913
    %915 = vmatpush.msra.mxu0 %v914
    %v916 = vand.u32 %v102, 4294901760
    %v917 = vsub.f32 %v102, %v916
    %918 = vmatpush.msra.mxu0 %v917
    %v919 = vand.u32 %v98, 4294901760
    %v920 = vsub.f32 %v98, %v919
    %921 = vmatpush.msra.mxu0 %v920
    %v922 = vand.u32 %v94, 4294901760
    %v923 = vsub.f32 %v94, %v922
    %924 = vmatpush.msra.mxu0 %v923
    %v925 = vand.u32 %v90, 4294901760
    %v926 = vsub.f32 %v90, %v925
    %927 = vmatpush.msra.mxu0 %v926
    %v928 = vand.u32 %v86, 4294901760
    %v929 = vsub.f32 %v86, %v928
    %930 = vmatpush.msra.mxu0 %v929
    %v931 = vand.u32 %v82, 4294901760
    %v932 = vsub.f32 %v82, %v931
    %933 = vmatpush.msra.mxu0 %v932
    %v934 = vand.u32 %v122, 4294901760
    %v935 = vsub.f32 %v122, %v934
    %936 = vmatmul.f32.gmra.mxu0 %v935
    %v937 = vpop.f32.mrf.mxu0
    %v938 = vadd.f32 %v888, %v937
    %v939 = vand.u32 %v125, 4294901760
    %v940 = vsub.f32 %v125, %v939
    %941 = vmatmul.f32.gmra.mxu0 %v940
    %v942 = vpop.f32.mrf.mxu0
    %v943 = vadd.f32 %v892, %v942
    %v944 = vand.u32 %v128, 4294901760
    %v945 = vsub.f32 %v128, %v944
    %946 = vmatmul.f32.gmra.mxu0 %v945
    %v947 = vpop.f32.mrf.mxu0
    %v948 = vadd.f32 %v896, %v947
    %949 = vdwg.mxu0
    %950 = vmatpush.msra.mxu0 0.0
    %951 = vmatpush.msra.mxu0 0.0
    %952 = vmatpush.msra.mxu0 0.0
    %953 = vmatpush.msra.mxu0 0.0
    %954 = vmatpush.msra.mxu0 0.0
    %955 = vmatpush.msra.mxu0 0.0
    %v956 = vand.u32 %v118, 4294901760
    %957 = vmatpush.msra.mxu0 %v956
    %v958 = vand.u32 %v114, 4294901760
    %959 = vmatpush.msra.mxu0 %v958
    %v960 = vand.u32 %v110, 4294901760
    %961 = vmatpush.msra.mxu0 %v960
    %v962 = vand.u32 %v106, 4294901760
    %963 = vmatpush.msra.mxu0 %v962
    %v964 = vand.u32 %v102, 4294901760
    %965 = vmatpush.msra.mxu0 %v964
    %v966 = vand.u32 %v98, 4294901760
    %967 = vmatpush.msra.mxu0 %v966
    %v968 = vand.u32 %v94, 4294901760
    %969 = vmatpush.msra.mxu0 %v968
    %v970 = vand.u32 %v90, 4294901760
    %971 = vmatpush.msra.mxu0 %v970
    %v972 = vand.u32 %v86, 4294901760
    %973 = vmatpush.msra.mxu0 %v972
    %v974 = vand.u32 %v82, 4294901760
    %975 = vmatpush.msra.mxu0 %v974
    %v976 = vand.u32 %v122, 4294901760
    %v977 = vsub.f32 %v122, %v976
    %v978 = vand.u32 %v977, 4294901760
    %979 = vmatmul.f32.gmra.mxu0 %v978
    %v980 = vpop.f32.mrf.mxu0
    %v981 = vadd.f32 %v938, %v980
    %v982 = vand.u32 %v125, 4294901760
    %v983 = vsub.f32 %v125, %v982
    %v984 = vand.u32 %v983, 4294901760
    %985 = vmatmul.f32.gmra.mxu0 %v984
    %v986 = vpop.f32.mrf.mxu0
    %v987 = vadd.f32 %v943, %v986
    %v988 = vand.u32 %v128, 4294901760
    %v989 = vsub.f32 %v128, %v988
    %v990 = vand.u32 %v989, 4294901760
    %991 = vmatmul.f32.gmra.mxu0 %v990
    %v992 = vpop.f32.mrf.mxu0
    %v993 = vadd.f32 %v948, %v992
    %994 = vdwg.mxu0
    %995 = vmatpush.msra.mxu0 0.0
    %996 = vmatpush.msra.mxu0 0.0
    %997 = vmatpush.msra.mxu0 0.0
    %998 = vmatpush.msra.mxu0 0.0
    %999 = vmatpush.msra.mxu0 0.0
    %1000 = vmatpush.msra.mxu0 0.0
    %v1001 = vand.u32 %v118, 4294901760
    %v1002 = vsub.f32 %v118, %v1001
    %v1003 = vand.u32 %v1002, 4294901760
    %1004 = vmatpush.msra.mxu0 %v1003
    %v1005 = vand.u32 %v114, 4294901760
    %v1006 = vsub.f32 %v114, %v1005
    %v1007 = vand.u32 %v1006, 4294901760
    %1008 = vmatpush.msra.mxu0 %v1007
    %v1009 = vand.u32 %v110, 4294901760
    %v1010 = vsub.f32 %v110, %v1009
    %v1011 = vand.u32 %v1010, 4294901760
    %1012 = vmatpush.msra.mxu0 %v1011
    %v1013 = vand.u32 %v106, 4294901760
    %v1014 = vsub.f32 %v106, %v1013
    %v1015 = vand.u32 %v1014, 4294901760
    %1016 = vmatpush.msra.mxu0 %v1015
    %v1017 = vand.u32 %v102, 4294901760
    %v1018 = vsub.f32 %v102, %v1017
    %v1019 = vand.u32 %v1018, 4294901760
    %1020 = vmatpush.msra.mxu0 %v1019
    %v1021 = vand.u32 %v98, 4294901760
    %v1022 = vsub.f32 %v98, %v1021
    %v1023 = vand.u32 %v1022, 4294901760
    %1024 = vmatpush.msra.mxu0 %v1023
    %v1025 = vand.u32 %v94, 4294901760
    %v1026 = vsub.f32 %v94, %v1025
    %v1027 = vand.u32 %v1026, 4294901760
    %1028 = vmatpush.msra.mxu0 %v1027
    %v1029 = vand.u32 %v90, 4294901760
    %v1030 = vsub.f32 %v90, %v1029
    %v1031 = vand.u32 %v1030, 4294901760
    %1032 = vmatpush.msra.mxu0 %v1031
    %v1033 = vand.u32 %v86, 4294901760
    %v1034 = vsub.f32 %v86, %v1033
    %v1035 = vand.u32 %v1034, 4294901760
    %1036 = vmatpush.msra.mxu0 %v1035
    %v1037 = vand.u32 %v82, 4294901760
    %v1038 = vsub.f32 %v82, %v1037
    %v1039 = vand.u32 %v1038, 4294901760
    %1040 = vmatpush.msra.mxu0 %v1039
    %v1041 = vand.u32 %v122, 4294901760
    %1042 = vmatmul.f32.gmra.mxu0 %v1041
    %v1043 = vpop.f32.mrf.mxu0
    %v1044 = vadd.f32 %v981, %v1043
    %v1045 = vand.u32 %v125, 4294901760
    %1046 = vmatmul.f32.gmra.mxu0 %v1045
    %v1047 = vpop.f32.mrf.mxu0
    %v1048 = vadd.f32 %v987, %v1047
    %v1049 = vand.u32 %v128, 4294901760
    %1050 = vmatmul.f32.gmra.mxu0 %v1049
    %v1051 = vpop.f32.mrf.mxu0
    %v1052 = vadd.f32 %v993, %v1051
    %1053 = vdwg.mxu0
    %1054 = vmatpush.msra.mxu0 0.0
    %1055 = vmatpush.msra.mxu0 0.0
    %1056 = vmatpush.msra.mxu0 0.0
    %1057 = vmatpush.msra.mxu0 0.0
    %1058 = vmatpush.msra.mxu0 0.0
    %1059 = vmatpush.msra.mxu0 0.0
    %v1060 = vand.u32 %v118, 4294901760
    %1061 = vmatpush.msra.mxu0 %v1060
    %v1062 = vand.u32 %v114, 4294901760
    %1063 = vmatpush.msra.mxu0 %v1062
    %v1064 = vand.u32 %v110, 4294901760
    %1065 = vmatpush.msra.mxu0 %v1064
    %v1066 = vand.u32 %v106, 4294901760
    %1067 = vmatpush.msra.mxu0 %v1066
    %v1068 = vand.u32 %v102, 4294901760
    %1069 = vmatpush.msra.mxu0 %v1068
    %v1070 = vand.u32 %v98, 4294901760
    %1071 = vmatpush.msra.mxu0 %v1070
    %v1072 = vand.u32 %v94, 4294901760
    %1073 = vmatpush.msra.mxu0 %v1072
    %v1074 = vand.u32 %v90, 4294901760
    %1075 = vmatpush.msra.mxu0 %v1074
    %v1076 = vand.u32 %v86, 4294901760
    %1077 = vmatpush.msra.mxu0 %v1076
    %v1078 = vand.u32 %v82, 4294901760
    %1079 = vmatpush.msra.mxu0 %v1078
    %v1080 = vand.u32 %v122, 4294901760
    %1081 = vmatmul.f32.gmra.mxu0 %v1080
    %v1082 = vpop.f32.mrf.mxu0
    %v1083 = vadd.f32 %v1044, %v1082
    %v1084 = vand.u32 %v125, 4294901760
    %1085 = vmatmul.f32.gmra.mxu0 %v1084
    %v1086 = vpop.f32.mrf.mxu0
    %v1087 = vadd.f32 %v1048, %v1086
    %v1088 = vand.u32 %v128, 4294901760
    %1089 = vmatmul.f32.gmra.mxu0 %v1088
    %v1090 = vpop.f32.mrf.mxu0
    %v1091 = vadd.f32 %v1052, %v1090
    %1092 = vdwg.mxu0
    %1093 = vmatpush.msra.mxu0 0.0
    %1094 = vmatpush.msra.mxu0 0.0
    %1095 = vmatpush.msra.mxu0 0.0
    %1096 = vmatpush.msra.mxu0 0.0
    %1097 = vmatpush.msra.mxu0 0.0
    %1098 = vmatpush.msra.mxu0 0.0
    %v1099 = vand.u32 %v119, 4294901760
    %1100 = vmatpush.msra.mxu0 %v1099
    %v1101 = vand.u32 %v115, 4294901760
    %1102 = vmatpush.msra.mxu0 %v1101
    %v1103 = vand.u32 %v111, 4294901760
    %1104 = vmatpush.msra.mxu0 %v1103
    %v1105 = vand.u32 %v107, 4294901760
    %1106 = vmatpush.msra.mxu0 %v1105
    %v1107 = vand.u32 %v103, 4294901760
    %1108 = vmatpush.msra.mxu0 %v1107
    %v1109 = vand.u32 %v99, 4294901760
    %1110 = vmatpush.msra.mxu0 %v1109
    %v1111 = vand.u32 %v95, 4294901760
    %1112 = vmatpush.msra.mxu0 %v1111
    %v1113 = vand.u32 %v91, 4294901760
    %1114 = vmatpush.msra.mxu0 %v1113
    %v1115 = vand.u32 %v87, 4294901760
    %1116 = vmatpush.msra.mxu0 %v1115
    %v1117 = vand.u32 %v83, 4294901760
    %1118 = vmatpush.msra.mxu0 %v1117
    %v1119 = vand.u32 %v122, 4294901760
    %v1120 = vsub.f32 %v122, %v1119
    %v1121 = vand.u32 %v1120, 4294901760
    %v1122 = vsub.f32 %v1120, %v1121
    %v1123 = vand.u32 %v1122, 4294901760
    %1124 = vmatmul.f32.gmra.mxu0 %v1123
    %v1125 = vpop.f32.mrf.mxu0
    %v1126 = vadd.f32 0.0, %v1125
    %v1127 = vand.u32 %v125, 4294901760
    %v1128 = vsub.f32 %v125, %v1127
    %v1129 = vand.u32 %v1128, 4294901760
    %v1130 = vsub.f32 %v1128, %v1129
    %v1131 = vand.u32 %v1130, 4294901760
    %1132 = vmatmul.f32.gmra.mxu0 %v1131
    %v1133 = vpop.f32.mrf.mxu0
    %v1134 = vadd.f32 0.0, %v1133
    %v1135 = vand.u32 %v128, 4294901760
    %v1136 = vsub.f32 %v128, %v1135
    %v1137 = vand.u32 %v1136, 4294901760
    %v1138 = vsub.f32 %v1136, %v1137
    %v1139 = vand.u32 %v1138, 4294901760
    %1140 = vmatmul.f32.gmra.mxu0 %v1139
    %v1141 = vpop.f32.mrf.mxu0
    %v1142 = vadd.f32 0.0, %v1141
    %1143 = vdwg.mxu0
    %1144 = vmatpush.msra.mxu0 0.0
    %1145 = vmatpush.msra.mxu0 0.0
    %1146 = vmatpush.msra.mxu0 0.0
    %1147 = vmatpush.msra.mxu0 0.0
    %1148 = vmatpush.msra.mxu0 0.0
    %1149 = vmatpush.msra.mxu0 0.0
    %v1150 = vand.u32 %v119, 4294901760
    %v1151 = vsub.f32 %v119, %v1150
    %v1152 = vand.u32 %v1151, 4294901760
    %v1153 = vsub.f32 %v1151, %v1152
    %v1154 = vand.u32 %v1153, 4294901760
    %1155 = vmatpush.msra.mxu0 %v1154
    %v1156 = vand.u32 %v115, 4294901760
    %v1157 = vsub.f32 %v115, %v1156
    %v1158 = vand.u32 %v1157, 4294901760
    %v1159 = vsub.f32 %v1157, %v1158
    %v1160 = vand.u32 %v1159, 4294901760
    %1161 = vmatpush.msra.mxu0 %v1160
    %v1162 = vand.u32 %v111, 4294901760
    %v1163 = vsub.f32 %v111, %v1162
    %v1164 = vand.u32 %v1163, 4294901760
    %v1165 = vsub.f32 %v1163, %v1164
    %v1166 = vand.u32 %v1165, 4294901760
    %1167 = vmatpush.msra.mxu0 %v1166
    %v1168 = vand.u32 %v107, 4294901760
    %v1169 = vsub.f32 %v107, %v1168
    %v1170 = vand.u32 %v1169, 4294901760
    %v1171 = vsub.f32 %v1169, %v1170
    %v1172 = vand.u32 %v1171, 4294901760
    %1173 = vmatpush.msra.mxu0 %v1172
    %v1174 = vand.u32 %v103, 4294901760
    %v1175 = vsub.f32 %v103, %v1174
    %v1176 = vand.u32 %v1175, 4294901760
    %v1177 = vsub.f32 %v1175, %v1176
    %v1178 = vand.u32 %v1177, 4294901760
    %1179 = vmatpush.msra.mxu0 %v1178
    %v1180 = vand.u32 %v99, 4294901760
    %v1181 = vsub.f32 %v99, %v1180
    %v1182 = vand.u32 %v1181, 4294901760
    %v1183 = vsub.f32 %v1181, %v1182
    %v1184 = vand.u32 %v1183, 4294901760
    %1185 = vmatpush.msra.mxu0 %v1184
    %v1186 = vand.u32 %v95, 4294901760
    %v1187 = vsub.f32 %v95, %v1186
    %v1188 = vand.u32 %v1187, 4294901760
    %v1189 = vsub.f32 %v1187, %v1188
    %v1190 = vand.u32 %v1189, 4294901760
    %1191 = vmatpush.msra.mxu0 %v1190
    %v1192 = vand.u32 %v91, 4294901760
    %v1193 = vsub.f32 %v91, %v1192
    %v1194 = vand.u32 %v1193, 4294901760
    %v1195 = vsub.f32 %v1193, %v1194
    %v1196 = vand.u32 %v1195, 4294901760
    %1197 = vmatpush.msra.mxu0 %v1196
    %v1198 = vand.u32 %v87, 4294901760
    %v1199 = vsub.f32 %v87, %v1198
    %v1200 = vand.u32 %v1199, 4294901760
    %v1201 = vsub.f32 %v1199, %v1200
    %v1202 = vand.u32 %v1201, 4294901760
    %1203 = vmatpush.msra.mxu0 %v1202
    %v1204 = vand.u32 %v83, 4294901760
    %v1205 = vsub.f32 %v83, %v1204
    %v1206 = vand.u32 %v1205, 4294901760
    %v1207 = vsub.f32 %v1205, %v1206
    %v1208 = vand.u32 %v1207, 4294901760
    %1209 = vmatpush.msra.mxu0 %v1208
    %v1210 = vand.u32 %v122, 4294901760
    %1211 = vmatmul.f32.gmra.mxu0 %v1210
    %v1212 = vpop.f32.mrf.mxu0
    %v1213 = vadd.f32 %v1126, %v1212
    %v1214 = vand.u32 %v125, 4294901760
    %1215 = vmatmul.f32.gmra.mxu0 %v1214
    %v1216 = vpop.f32.mrf.mxu0
    %v1217 = vadd.f32 %v1134, %v1216
    %v1218 = vand.u32 %v128, 4294901760
    %1219 = vmatmul.f32.gmra.mxu0 %v1218
    %v1220 = vpop.f32.mrf.mxu0
    %v1221 = vadd.f32 %v1142, %v1220
    %1222 = vdwg.mxu0
    %1223 = vmatpush.msra.mxu0 0.0
    %1224 = vmatpush.msra.mxu0 0.0
    %1225 = vmatpush.msra.mxu0 0.0
    %1226 = vmatpush.msra.mxu0 0.0
    %1227 = vmatpush.msra.mxu0 0.0
    %1228 = vmatpush.msra.mxu0 0.0
    %v1229 = vand.u32 %v119, 4294901760
    %v1230 = vsub.f32 %v119, %v1229
    %1231 = vmatpush.msra.mxu0 %v1230
    %v1232 = vand.u32 %v115, 4294901760
    %v1233 = vsub.f32 %v115, %v1232
    %1234 = vmatpush.msra.mxu0 %v1233
    %v1235 = vand.u32 %v111, 4294901760
    %v1236 = vsub.f32 %v111, %v1235
    %1237 = vmatpush.msra.mxu0 %v1236
    %v1238 = vand.u32 %v107, 4294901760
    %v1239 = vsub.f32 %v107, %v1238
    %1240 = vmatpush.msra.mxu0 %v1239
    %v1241 = vand.u32 %v103, 4294901760
    %v1242 = vsub.f32 %v103, %v1241
    %1243 = vmatpush.msra.mxu0 %v1242
    %v1244 = vand.u32 %v99, 4294901760
    %v1245 = vsub.f32 %v99, %v1244
    %1246 = vmatpush.msra.mxu0 %v1245
    %v1247 = vand.u32 %v95, 4294901760
    %v1248 = vsub.f32 %v95, %v1247
    %1249 = vmatpush.msra.mxu0 %v1248
    %v1250 = vand.u32 %v91, 4294901760
    %v1251 = vsub.f32 %v91, %v1250
    %1252 = vmatpush.msra.mxu0 %v1251
    %v1253 = vand.u32 %v87, 4294901760
    %v1254 = vsub.f32 %v87, %v1253
    %1255 = vmatpush.msra.mxu0 %v1254
    %v1256 = vand.u32 %v83, 4294901760
    %v1257 = vsub.f32 %v83, %v1256
    %1258 = vmatpush.msra.mxu0 %v1257
    %v1259 = vand.u32 %v122, 4294901760
    %v1260 = vsub.f32 %v122, %v1259
    %1261 = vmatmul.f32.gmra.mxu0 %v1260
    %v1262 = vpop.f32.mrf.mxu0
    %v1263 = vadd.f32 %v1213, %v1262
    %v1264 = vand.u32 %v125, 4294901760
    %v1265 = vsub.f32 %v125, %v1264
    %1266 = vmatmul.f32.gmra.mxu0 %v1265
    %v1267 = vpop.f32.mrf.mxu0
    %v1268 = vadd.f32 %v1217, %v1267
    %v1269 = vand.u32 %v128, 4294901760
    %v1270 = vsub.f32 %v128, %v1269
    %1271 = vmatmul.f32.gmra.mxu0 %v1270
    %v1272 = vpop.f32.mrf.mxu0
    %v1273 = vadd.f32 %v1221, %v1272
    %1274 = vdwg.mxu0
    %1275 = vmatpush.msra.mxu0 0.0
    %1276 = vmatpush.msra.mxu0 0.0
    %1277 = vmatpush.msra.mxu0 0.0
    %1278 = vmatpush.msra.mxu0 0.0
    %1279 = vmatpush.msra.mxu0 0.0
    %1280 = vmatpush.msra.mxu0 0.0
    %v1281 = vand.u32 %v119, 4294901760
    %1282 = vmatpush.msra.mxu0 %v1281
    %v1283 = vand.u32 %v115, 4294901760
    %1284 = vmatpush.msra.mxu0 %v1283
    %v1285 = vand.u32 %v111, 4294901760
    %1286 = vmatpush.msra.mxu0 %v1285
    %v1287 = vand.u32 %v107, 4294901760
    %1288 = vmatpush.msra.mxu0 %v1287
    %v1289 = vand.u32 %v103, 4294901760
    %1290 = vmatpush.msra.mxu0 %v1289
    %v1291 = vand.u32 %v99, 4294901760
    %1292 = vmatpush.msra.mxu0 %v1291
    %v1293 = vand.u32 %v95, 4294901760
    %1294 = vmatpush.msra.mxu0 %v1293
    %v1295 = vand.u32 %v91, 4294901760
    %1296 = vmatpush.msra.mxu0 %v1295
    %v1297 = vand.u32 %v87, 4294901760
    %1298 = vmatpush.msra.mxu0 %v1297
    %v1299 = vand.u32 %v83, 4294901760
    %1300 = vmatpush.msra.mxu0 %v1299
    %v1301 = vand.u32 %v122, 4294901760
    %v1302 = vsub.f32 %v122, %v1301
    %v1303 = vand.u32 %v1302, 4294901760
    %1304 = vmatmul.f32.gmra.mxu0 %v1303
    %v1305 = vpop.f32.mrf.mxu0
    %v1306 = vadd.f32 %v1263, %v1305
    %v1307 = vand.u32 %v125, 4294901760
    %v1308 = vsub.f32 %v125, %v1307
    %v1309 = vand.u32 %v1308, 4294901760
    %1310 = vmatmul.f32.gmra.mxu0 %v1309
    %v1311 = vpop.f32.mrf.mxu0
    %v1312 = vadd.f32 %v1268, %v1311
    %v1313 = vand.u32 %v128, 4294901760
    %v1314 = vsub.f32 %v128, %v1313
    %v1315 = vand.u32 %v1314, 4294901760
    %1316 = vmatmul.f32.gmra.mxu0 %v1315
    %v1317 = vpop.f32.mrf.mxu0
    %v1318 = vadd.f32 %v1273, %v1317
    %1319 = vdwg.mxu0
    %1320 = vmatpush.msra.mxu0 0.0
    %1321 = vmatpush.msra.mxu0 0.0
    %1322 = vmatpush.msra.mxu0 0.0
    %1323 = vmatpush.msra.mxu0 0.0
    %1324 = vmatpush.msra.mxu0 0.0
    %1325 = vmatpush.msra.mxu0 0.0
    %v1326 = vand.u32 %v119, 4294901760
    %v1327 = vsub.f32 %v119, %v1326
    %v1328 = vand.u32 %v1327, 4294901760
    %1329 = vmatpush.msra.mxu0 %v1328
    %v1330 = vand.u32 %v115, 4294901760
    %v1331 = vsub.f32 %v115, %v1330
    %v1332 = vand.u32 %v1331, 4294901760
    %1333 = vmatpush.msra.mxu0 %v1332
    %v1334 = vand.u32 %v111, 4294901760
    %v1335 = vsub.f32 %v111, %v1334
    %v1336 = vand.u32 %v1335, 4294901760
    %1337 = vmatpush.msra.mxu0 %v1336
    %v1338 = vand.u32 %v107, 4294901760
    %v1339 = vsub.f32 %v107, %v1338
    %v1340 = vand.u32 %v1339, 4294901760
    %1341 = vmatpush.msra.mxu0 %v1340
    %v1342 = vand.u32 %v103, 4294901760
    %v1343 = vsub.f32 %v103, %v1342
    %v1344 = vand.u32 %v1343, 4294901760
    %1345 = vmatpush.msra.mxu0 %v1344
    %v1346 = vand.u32 %v99, 4294901760
    %v1347 = vsub.f32 %v99, %v1346
    %v1348 = vand.u32 %v1347, 4294901760
    %1349 = vmatpush.msra.mxu0 %v1348
    %v1350 = vand.u32 %v95, 4294901760
    %v1351 = vsub.f32 %v95, %v1350
    %v1352 = vand.u32 %v1351, 4294901760
    %1353 = vmatpush.msra.mxu0 %v1352
    %v1354 = vand.u32 %v91, 4294901760
    %v1355 = vsub.f32 %v91, %v1354
    %v1356 = vand.u32 %v1355, 4294901760
    %1357 = vmatpush.msra.mxu0 %v1356
    %v1358 = vand.u32 %v87, 4294901760
    %v1359 = vsub.f32 %v87, %v1358
    %v1360 = vand.u32 %v1359, 4294901760
    %1361 = vmatpush.msra.mxu0 %v1360
    %v1362 = vand.u32 %v83, 4294901760
    %v1363 = vsub.f32 %v83, %v1362
    %v1364 = vand.u32 %v1363, 4294901760
    %1365 = vmatpush.msra.mxu0 %v1364
    %v1366 = vand.u32 %v122, 4294901760
    %1367 = vmatmul.f32.gmra.mxu0 %v1366
    %v1368 = vpop.f32.mrf.mxu0
    %v1369 = vadd.f32 %v1306, %v1368
    %v1370 = vand.u32 %v125, 4294901760
    %1371 = vmatmul.f32.gmra.mxu0 %v1370
    %v1372 = vpop.f32.mrf.mxu0
    %v1373 = vadd.f32 %v1312, %v1372
    %v1374 = vand.u32 %v128, 4294901760
    %1375 = vmatmul.f32.gmra.mxu0 %v1374
    %v1376 = vpop.f32.mrf.mxu0
    %v1377 = vadd.f32 %v1318, %v1376
    %1378 = vdwg.mxu0
    %1379 = vmatpush.msra.mxu0 0.0
    %1380 = vmatpush.msra.mxu0 0.0
    %1381 = vmatpush.msra.mxu0 0.0
    %1382 = vmatpush.msra.mxu0 0.0
    %1383 = vmatpush.msra.mxu0 0.0
    %1384 = vmatpush.msra.mxu0 0.0
    %v1385 = vand.u32 %v119, 4294901760
    %1386 = vmatpush.msra.mxu0 %v1385
    %v1387 = vand.u32 %v115, 4294901760
    %1388 = vmatpush.msra.mxu0 %v1387
    %v1389 = vand.u32 %v111, 4294901760
    %1390 = vmatpush.msra.mxu0 %v1389
    %v1391 = vand.u32 %v107, 4294901760
    %1392 = vmatpush.msra.mxu0 %v1391
    %v1393 = vand.u32 %v103, 4294901760
    %1394 = vmatpush.msra.mxu0 %v1393
    %v1395 = vand.u32 %v99, 4294901760
    %1396 = vmatpush.msra.mxu0 %v1395
    %v1397 = vand.u32 %v95, 4294901760
    %1398 = vmatpush.msra.mxu0 %v1397
    %v1399 = vand.u32 %v91, 4294901760
    %1400 = vmatpush.msra.mxu0 %v1399
    %v1401 = vand.u32 %v87, 4294901760
    %1402 = vmatpush.msra.mxu0 %v1401
    %v1403 = vand.u32 %v83, 4294901760
    %1404 = vmatpush.msra.mxu0 %v1403
    %v1405 = vand.u32 %v122, 4294901760
    %1406 = vmatmul.f32.gmra.mxu0 %v1405
    %v1407 = vpop.f32.mrf.mxu0
    %v1408 = vadd.f32 %v1369, %v1407
    %v1409 = vand.u32 %v125, 4294901760
    %1410 = vmatmul.f32.gmra.mxu0 %v1409
    %v1411 = vpop.f32.mrf.mxu0
    %v1412 = vadd.f32 %v1373, %v1411
    %v1413 = vand.u32 %v128, 4294901760
    %1414 = vmatmul.f32.gmra.mxu0 %v1413
    %v1415 = vpop.f32.mrf.mxu0
    %v1416 = vadd.f32 %v1377, %v1415
    %1417 = vdwg.mxu0
    %v1418 = vld [vmem:[%s3] sm:$0xf]
    %v1420 = vperm.slane %v1418, 0
    %v1421 = vperm.slane %v1418, 2
    %v1422 = vperm.slane %v1418, 3
    %v1426 = vadd.f32 %v445, %v1420
    %v1427 = vadd.f32 %v1083, %v1421
    %v1428 = vadd.f32 %v1408, %v1422
    %v1429 = vadd.f32 %v449, %v1420
    %v1430 = vadd.f32 %v1087, %v1421
    %v1431 = vadd.f32 %v1412, %v1422
    %v1432 = vxor.u32 %v1426, 2147483648
    %v1433 = vxor.u32 %v1429, 2147483648
    %v1434 = vmul.f32 %v1432, 1.442695
    %v1435 = vpow.pop %v1434
    %v1436 = vmul.f32 %v1433, 1.442695
    %v1437 = vpow.pop %v1436
    %v1438 = vadd.f32 %v1435, 1.0
    %v1439 = vadd.f32 %v1437, 1.0
    %v1440 = vrcp.pop %v1438
    %v1441 = vmul.f32 %v1438, %v1440
    %v1442 = vsub.f32 1.0, %v1441
    %v1443 = vmul.f32 %v1440, %v1442
    %v1444 = vadd.f32 %v1440, %v1443
    %vm1445 = vweird.f32 %v1438
    %vm1446 = vweird.f32 %v1440
    %vm1447 = vmor %vm1445, %vm1446
    %v1448 = vsel %vm1447, %v1440, %v1444
    %v1449 = vand.u32 2147483647, %v1438
    %vm1450 = vcmp.eq.f32.partialorder %v1449, 8.507059e+37
    %v1451 = vand.u32 %v1438, 2147483648
    %v1452 = vor.u32 1.1754944e-38, %v1451
    %v1453 = vsel %vm1450, %v1452, %v1448
    %v1454 = vmul.f32 1.0, %v1453
    %v1455 = vrcp.pop %v1439
    %v1456 = vmul.f32 %v1439, %v1455
    %v1457 = vsub.f32 1.0, %v1456
    %v1458 = vmul.f32 %v1455, %v1457
    %v1459 = vadd.f32 %v1455, %v1458
    %vm1460 = vweird.f32 %v1439
    %vm1461 = vweird.f32 %v1455
    %vm1462 = vmor %vm1460, %vm1461
    %v1463 = vsel %vm1462, %v1455, %v1459
    %v1464 = vand.u32 2147483647, %v1439
    %vm1465 = vcmp.eq.f32.partialorder %v1464, 8.507059e+37
    %v1466 = vand.u32 %v1439, 2147483648
    %v1467 = vor.u32 1.1754944e-38, %v1466
    %v1468 = vsel %vm1465, %v1467, %v1463
    %v1469 = vmul.f32 1.0, %v1468
    %v1470 = vtanh.pop %v1427
    %v1471 = vtanh.pop %v1430
    %v1472 = vxor.u32 %v1428, 2147483648
    %v1473 = vxor.u32 %v1431, 2147483648
    %v1474 = vmul.f32 %v1472, 1.442695
    %v1475 = vpow.pop %v1474
    %v1476 = vmul.f32 %v1473, 1.442695
    %v1477 = vpow.pop %v1476
    %v1478 = vadd.f32 %v1475, 1.0
    %v1479 = vadd.f32 %v1477, 1.0
    %v1480 = vrcp.pop %v1478
    %v1481 = vmul.f32 %v1478, %v1480
    %v1482 = vsub.f32 1.0, %v1481
    %v1483 = vmul.f32 %v1480, %v1482
    %v1484 = vadd.f32 %v1480, %v1483
    %vm1485 = vweird.f32 %v1478
    %vm1486 = vweird.f32 %v1480
    %vm1487 = vmor %vm1485, %vm1486
    %v1488 = vsel %vm1487, %v1480, %v1484
    %v1489 = vand.u32 2147483647, %v1478
    %vm1490 = vcmp.eq.f32.partialorder %v1489, 8.507059e+37
    %v1491 = vand.u32 %v1478, 2147483648
    %v1492 = vor.u32 1.1754944e-38, %v1491
    %v1493 = vsel %vm1490, %v1492, %v1488
    %v1494 = vmul.f32 1.0, %v1493
    %v1495 = vrcp.pop %v1479
    %v1496 = vmul.f32 %v1479, %v1495
    %v1497 = vsub.f32 1.0, %v1496
    %v1498 = vmul.f32 %v1495, %v1497
    %v1499 = vadd.f32 %v1495, %v1498
    %vm1500 = vweird.f32 %v1479
    %vm1501 = vweird.f32 %v1495
    %vm1502 = vmor %vm1500, %vm1501
    %v1503 = vsel %vm1502, %v1495, %v1499
    %v1504 = vand.u32 2147483647, %v1479
    %vm1505 = vcmp.eq.f32.partialorder %v1504, 8.507059e+37
    %v1506 = vand.u32 %v1479, 2147483648
    %v1507 = vor.u32 1.1754944e-38, %v1506
    %v1508 = vsel %vm1505, %v1507, %v1503
    %v1509 = vmul.f32 1.0, %v1508
    %v1510 = vmul.f32 %v1454, %v1470
    %v1511 = vmul.f32 %v1469, %v1471
    %v1512 = vtanh.pop %v1510
    %v1513 = vtanh.pop %v1511
    %v1514 = vmul.f32 %v1494, %v1512
    %v1515 = vmul.f32 %v1509, %v1513
    %v1516 = vld [vmem:[#allocation5] sm:$0xff]
    %v1517 = vld [vmem:[#allocation5 + $0x8] sm:$0xff]
    %v1518 = vld [vmem:[#allocation5 + $0x10] sm:$0xff]
    %v1519 = vld [vmem:[#allocation5 + $0x18] sm:$0xff]
    %v1520 = vld [vmem:[#allocation5 + $0x20] sm:$0xff]
    %v1521 = vld [vmem:[#allocation5 + $0x28] sm:$0xff]
    %v1522 = vld [vmem:[#allocation5 + $0x30] sm:$0xff]
    %v1523 = vld [vmem:[#allocation5 + $0x38] sm:$0xff]
    %v1524 = vld [vmem:[#allocation5 + $0x40] sm:$0xff]
    %v1525 = vld [vmem:[#allocation5 + $0x48] sm:$0xff]
    %v1526 = vld [vmem:[#allocation5 + $0x50] sm:$0xff]
    %v1527 = vld [vmem:[#allocation5 + $0x58] sm:$0xff]
    %v1528 = vld [vmem:[#allocation5 + $0x60] sm:$0xff]
    %v1529 = vld [vmem:[#allocation5 + $0x68] sm:$0xff]
    %v1530 = vld [vmem:[#allocation5 + $0x70] sm:$0xff]
    %v1531 = vld [vmem:[#allocation5 + $0x78] sm:$0xff]
    %v1532 = vld [vmem:[#allocation5 + $0x80] sm:$0xff]
    %v1533 = vld [vmem:[#allocation5 + $0x88] sm:$0xff]
    %v1534 = vld [vmem:[#allocation5 + $0x90] sm:$0xff]
    %v1535 = vld [vmem:[#allocation5 + $0x98] sm:$0xff]
    %v1536 = vld [vmem:[#allocation5 + $0xa0] sm:$0xff]
    %v1537 = vld [vmem:[#allocation5 + $0xa8] sm:$0xff]
    %v1538 = vld [vmem:[#allocation5 + $0xb0] sm:$0xff]
    %v1539 = vld [vmem:[#allocation5 + $0xb8] sm:$0xff]
    %v1540 = vld [vmem:[#allocation5 + $0xc0] sm:$0xff]
    %v1541 = vld [vmem:[#allocation5 + $0xc8] sm:$0xff]
    %v1542 = vld [vmem:[#allocation5 + $0xd0] sm:$0xff]
    %v1543 = vld [vmem:[#allocation5 + $0xd8] sm:$0xff]
    %v1544 = vld [vmem:[#allocation5 + $0xe0] sm:$0xff]
    %v1545 = vld [vmem:[#allocation5 + $0xe8] sm:$0xff]
    %v1546 = vld [vmem:[#allocation5 + $0xf0] sm:$0xff]
    %v1547 = vld [vmem:[#allocation5 + $0xf8] sm:$0xff]
    %v1548 = vld [vmem:[#allocation5 + $0x100] sm:$0xff]
    %v1549 = vld [vmem:[#allocation5 + $0x108] sm:$0xff]
    %v1550 = vld [vmem:[#allocation5 + $0x110] sm:$0xff]
    %v1551 = vld [vmem:[#allocation5 + $0x118] sm:$0xff]
    %v1552 = vld [vmem:[#allocation5 + $0x120] sm:$0xff]
    %v1553 = vld [vmem:[#allocation5 + $0x128] sm:$0xff]
    %v1554 = vld [vmem:[#allocation5 + $0x130] sm:$0xff]
    %v1555 = vld [vmem:[#allocation5 + $0x138] sm:$0xff]
    %v1556 = vld [vmem:[#allocation5 + $0x140] sm:$0xff]
    %v1557 = vld [vmem:[#allocation5 + $0x148] sm:$0xff]
    %v1558 = vld [vmem:[#allocation5 + $0x150] sm:$0xff]
    %v1559 = vld [vmem:[#allocation5 + $0x158] sm:$0xff]
    %v1560 = vld [vmem:[#allocation5 + $0x160] sm:$0xff]
    %v1561 = vld [vmem:[#allocation5 + $0x168] sm:$0xff]
    %v1562 = vld [vmem:[#allocation5 + $0x170] sm:$0xff]
    %v1563 = vld [vmem:[#allocation5 + $0x178] sm:$0xff]
    %v1564 = vld [vmem:[#allocation5 + $0x180] sm:$0xff]
    %v1565 = vld [vmem:[#allocation5 + $0x188] sm:$0xff]
    %v1566 = vld [vmem:[#allocation5 + $0x190] sm:$0xff]
    %v1567 = vld [vmem:[#allocation5 + $0x198] sm:$0xff]
    %v1568 = vld [vmem:[#allocation5 + $0x1a0] sm:$0xff]
    %v1569 = vld [vmem:[#allocation5 + $0x1a8] sm:$0xff]
    %v1570 = vld [vmem:[#allocation5 + $0x1b0] sm:$0xff]
    %v1571 = vld [vmem:[#allocation5 + $0x1b8] sm:$0xff]
    %v1572 = vld [vmem:[#allocation5 + $0x1c0] sm:$0xff]
    %v1573 = vld [vmem:[#allocation5 + $0x1c8] sm:$0xff]
    %v1574 = vld [vmem:[#allocation5 + $0x1d0] sm:$0xff]
    %v1575 = vld [vmem:[#allocation5 + $0x1d8] sm:$0xff]
    %v1576 = vld [vmem:[#allocation5 + $0x1e0] sm:$0xff]
    %v1577 = vld [vmem:[#allocation5 + $0x1e8] sm:$0xff]
    %v1578 = vld [vmem:[#allocation5 + $0x1f0] sm:$0xff]
    %v1579 = vld [vmem:[#allocation5 + $0x1f8] sm:$0xff]
    %v1580 = vand.u32 %v1576, 4294901760
    %1581 = vmatpush.msra.mxu0 %v1580
    %v1582 = vand.u32 %v1572, 4294901760
    %1583 = vmatpush.msra.mxu0 %v1582
    %v1584 = vand.u32 %v1568, 4294901760
    %1585 = vmatpush.msra.mxu0 %v1584
    %v1586 = vand.u32 %v1564, 4294901760
    %1587 = vmatpush.msra.mxu0 %v1586
    %v1588 = vand.u32 %v1560, 4294901760
    %1589 = vmatpush.msra.mxu0 %v1588
    %v1590 = vand.u32 %v1556, 4294901760
    %1591 = vmatpush.msra.mxu0 %v1590
    %v1592 = vand.u32 %v1552, 4294901760
    %1593 = vmatpush.msra.mxu0 %v1592
    %v1594 = vand.u32 %v1548, 4294901760
    %1595 = vmatpush.msra.mxu0 %v1594
    %v1596 = vand.u32 %v1544, 4294901760
    %1597 = vmatpush.msra.mxu0 %v1596
    %v1598 = vand.u32 %v1540, 4294901760
    %1599 = vmatpush.msra.mxu0 %v1598
    %v1600 = vand.u32 %v1536, 4294901760
    %1601 = vmatpush.msra.mxu0 %v1600
    %v1602 = vand.u32 %v1532, 4294901760
    %1603 = vmatpush.msra.mxu0 %v1602
    %v1604 = vand.u32 %v1528, 4294901760
    %1605 = vmatpush.msra.mxu0 %v1604
    %v1606 = vand.u32 %v1524, 4294901760
    %1607 = vmatpush.msra.mxu0 %v1606
    %v1608 = vand.u32 %v1520, 4294901760
    %1609 = vmatpush.msra.mxu0 %v1608
    %v1610 = vand.u32 %v1516, 4294901760
    %1611 = vmatpush.msra.mxu0 %v1610
    %v1612 = vand.u32 %v1514, 4294901760
    %v1613 = vsub.f32 %v1514, %v1612
    %v1614 = vand.u32 %v1613, 4294901760
    %v1615 = vsub.f32 %v1613, %v1614
    %v1616 = vand.u32 %v1615, 4294901760
    %1617 = vmatmul.f32.gmra.mxu0 %v1616
    %v1618 = vpop.f32.mrf.mxu0
    %v1619 = vadd.f32 0.0, %v1618
    %v1620 = vand.u32 %v1515, 4294901760
    %v1621 = vsub.f32 %v1515, %v1620
    %v1622 = vand.u32 %v1621, 4294901760
    %v1623 = vsub.f32 %v1621, %v1622
    %v1624 = vand.u32 %v1623, 4294901760
    %1625 = vmatmul.f32.gmra.mxu0 %v1624
    %v1626 = vpop.f32.mrf.mxu0
    %v1627 = vadd.f32 0.0, %v1626
    %1628 = vdwg.mxu0
    %v1629 = vand.u32 %v1576, 4294901760
    %v1630 = vsub.f32 %v1576, %v1629
    %v1631 = vand.u32 %v1630, 4294901760
    %v1632 = vsub.f32 %v1630, %v1631
    %v1633 = vand.u32 %v1632, 4294901760
    %1634 = vmatpush.msra.mxu0 %v1633
    %v1635 = vand.u32 %v1572, 4294901760
    %v1636 = vsub.f32 %v1572, %v1635
    %v1637 = vand.u32 %v1636, 4294901760
    %v1638 = vsub.f32 %v1636, %v1637
    %v1639 = vand.u32 %v1638, 4294901760
    %1640 = vmatpush.msra.mxu0 %v1639
    %v1641 = vand.u32 %v1568, 4294901760
    %v1642 = vsub.f32 %v1568, %v1641
    %v1643 = vand.u32 %v1642, 4294901760
    %v1644 = vsub.f32 %v1642, %v1643
    %v1645 = vand.u32 %v1644, 4294901760
    %1646 = vmatpush.msra.mxu0 %v1645
    %v1647 = vand.u32 %v1564, 4294901760
    %v1648 = vsub.f32 %v1564, %v1647
    %v1649 = vand.u32 %v1648, 4294901760
    %v1650 = vsub.f32 %v1648, %v1649
    %v1651 = vand.u32 %v1650, 4294901760
    %1652 = vmatpush.msra.mxu0 %v1651
    %v1653 = vand.u32 %v1560, 4294901760
    %v1654 = vsub.f32 %v1560, %v1653
    %v1655 = vand.u32 %v1654, 4294901760
    %v1656 = vsub.f32 %v1654, %v1655
    %v1657 = vand.u32 %v1656, 4294901760
    %1658 = vmatpush.msra.mxu0 %v1657
    %v1659 = vand.u32 %v1556, 4294901760
    %v1660 = vsub.f32 %v1556, %v1659
    %v1661 = vand.u32 %v1660, 4294901760
    %v1662 = vsub.f32 %v1660, %v1661
    %v1663 = vand.u32 %v1662, 4294901760
    %1664 = vmatpush.msra.mxu0 %v1663
    %v1665 = vand.u32 %v1552, 4294901760
    %v1666 = vsub.f32 %v1552, %v1665
    %v1667 = vand.u32 %v1666, 4294901760
    %v1668 = vsub.f32 %v1666, %v1667
    %v1669 = vand.u32 %v1668, 4294901760
    %1670 = vmatpush.msra.mxu0 %v1669
    %v1671 = vand.u32 %v1548, 4294901760
    %v1672 = vsub.f32 %v1548, %v1671
    %v1673 = vand.u32 %v1672, 4294901760
    %v1674 = vsub.f32 %v1672, %v1673
    %v1675 = vand.u32 %v1674, 4294901760
    %1676 = vmatpush.msra.mxu0 %v1675
    %v1677 = vand.u32 %v1544, 4294901760
    %v1678 = vsub.f32 %v1544, %v1677
    %v1679 = vand.u32 %v1678, 4294901760
    %v1680 = vsub.f32 %v1678, %v1679
    %v1681 = vand.u32 %v1680, 4294901760
    %1682 = vmatpush.msra.mxu0 %v1681
    %v1683 = vand.u32 %v1540, 4294901760
    %v1684 = vsub.f32 %v1540, %v1683
    %v1685 = vand.u32 %v1684, 4294901760
    %v1686 = vsub.f32 %v1684, %v1685
    %v1687 = vand.u32 %v1686, 4294901760
    %1688 = vmatpush.msra.mxu0 %v1687
    %v1689 = vand.u32 %v1536, 4294901760
    %v1690 = vsub.f32 %v1536, %v1689
    %v1691 = vand.u32 %v1690, 4294901760
    %v1692 = vsub.f32 %v1690, %v1691
    %v1693 = vand.u32 %v1692, 4294901760
    %1694 = vmatpush.msra.mxu0 %v1693
    %v1695 = vand.u32 %v1532, 4294901760
    %v1696 = vsub.f32 %v1532, %v1695
    %v1697 = vand.u32 %v1696, 4294901760
    %v1698 = vsub.f32 %v1696, %v1697
    %v1699 = vand.u32 %v1698, 4294901760
    %1700 = vmatpush.msra.mxu0 %v1699
    %v1701 = vand.u32 %v1528, 4294901760
    %v1702 = vsub.f32 %v1528, %v1701
    %v1703 = vand.u32 %v1702, 4294901760
    %v1704 = vsub.f32 %v1702, %v1703
    %v1705 = vand.u32 %v1704, 4294901760
    %1706 = vmatpush.msra.mxu0 %v1705
    %v1707 = vand.u32 %v1524, 4294901760
    %v1708 = vsub.f32 %v1524, %v1707
    %v1709 = vand.u32 %v1708, 4294901760
    %v1710 = vsub.f32 %v1708, %v1709
    %v1711 = vand.u32 %v1710, 4294901760
    %1712 = vmatpush.msra.mxu0 %v1711
    %v1713 = vand.u32 %v1520, 4294901760
    %v1714 = vsub.f32 %v1520, %v1713
    %v1715 = vand.u32 %v1714, 4294901760
    %v1716 = vsub.f32 %v1714, %v1715
    %v1717 = vand.u32 %v1716, 4294901760
    %1718 = vmatpush.msra.mxu0 %v1717
    %v1719 = vand.u32 %v1516, 4294901760
    %v1720 = vsub.f32 %v1516, %v1719
    %v1721 = vand.u32 %v1720, 4294901760
    %v1722 = vsub.f32 %v1720, %v1721
    %v1723 = vand.u32 %v1722, 4294901760
    %1724 = vmatpush.msra.mxu0 %v1723
    %v1725 = vand.u32 %v1514, 4294901760
    %1726 = vmatmul.f32.gmra.mxu0 %v1725
    %v1727 = vpop.f32.mrf.mxu0
    %v1728 = vadd.f32 %v1619, %v1727
    %v1729 = vand.u32 %v1515, 4294901760
    %1730 = vmatmul.f32.gmra.mxu0 %v1729
    %v1731 = vpop.f32.mrf.mxu0
    %v1732 = vadd.f32 %v1627, %v1731
    %1733 = vdwg.mxu0
    %v1734 = vand.u32 %v1576, 4294901760
    %v1735 = vsub.f32 %v1576, %v1734
    %1736 = vmatpush.msra.mxu0 %v1735
    %v1737 = vand.u32 %v1572, 4294901760
    %v1738 = vsub.f32 %v1572, %v1737
    %1739 = vmatpush.msra.mxu0 %v1738
    %v1740 = vand.u32 %v1568, 4294901760
    %v1741 = vsub.f32 %v1568, %v1740
    %1742 = vmatpush.msra.mxu0 %v1741
    %v1743 = vand.u32 %v1564, 4294901760
    %v1744 = vsub.f32 %v1564, %v1743
    %1745 = vmatpush.msra.mxu0 %v1744
    %v1746 = vand.u32 %v1560, 4294901760
    %v1747 = vsub.f32 %v1560, %v1746
    %1748 = vmatpush.msra.mxu0 %v1747
    %v1749 = vand.u32 %v1556, 4294901760
    %v1750 = vsub.f32 %v1556, %v1749
    %1751 = vmatpush.msra.mxu0 %v1750
    %v1752 = vand.u32 %v1552, 4294901760
    %v1753 = vsub.f32 %v1552, %v1752
    %1754 = vmatpush.msra.mxu0 %v1753
    %v1755 = vand.u32 %v1548, 4294901760
    %v1756 = vsub.f32 %v1548, %v1755
    %1757 = vmatpush.msra.mxu0 %v1756
    %v1758 = vand.u32 %v1544, 4294901760
    %v1759 = vsub.f32 %v1544, %v1758
    %1760 = vmatpush.msra.mxu0 %v1759
    %v1761 = vand.u32 %v1540, 4294901760
    %v1762 = vsub.f32 %v1540, %v1761
    %1763 = vmatpush.msra.mxu0 %v1762
    %v1764 = vand.u32 %v1536, 4294901760
    %v1765 = vsub.f32 %v1536, %v1764
    %1766 = vmatpush.msra.mxu0 %v1765
    %v1767 = vand.u32 %v1532, 4294901760
    %v1768 = vsub.f32 %v1532, %v1767
    %1769 = vmatpush.msra.mxu0 %v1768
    %v1770 = vand.u32 %v1528, 4294901760
    %v1771 = vsub.f32 %v1528, %v1770
    %1772 = vmatpush.msra.mxu0 %v1771
    %v1773 = vand.u32 %v1524, 4294901760
    %v1774 = vsub.f32 %v1524, %v1773
    %1775 = vmatpush.msra.mxu0 %v1774
    %v1776 = vand.u32 %v1520, 4294901760
    %v1777 = vsub.f32 %v1520, %v1776
    %1778 = vmatpush.msra.mxu0 %v1777
    %v1779 = vand.u32 %v1516, 4294901760
    %v1780 = vsub.f32 %v1516, %v1779
    %1781 = vmatpush.msra.mxu0 %v1780
    %v1782 = vand.u32 %v1514, 4294901760
    %v1783 = vsub.f32 %v1514, %v1782
    %1784 = vmatmul.f32.gmra.mxu0 %v1783
    %v1785 = vpop.f32.mrf.mxu0
    %v1786 = vadd.f32 %v1728, %v1785
    %v1787 = vand.u32 %v1515, 4294901760
    %v1788 = vsub.f32 %v1515, %v1787
    %1789 = vmatmul.f32.gmra.mxu0 %v1788
    %v1790 = vpop.f32.mrf.mxu0
    %v1791 = vadd.f32 %v1732, %v1790
    %1792 = vdwg.mxu0
    %v1793 = vand.u32 %v1576, 4294901760
    %1794 = vmatpush.msra.mxu0 %v1793
    %v1795 = vand.u32 %v1572, 4294901760
    %1796 = vmatpush.msra.mxu0 %v1795
    %v1797 = vand.u32 %v1568, 4294901760
    %1798 = vmatpush.msra.mxu0 %v1797
    %v1799 = vand.u32 %v1564, 4294901760
    %1800 = vmatpush.msra.mxu0 %v1799
    %v1801 = vand.u32 %v1560, 4294901760
    %1802 = vmatpush.msra.mxu0 %v1801
    %v1803 = vand.u32 %v1556, 4294901760
    %1804 = vmatpush.msra.mxu0 %v1803
    %v1805 = vand.u32 %v1552, 4294901760
    %1806 = vmatpush.msra.mxu0 %v1805
    %v1807 = vand.u32 %v1548, 4294901760
    %1808 = vmatpush.msra.mxu0 %v1807
    %v1809 = vand.u32 %v1544, 4294901760
    %1810 = vmatpush.msra.mxu0 %v1809
    %v1811 = vand.u32 %v1540, 4294901760
    %1812 = vmatpush.msra.mxu0 %v1811
    %v1813 = vand.u32 %v1536, 4294901760
    %1814 = vmatpush.msra.mxu0 %v1813
    %v1815 = vand.u32 %v1532, 4294901760
    %1816 = vmatpush.msra.mxu0 %v1815
    %v1817 = vand.u32 %v1528, 4294901760
    %1818 = vmatpush.msra.mxu0 %v1817
    %v1819 = vand.u32 %v1524, 4294901760
    %1820 = vmatpush.msra.mxu0 %v1819
    %v1821 = vand.u32 %v1520, 4294901760
    %1822 = vmatpush.msra.mxu0 %v1821
    %v1823 = vand.u32 %v1516, 4294901760
    %1824 = vmatpush.msra.mxu0 %v1823
    %v1825 = vand.u32 %v1514, 4294901760
    %v1826 = vsub.f32 %v1514, %v1825
    %v1827 = vand.u32 %v1826, 4294901760
    %1828 = vmatmul.f32.gmra.mxu0 %v1827
    %v1829 = vpop.f32.mrf.mxu0
    %v1830 = vadd.f32 %v1786, %v1829
    %v1831 = vand.u32 %v1515, 4294901760
    %v1832 = vsub.f32 %v1515, %v1831
    %v1833 = vand.u32 %v1832, 4294901760
    %1834 = vmatmul.f32.gmra.mxu0 %v1833
    %v1835 = vpop.f32.mrf.mxu0
    %v1836 = vadd.f32 %v1791, %v1835
    %1837 = vdwg.mxu0
    %v1838 = vand.u32 %v1576, 4294901760
    %v1839 = vsub.f32 %v1576, %v1838
    %v1840 = vand.u32 %v1839, 4294901760
    %1841 = vmatpush.msra.mxu0 %v1840
    %v1842 = vand.u32 %v1572, 4294901760
    %v1843 = vsub.f32 %v1572, %v1842
    %v1844 = vand.u32 %v1843, 4294901760
    %1845 = vmatpush.msra.mxu0 %v1844
    %v1846 = vand.u32 %v1568, 4294901760
    %v1847 = vsub.f32 %v1568, %v1846
    %v1848 = vand.u32 %v1847, 4294901760
    %1849 = vmatpush.msra.mxu0 %v1848
    %v1850 = vand.u32 %v1564, 4294901760
    %v1851 = vsub.f32 %v1564, %v1850
    %v1852 = vand.u32 %v1851, 4294901760
    %1853 = vmatpush.msra.mxu0 %v1852
    %v1854 = vand.u32 %v1560, 4294901760
    %v1855 = vsub.f32 %v1560, %v1854
    %v1856 = vand.u32 %v1855, 4294901760
    %1857 = vmatpush.msra.mxu0 %v1856
    %v1858 = vand.u32 %v1556, 4294901760
    %v1859 = vsub.f32 %v1556, %v1858
    %v1860 = vand.u32 %v1859, 4294901760
    %1861 = vmatpush.msra.mxu0 %v1860
    %v1862 = vand.u32 %v1552, 4294901760
    %v1863 = vsub.f32 %v1552, %v1862
    %v1864 = vand.u32 %v1863, 4294901760
    %1865 = vmatpush.msra.mxu0 %v1864
    %v1866 = vand.u32 %v1548, 4294901760
    %v1867 = vsub.f32 %v1548, %v1866
    %v1868 = vand.u32 %v1867, 4294901760
    %1869 = vmatpush.msra.mxu0 %v1868
    %v1870 = vand.u32 %v1544, 4294901760
    %v1871 = vsub.f32 %v1544, %v1870
    %v1872 = vand.u32 %v1871, 4294901760
    %1873 = vmatpush.msra.mxu0 %v1872
    %v1874 = vand.u32 %v1540, 4294901760
    %v1875 = vsub.f32 %v1540, %v1874
    %v1876 = vand.u32 %v1875, 4294901760
    %1877 = vmatpush.msra.mxu0 %v1876
    %v1878 = vand.u32 %v1536, 4294901760
    %v1879 = vsub.f32 %v1536, %v1878
    %v1880 = vand.u32 %v1879, 4294901760
    %1881 = vmatpush.msra.mxu0 %v1880
    %v1882 = vand.u32 %v1532, 4294901760
    %v1883 = vsub.f32 %v1532, %v1882
    %v1884 = vand.u32 %v1883, 4294901760
    %1885 = vmatpush.msra.mxu0 %v1884
    %v1886 = vand.u32 %v1528, 4294901760
    %v1887 = vsub.f32 %v1528, %v1886
    %v1888 = vand.u32 %v1887, 4294901760
    %1889 = vmatpush.msra.mxu0 %v1888
    %v1890 = vand.u32 %v1524, 4294901760
    %v1891 = vsub.f32 %v1524, %v1890
    %v1892 = vand.u32 %v1891, 4294901760
    %1893 = vmatpush.msra.mxu0 %v1892
    %v1894 = vand.u32 %v1520, 4294901760
    %v1895 = vsub.f32 %v1520, %v1894
    %v1896 = vand.u32 %v1895, 4294901760
    %1897 = vmatpush.msra.mxu0 %v1896
    %v1898 = vand.u32 %v1516, 4294901760
    %v1899 = vsub.f32 %v1516, %v1898
    %v1900 = vand.u32 %v1899, 4294901760
    %1901 = vmatpush.msra.mxu0 %v1900
    %v1902 = vand.u32 %v1514, 4294901760
    %1903 = vmatmul.f32.gmra.mxu0 %v1902
    %v1904 = vpop.f32.mrf.mxu0
    %v1905 = vadd.f32 %v1830, %v1904
    %v1906 = vand.u32 %v1515, 4294901760
    %1907 = vmatmul.f32.gmra.mxu0 %v1906
    %v1908 = vpop.f32.mrf.mxu0
    %v1909 = vadd.f32 %v1836, %v1908
    %1910 = vdwg.mxu0
    %v1911 = vand.u32 %v1576, 4294901760
    %1912 = vmatpush.msra.mxu0 %v1911
    %v1913 = vand.u32 %v1572, 4294901760
    %1914 = vmatpush.msra.mxu0 %v1913
    %v1915 = vand.u32 %v1568, 4294901760
    %1916 = vmatpush.msra.mxu0 %v1915
    %v1917 = vand.u32 %v1564, 4294901760
    %1918 = vmatpush.msra.mxu0 %v1917
    %v1919 = vand.u32 %v1560, 4294901760
    %1920 = vmatpush.msra.mxu0 %v1919
    %v1921 = vand.u32 %v1556, 4294901760
    %1922 = vmatpush.msra.mxu0 %v1921
    %v1923 = vand.u32 %v1552, 4294901760
    %1924 = vmatpush.msra.mxu0 %v1923
    %v1925 = vand.u32 %v1548, 4294901760
    %1926 = vmatpush.msra.mxu0 %v1925
    %v1927 = vand.u32 %v1544, 4294901760
    %1928 = vmatpush.msra.mxu0 %v1927
    %v1929 = vand.u32 %v1540, 4294901760
    %1930 = vmatpush.msra.mxu0 %v1929
    %v1931 = vand.u32 %v1536, 4294901760
    %1932 = vmatpush.msra.mxu0 %v1931
    %v1933 = vand.u32 %v1532, 4294901760
    %1934 = vmatpush.msra.mxu0 %v1933
    %v1935 = vand.u32 %v1528, 4294901760
    %1936 = vmatpush.msra.mxu0 %v1935
    %v1937 = vand.u32 %v1524, 4294901760
    %1938 = vmatpush.msra.mxu0 %v1937
    %v1939 = vand.u32 %v1520, 4294901760
    %1940 = vmatpush.msra.mxu0 %v1939
    %v1941 = vand.u32 %v1516, 4294901760
    %1942 = vmatpush.msra.mxu0 %v1941
    %v1943 = vand.u32 %v1514, 4294901760
    %1944 = vmatmul.f32.gmra.mxu0 %v1943
    %v1945 = vpop.f32.mrf.mxu0
    %v1946 = vadd.f32 %v1905, %v1945
    %v1947 = vand.u32 %v1515, 4294901760
    %1948 = vmatmul.f32.gmra.mxu0 %v1947
    %v1949 = vpop.f32.mrf.mxu0
    %v1950 = vadd.f32 %v1909, %v1949
    %1951 = vdwg.mxu0
    %v1952 = vand.u32 %v1577, 4294901760
    %1953 = vmatpush.msra.mxu0 %v1952
    %v1954 = vand.u32 %v1573, 4294901760
    %1955 = vmatpush.msra.mxu0 %v1954
    %v1956 = vand.u32 %v1569, 4294901760
    %1957 = vmatpush.msra.mxu0 %v1956
    %v1958 = vand.u32 %v1565, 4294901760
    %1959 = vmatpush.msra.mxu0 %v1958
    %v1960 = vand.u32 %v1561, 4294901760
    %1961 = vmatpush.msra.mxu0 %v1960
    %v1962 = vand.u32 %v1557, 4294901760
    %1963 = vmatpush.msra.mxu0 %v1962
    %v1964 = vand.u32 %v1553, 4294901760
    %1965 = vmatpush.msra.mxu0 %v1964
    %v1966 = vand.u32 %v1549, 4294901760
    %1967 = vmatpush.msra.mxu0 %v1966
    %v1968 = vand.u32 %v1545, 4294901760
    %1969 = vmatpush.msra.mxu0 %v1968
    %v1970 = vand.u32 %v1541, 4294901760
    %1971 = vmatpush.msra.mxu0 %v1970
    %v1972 = vand.u32 %v1537, 4294901760
    %1973 = vmatpush.msra.mxu0 %v1972
    %v1974 = vand.u32 %v1533, 4294901760
    %1975 = vmatpush.msra.mxu0 %v1974
    %v1976 = vand.u32 %v1529, 4294901760
    %1977 = vmatpush.msra.mxu0 %v1976
    %v1978 = vand.u32 %v1525, 4294901760
    %1979 = vmatpush.msra.mxu0 %v1978
    %v1980 = vand.u32 %v1521, 4294901760
    %1981 = vmatpush.msra.mxu0 %v1980
    %v1982 = vand.u32 %v1517, 4294901760
    %1983 = vmatpush.msra.mxu0 %v1982
    %v1984 = vand.u32 %v1514, 4294901760
    %v1985 = vsub.f32 %v1514, %v1984
    %v1986 = vand.u32 %v1985, 4294901760
    %v1987 = vsub.f32 %v1985, %v1986
    %v1988 = vand.u32 %v1987, 4294901760
    %1989 = vmatmul.f32.gmra.mxu0 %v1988
    %v1990 = vpop.f32.mrf.mxu0
    %v1991 = vadd.f32 0.0, %v1990
    %v1992 = vand.u32 %v1515, 4294901760
    %v1993 = vsub.f32 %v1515, %v1992
    %v1994 = vand.u32 %v1993, 4294901760
    %v1995 = vsub.f32 %v1993, %v1994
    %v1996 = vand.u32 %v1995, 4294901760
    %1997 = vmatmul.f32.gmra.mxu0 %v1996
    %v1998 = vpop.f32.mrf.mxu0
    %v1999 = vadd.f32 0.0, %v1998
    %2000 = vdwg.mxu0
    %v2001 = vand.u32 %v1577, 4294901760
    %v2002 = vsub.f32 %v1577, %v2001
    %v2003 = vand.u32 %v2002, 4294901760
    %v2004 = vsub.f32 %v2002, %v2003
    %v2005 = vand.u32 %v2004, 4294901760
    %2006 = vmatpush.msra.mxu0 %v2005
    %v2007 = vand.u32 %v1573, 4294901760
    %v2008 = vsub.f32 %v1573, %v2007
    %v2009 = vand.u32 %v2008, 4294901760
    %v2010 = vsub.f32 %v2008, %v2009
    %v2011 = vand.u32 %v2010, 4294901760
    %2012 = vmatpush.msra.mxu0 %v2011
    %v2013 = vand.u32 %v1569, 4294901760
    %v2014 = vsub.f32 %v1569, %v2013
    %v2015 = vand.u32 %v2014, 4294901760
    %v2016 = vsub.f32 %v2014, %v2015
    %v2017 = vand.u32 %v2016, 4294901760
    %2018 = vmatpush.msra.mxu0 %v2017
    %v2019 = vand.u32 %v1565, 4294901760
    %v2020 = vsub.f32 %v1565, %v2019
    %v2021 = vand.u32 %v2020, 4294901760
    %v2022 = vsub.f32 %v2020, %v2021
    %v2023 = vand.u32 %v2022, 4294901760
    %2024 = vmatpush.msra.mxu0 %v2023
    %v2025 = vand.u32 %v1561, 4294901760
    %v2026 = vsub.f32 %v1561, %v2025
    %v2027 = vand.u32 %v2026, 4294901760
    %v2028 = vsub.f32 %v2026, %v2027
    %v2029 = vand.u32 %v2028, 4294901760
    %2030 = vmatpush.msra.mxu0 %v2029
    %v2031 = vand.u32 %v1557, 4294901760
    %v2032 = vsub.f32 %v1557, %v2031
    %v2033 = vand.u32 %v2032, 4294901760
    %v2034 = vsub.f32 %v2032, %v2033
    %v2035 = vand.u32 %v2034, 4294901760
    %2036 = vmatpush.msra.mxu0 %v2035
    %v2037 = vand.u32 %v1553, 4294901760
    %v2038 = vsub.f32 %v1553, %v2037
    %v2039 = vand.u32 %v2038, 4294901760
    %v2040 = vsub.f32 %v2038, %v2039
    %v2041 = vand.u32 %v2040, 4294901760
    %2042 = vmatpush.msra.mxu0 %v2041
    %v2043 = vand.u32 %v1549, 4294901760
    %v2044 = vsub.f32 %v1549, %v2043
    %v2045 = vand.u32 %v2044, 4294901760
    %v2046 = vsub.f32 %v2044, %v2045
    %v2047 = vand.u32 %v2046, 4294901760
    %2048 = vmatpush.msra.mxu0 %v2047
    %v2049 = vand.u32 %v1545, 4294901760
    %v2050 = vsub.f32 %v1545, %v2049
    %v2051 = vand.u32 %v2050, 4294901760
    %v2052 = vsub.f32 %v2050, %v2051
    %v2053 = vand.u32 %v2052, 4294901760
    %2054 = vmatpush.msra.mxu0 %v2053
    %v2055 = vand.u32 %v1541, 4294901760
    %v2056 = vsub.f32 %v1541, %v2055
    %v2057 = vand.u32 %v2056, 4294901760
    %v2058 = vsub.f32 %v2056, %v2057
    %v2059 = vand.u32 %v2058, 4294901760
    %2060 = vmatpush.msra.mxu0 %v2059
    %v2061 = vand.u32 %v1537, 4294901760
    %v2062 = vsub.f32 %v1537, %v2061
    %v2063 = vand.u32 %v2062, 4294901760
    %v2064 = vsub.f32 %v2062, %v2063
    %v2065 = vand.u32 %v2064, 4294901760
    %2066 = vmatpush.msra.mxu0 %v2065
    %v2067 = vand.u32 %v1533, 4294901760
    %v2068 = vsub.f32 %v1533, %v2067
    %v2069 = vand.u32 %v2068, 4294901760
    %v2070 = vsub.f32 %v2068, %v2069
    %v2071 = vand.u32 %v2070, 4294901760
    %2072 = vmatpush.msra.mxu0 %v2071
    %v2073 = vand.u32 %v1529, 4294901760
    %v2074 = vsub.f32 %v1529, %v2073
    %v2075 = vand.u32 %v2074, 4294901760
    %v2076 = vsub.f32 %v2074, %v2075
    %v2077 = vand.u32 %v2076, 4294901760
    %2078 = vmatpush.msra.mxu0 %v2077
    %v2079 = vand.u32 %v1525, 4294901760
    %v2080 = vsub.f32 %v1525, %v2079
    %v2081 = vand.u32 %v2080, 4294901760
    %v2082 = vsub.f32 %v2080, %v2081
    %v2083 = vand.u32 %v2082, 4294901760
    %2084 = vmatpush.msra.mxu0 %v2083
    %v2085 = vand.u32 %v1521, 4294901760
    %v2086 = vsub.f32 %v1521, %v2085
    %v2087 = vand.u32 %v2086, 4294901760
    %v2088 = vsub.f32 %v2086, %v2087
    %v2089 = vand.u32 %v2088, 4294901760
    %2090 = vmatpush.msra.mxu0 %v2089
    %v2091 = vand.u32 %v1517, 4294901760
    %v2092 = vsub.f32 %v1517, %v2091
    %v2093 = vand.u32 %v2092, 4294901760
    %v2094 = vsub.f32 %v2092, %v2093
    %v2095 = vand.u32 %v2094, 4294901760
    %2096 = vmatpush.msra.mxu0 %v2095
    %v2097 = vand.u32 %v1514, 4294901760
    %2098 = vmatmul.f32.gmra.mxu0 %v2097
    %v2099 = vpop.f32.mrf.mxu0
    %v2100 = vadd.f32 %v1991, %v2099
    %v2101 = vand.u32 %v1515, 4294901760
    %2102 = vmatmul.f32.gmra.mxu0 %v2101
    %v2103 = vpop.f32.mrf.mxu0
    %v2104 = vadd.f32 %v1999, %v2103
    %2105 = vdwg.mxu0
    %v2106 = vand.u32 %v1577, 4294901760
    %v2107 = vsub.f32 %v1577, %v2106
    %2108 = vmatpush.msra.mxu0 %v2107
    %v2109 = vand.u32 %v1573, 4294901760
    %v2110 = vsub.f32 %v1573, %v2109
    %2111 = vmatpush.msra.mxu0 %v2110
    %v2112 = vand.u32 %v1569, 4294901760
    %v2113 = vsub.f32 %v1569, %v2112
    %2114 = vmatpush.msra.mxu0 %v2113
    %v2115 = vand.u32 %v1565, 4294901760
    %v2116 = vsub.f32 %v1565, %v2115
    %2117 = vmatpush.msra.mxu0 %v2116
    %v2118 = vand.u32 %v1561, 4294901760
    %v2119 = vsub.f32 %v1561, %v2118
    %2120 = vmatpush.msra.mxu0 %v2119
    %v2121 = vand.u32 %v1557, 4294901760
    %v2122 = vsub.f32 %v1557, %v2121
    %2123 = vmatpush.msra.mxu0 %v2122
    %v2124 = vand.u32 %v1553, 4294901760
    %v2125 = vsub.f32 %v1553, %v2124
    %2126 = vmatpush.msra.mxu0 %v2125
    %v2127 = vand.u32 %v1549, 4294901760
    %v2128 = vsub.f32 %v1549, %v2127
    %2129 = vmatpush.msra.mxu0 %v2128
    %v2130 = vand.u32 %v1545, 4294901760
    %v2131 = vsub.f32 %v1545, %v2130
    %2132 = vmatpush.msra.mxu0 %v2131
    %v2133 = vand.u32 %v1541, 4294901760
    %v2134 = vsub.f32 %v1541, %v2133
    %2135 = vmatpush.msra.mxu0 %v2134
    %v2136 = vand.u32 %v1537, 4294901760
    %v2137 = vsub.f32 %v1537, %v2136
    %2138 = vmatpush.msra.mxu0 %v2137
    %v2139 = vand.u32 %v1533, 4294901760
    %v2140 = vsub.f32 %v1533, %v2139
    %2141 = vmatpush.msra.mxu0 %v2140
    %v2142 = vand.u32 %v1529, 4294901760
    %v2143 = vsub.f32 %v1529, %v2142
    %2144 = vmatpush.msra.mxu0 %v2143
    %v2145 = vand.u32 %v1525, 4294901760
    %v2146 = vsub.f32 %v1525, %v2145
    %2147 = vmatpush.msra.mxu0 %v2146
    %v2148 = vand.u32 %v1521, 4294901760
    %v2149 = vsub.f32 %v1521, %v2148
    %2150 = vmatpush.msra.mxu0 %v2149
    %v2151 = vand.u32 %v1517, 4294901760
    %v2152 = vsub.f32 %v1517, %v2151
    %2153 = vmatpush.msra.mxu0 %v2152
    %v2154 = vand.u32 %v1514, 4294901760
    %v2155 = vsub.f32 %v1514, %v2154
    %2156 = vmatmul.f32.gmra.mxu0 %v2155
    %v2157 = vpop.f32.mrf.mxu0
    %v2158 = vadd.f32 %v2100, %v2157
    %v2159 = vand.u32 %v1515, 4294901760
    %v2160 = vsub.f32 %v1515, %v2159
    %2161 = vmatmul.f32.gmra.mxu0 %v2160
    %v2162 = vpop.f32.mrf.mxu0
    %v2163 = vadd.f32 %v2104, %v2162
    %2164 = vdwg.mxu0
    %v2165 = vand.u32 %v1577, 4294901760
    %2166 = vmatpush.msra.mxu0 %v2165
    %v2167 = vand.u32 %v1573, 4294901760
    %2168 = vmatpush.msra.mxu0 %v2167
    %v2169 = vand.u32 %v1569, 4294901760
    %2170 = vmatpush.msra.mxu0 %v2169
    %v2171 = vand.u32 %v1565, 4294901760
    %2172 = vmatpush.msra.mxu0 %v2171
    %v2173 = vand.u32 %v1561, 4294901760
    %2174 = vmatpush.msra.mxu0 %v2173
    %v2175 = vand.u32 %v1557, 4294901760
    %2176 = vmatpush.msra.mxu0 %v2175
    %v2177 = vand.u32 %v1553, 4294901760
    %2178 = vmatpush.msra.mxu0 %v2177
    %v2179 = vand.u32 %v1549, 4294901760
    %2180 = vmatpush.msra.mxu0 %v2179
    %v2181 = vand.u32 %v1545, 4294901760
    %2182 = vmatpush.msra.mxu0 %v2181
    %v2183 = vand.u32 %v1541, 4294901760
    %2184 = vmatpush.msra.mxu0 %v2183
    %v2185 = vand.u32 %v1537, 4294901760
    %2186 = vmatpush.msra.mxu0 %v2185
    %v2187 = vand.u32 %v1533, 4294901760
    %2188 = vmatpush.msra.mxu0 %v2187
    %v2189 = vand.u32 %v1529, 4294901760
    %2190 = vmatpush.msra.mxu0 %v2189
    %v2191 = vand.u32 %v1525, 4294901760
    %2192 = vmatpush.msra.mxu0 %v2191
    %v2193 = vand.u32 %v1521, 4294901760
    %2194 = vmatpush.msra.mxu0 %v2193
    %v2195 = vand.u32 %v1517, 4294901760
    %2196 = vmatpush.msra.mxu0 %v2195
    %v2197 = vand.u32 %v1514, 4294901760
    %v2198 = vsub.f32 %v1514, %v2197
    %v2199 = vand.u32 %v2198, 4294901760
    %2200 = vmatmul.f32.gmra.mxu0 %v2199
    %v2201 = vpop.f32.mrf.mxu0
    %v2202 = vadd.f32 %v2158, %v2201
    %v2203 = vand.u32 %v1515, 4294901760
    %v2204 = vsub.f32 %v1515, %v2203
    %v2205 = vand.u32 %v2204, 4294901760
    %2206 = vmatmul.f32.gmra.mxu0 %v2205
    %v2207 = vpop.f32.mrf.mxu0
    %v2208 = vadd.f32 %v2163, %v2207
    %2209 = vdwg.mxu0
    %v2210 = vand.u32 %v1577, 4294901760
    %v2211 = vsub.f32 %v1577, %v2210
    %v2212 = vand.u32 %v2211, 4294901760
    %2213 = vmatpush.msra.mxu0 %v2212
    %v2214 = vand.u32 %v1573, 4294901760
    %v2215 = vsub.f32 %v1573, %v2214
    %v2216 = vand.u32 %v2215, 4294901760
    %2217 = vmatpush.msra.mxu0 %v2216
    %v2218 = vand.u32 %v1569, 4294901760
    %v2219 = vsub.f32 %v1569, %v2218
    %v2220 = vand.u32 %v2219, 4294901760
    %2221 = vmatpush.msra.mxu0 %v2220
    %v2222 = vand.u32 %v1565, 4294901760
    %v2223 = vsub.f32 %v1565, %v2222
    %v2224 = vand.u32 %v2223, 4294901760
    %2225 = vmatpush.msra.mxu0 %v2224
    %v2226 = vand.u32 %v1561, 4294901760
    %v2227 = vsub.f32 %v1561, %v2226
    %v2228 = vand.u32 %v2227, 4294901760
    %2229 = vmatpush.msra.mxu0 %v2228
    %v2230 = vand.u32 %v1557, 4294901760
    %v2231 = vsub.f32 %v1557, %v2230
    %v2232 = vand.u32 %v2231, 4294901760
    %2233 = vmatpush.msra.mxu0 %v2232
    %v2234 = vand.u32 %v1553, 4294901760
    %v2235 = vsub.f32 %v1553, %v2234
    %v2236 = vand.u32 %v2235, 4294901760
    %2237 = vmatpush.msra.mxu0 %v2236
    %v2238 = vand.u32 %v1549, 4294901760
    %v2239 = vsub.f32 %v1549, %v2238
    %v2240 = vand.u32 %v2239, 4294901760
    %2241 = vmatpush.msra.mxu0 %v2240
    %v2242 = vand.u32 %v1545, 4294901760
    %v2243 = vsub.f32 %v1545, %v2242
    %v2244 = vand.u32 %v2243, 4294901760
    %2245 = vmatpush.msra.mxu0 %v2244
    %v2246 = vand.u32 %v1541, 4294901760
    %v2247 = vsub.f32 %v1541, %v2246
    %v2248 = vand.u32 %v2247, 4294901760
    %2249 = vmatpush.msra.mxu0 %v2248
    %v2250 = vand.u32 %v1537, 4294901760
    %v2251 = vsub.f32 %v1537, %v2250
    %v2252 = vand.u32 %v2251, 4294901760
    %2253 = vmatpush.msra.mxu0 %v2252
    %v2254 = vand.u32 %v1533, 4294901760
    %v2255 = vsub.f32 %v1533, %v2254
    %v2256 = vand.u32 %v2255, 4294901760
    %2257 = vmatpush.msra.mxu0 %v2256
    %v2258 = vand.u32 %v1529, 4294901760
    %v2259 = vsub.f32 %v1529, %v2258
    %v2260 = vand.u32 %v2259, 4294901760
    %2261 = vmatpush.msra.mxu0 %v2260
    %v2262 = vand.u32 %v1525, 4294901760
    %v2263 = vsub.f32 %v1525, %v2262
    %v2264 = vand.u32 %v2263, 4294901760
    %2265 = vmatpush.msra.mxu0 %v2264
    %v2266 = vand.u32 %v1521, 4294901760
    %v2267 = vsub.f32 %v1521, %v2266
    %v2268 = vand.u32 %v2267, 4294901760
    %2269 = vmatpush.msra.mxu0 %v2268
    %v2270 = vand.u32 %v1517, 4294901760
    %v2271 = vsub.f32 %v1517, %v2270
    %v2272 = vand.u32 %v2271, 4294901760
    %2273 = vmatpush.msra.mxu0 %v2272
    %v2274 = vand.u32 %v1514, 4294901760
    %2275 = vmatmul.f32.gmra.mxu0 %v2274
    %v2276 = vpop.f32.mrf.mxu0
    %v2277 = vadd.f32 %v2202, %v2276
    %v2278 = vand.u32 %v1515, 4294901760
    %2279 = vmatmul.f32.gmra.mxu0 %v2278
    %v2280 = vpop.f32.mrf.mxu0
    %v2281 = vadd.f32 %v2208, %v2280
    %2282 = vdwg.mxu0
    %v2283 = vand.u32 %v1577, 4294901760
    %2284 = vmatpush.msra.mxu0 %v2283
    %v2285 = vand.u32 %v1573, 4294901760
    %2286 = vmatpush.msra.mxu0 %v2285
    %v2287 = vand.u32 %v1569, 4294901760
    %2288 = vmatpush.msra.mxu0 %v2287
    %v2289 = vand.u32 %v1565, 4294901760
    %2290 = vmatpush.msra.mxu0 %v2289
    %v2291 = vand.u32 %v1561, 4294901760
    %2292 = vmatpush.msra.mxu0 %v2291
    %v2293 = vand.u32 %v1557, 4294901760
    %2294 = vmatpush.msra.mxu0 %v2293
    %v2295 = vand.u32 %v1553, 4294901760
    %2296 = vmatpush.msra.mxu0 %v2295
    %v2297 = vand.u32 %v1549, 4294901760
    %2298 = vmatpush.msra.mxu0 %v2297
    %v2299 = vand.u32 %v1545, 4294901760
    %2300 = vmatpush.msra.mxu0 %v2299
    %v2301 = vand.u32 %v1541, 4294901760
    %2302 = vmatpush.msra.mxu0 %v2301
    %v2303 = vand.u32 %v1537, 4294901760
    %2304 = vmatpush.msra.mxu0 %v2303
    %v2305 = vand.u32 %v1533, 4294901760
    %2306 = vmatpush.msra.mxu0 %v2305
    %v2307 = vand.u32 %v1529, 4294901760
    %2308 = vmatpush.msra.mxu0 %v2307
    %v2309 = vand.u32 %v1525, 4294901760
    %2310 = vmatpush.msra.mxu0 %v2309
    %v2311 = vand.u32 %v1521, 4294901760
    %2312 = vmatpush.msra.mxu0 %v2311
    %v2313 = vand.u32 %v1517, 4294901760
    %2314 = vmatpush.msra.mxu0 %v2313
    %v2315 = vand.u32 %v1514, 4294901760
    %2316 = vmatmul.f32.gmra.mxu0 %v2315
    %v2317 = vpop.f32.mrf.mxu0
    %v2318 = vadd.f32 %v2277, %v2317
    %v2319 = vand.u32 %v1515, 4294901760
    %2320 = vmatmul.f32.gmra.mxu0 %v2319
    %v2321 = vpop.f32.mrf.mxu0
    %v2322 = vadd.f32 %v2281, %v2321
    %2323 = vdwg.mxu0
    %v2324 = vand.u32 %v1578, 4294901760
    %2325 = vmatpush.msra.mxu0 %v2324
    %v2326 = vand.u32 %v1574, 4294901760
    %2327 = vmatpush.msra.mxu0 %v2326
    %v2328 = vand.u32 %v1570, 4294901760
    %2329 = vmatpush.msra.mxu0 %v2328
    %v2330 = vand.u32 %v1566, 4294901760
    %2331 = vmatpush.msra.mxu0 %v2330
    %v2332 = vand.u32 %v1562, 4294901760
    %2333 = vmatpush.msra.mxu0 %v2332
    %v2334 = vand.u32 %v1558, 4294901760
    %2335 = vmatpush.msra.mxu0 %v2334
    %v2336 = vand.u32 %v1554, 4294901760
    %2337 = vmatpush.msra.mxu0 %v2336
    %v2338 = vand.u32 %v1550, 4294901760
    %2339 = vmatpush.msra.mxu0 %v2338
    %v2340 = vand.u32 %v1546, 4294901760
    %2341 = vmatpush.msra.mxu0 %v2340
    %v2342 = vand.u32 %v1542, 4294901760
    %2343 = vmatpush.msra.mxu0 %v2342
    %v2344 = vand.u32 %v1538, 4294901760
    %2345 = vmatpush.msra.mxu0 %v2344
    %v2346 = vand.u32 %v1534, 4294901760
    %2347 = vmatpush.msra.mxu0 %v2346
    %v2348 = vand.u32 %v1530, 4294901760
    %2349 = vmatpush.msra.mxu0 %v2348
    %v2350 = vand.u32 %v1526, 4294901760
    %2351 = vmatpush.msra.mxu0 %v2350
    %v2352 = vand.u32 %v1522, 4294901760
    %2353 = vmatpush.msra.mxu0 %v2352
    %v2354 = vand.u32 %v1518, 4294901760
    %2355 = vmatpush.msra.mxu0 %v2354
    %v2356 = vand.u32 %v1514, 4294901760
    %v2357 = vsub.f32 %v1514, %v2356
    %v2358 = vand.u32 %v2357, 4294901760
    %v2359 = vsub.f32 %v2357, %v2358
    %v2360 = vand.u32 %v2359, 4294901760
    %2361 = vmatmul.f32.gmra.mxu0 %v2360
    %v2362 = vpop.f32.mrf.mxu0
    %v2363 = vadd.f32 0.0, %v2362
    %v2364 = vand.u32 %v1515, 4294901760
    %v2365 = vsub.f32 %v1515, %v2364
    %v2366 = vand.u32 %v2365, 4294901760
    %v2367 = vsub.f32 %v2365, %v2366
    %v2368 = vand.u32 %v2367, 4294901760
    %2369 = vmatmul.f32.gmra.mxu0 %v2368
    %v2370 = vpop.f32.mrf.mxu0
    %v2371 = vadd.f32 0.0, %v2370
    %2372 = vdwg.mxu0
    %v2373 = vand.u32 %v1578, 4294901760
    %v2374 = vsub.f32 %v1578, %v2373
    %v2375 = vand.u32 %v2374, 4294901760
    %v2376 = vsub.f32 %v2374, %v2375
    %v2377 = vand.u32 %v2376, 4294901760
    %2378 = vmatpush.msra.mxu0 %v2377
    %v2379 = vand.u32 %v1574, 4294901760
    %v2380 = vsub.f32 %v1574, %v2379
    %v2381 = vand.u32 %v2380, 4294901760
    %v2382 = vsub.f32 %v2380, %v2381
    %v2383 = vand.u32 %v2382, 4294901760
    %2384 = vmatpush.msra.mxu0 %v2383
    %v2385 = vand.u32 %v1570, 4294901760
    %v2386 = vsub.f32 %v1570, %v2385
    %v2387 = vand.u32 %v2386, 4294901760
    %v2388 = vsub.f32 %v2386, %v2387
    %v2389 = vand.u32 %v2388, 4294901760
    %2390 = vmatpush.msra.mxu0 %v2389
    %v2391 = vand.u32 %v1566, 4294901760
    %v2392 = vsub.f32 %v1566, %v2391
    %v2393 = vand.u32 %v2392, 4294901760
    %v2394 = vsub.f32 %v2392, %v2393
    %v2395 = vand.u32 %v2394, 4294901760
    %2396 = vmatpush.msra.mxu0 %v2395
    %v2397 = vand.u32 %v1562, 4294901760
    %v2398 = vsub.f32 %v1562, %v2397
    %v2399 = vand.u32 %v2398, 4294901760
    %v2400 = vsub.f32 %v2398, %v2399
    %v2401 = vand.u32 %v2400, 4294901760
    %2402 = vmatpush.msra.mxu0 %v2401
    %v2403 = vand.u32 %v1558, 4294901760
    %v2404 = vsub.f32 %v1558, %v2403
    %v2405 = vand.u32 %v2404, 4294901760
    %v2406 = vsub.f32 %v2404, %v2405
    %v2407 = vand.u32 %v2406, 4294901760
    %2408 = vmatpush.msra.mxu0 %v2407
    %v2409 = vand.u32 %v1554, 4294901760
    %v2410 = vsub.f32 %v1554, %v2409
    %v2411 = vand.u32 %v2410, 4294901760
    %v2412 = vsub.f32 %v2410, %v2411
    %v2413 = vand.u32 %v2412, 4294901760
    %2414 = vmatpush.msra.mxu0 %v2413
    %v2415 = vand.u32 %v1550, 4294901760
    %v2416 = vsub.f32 %v1550, %v2415
    %v2417 = vand.u32 %v2416, 4294901760
    %v2418 = vsub.f32 %v2416, %v2417
    %v2419 = vand.u32 %v2418, 4294901760
    %2420 = vmatpush.msra.mxu0 %v2419
    %v2421 = vand.u32 %v1546, 4294901760
    %v2422 = vsub.f32 %v1546, %v2421
    %v2423 = vand.u32 %v2422, 4294901760
    %v2424 = vsub.f32 %v2422, %v2423
    %v2425 = vand.u32 %v2424, 4294901760
    %2426 = vmatpush.msra.mxu0 %v2425
    %v2427 = vand.u32 %v1542, 4294901760
    %v2428 = vsub.f32 %v1542, %v2427
    %v2429 = vand.u32 %v2428, 4294901760
    %v2430 = vsub.f32 %v2428, %v2429
    %v2431 = vand.u32 %v2430, 4294901760
    %2432 = vmatpush.msra.mxu0 %v2431
    %v2433 = vand.u32 %v1538, 4294901760
    %v2434 = vsub.f32 %v1538, %v2433
    %v2435 = vand.u32 %v2434, 4294901760
    %v2436 = vsub.f32 %v2434, %v2435
    %v2437 = vand.u32 %v2436, 4294901760
    %2438 = vmatpush.msra.mxu0 %v2437
    %v2439 = vand.u32 %v1534, 4294901760
    %v2440 = vsub.f32 %v1534, %v2439
    %v2441 = vand.u32 %v2440, 4294901760
    %v2442 = vsub.f32 %v2440, %v2441
    %v2443 = vand.u32 %v2442, 4294901760
    %2444 = vmatpush.msra.mxu0 %v2443
    %v2445 = vand.u32 %v1530, 4294901760
    %v2446 = vsub.f32 %v1530, %v2445
    %v2447 = vand.u32 %v2446, 4294901760
    %v2448 = vsub.f32 %v2446, %v2447
    %v2449 = vand.u32 %v2448, 4294901760
    %2450 = vmatpush.msra.mxu0 %v2449
    %v2451 = vand.u32 %v1526, 4294901760
    %v2452 = vsub.f32 %v1526, %v2451
    %v2453 = vand.u32 %v2452, 4294901760
    %v2454 = vsub.f32 %v2452, %v2453
    %v2455 = vand.u32 %v2454, 4294901760
    %2456 = vmatpush.msra.mxu0 %v2455
    %v2457 = vand.u32 %v1522, 4294901760
    %v2458 = vsub.f32 %v1522, %v2457
    %v2459 = vand.u32 %v2458, 4294901760
    %v2460 = vsub.f32 %v2458, %v2459
    %v2461 = vand.u32 %v2460, 4294901760
    %2462 = vmatpush.msra.mxu0 %v2461
    %v2463 = vand.u32 %v1518, 4294901760
    %v2464 = vsub.f32 %v1518, %v2463
    %v2465 = vand.u32 %v2464, 4294901760
    %v2466 = vsub.f32 %v2464, %v2465
    %v2467 = vand.u32 %v2466, 4294901760
    %2468 = vmatpush.msra.mxu0 %v2467
    %v2469 = vand.u32 %v1514, 4294901760
    %2470 = vmatmul.f32.gmra.mxu0 %v2469
    %v2471 = vpop.f32.mrf.mxu0
    %v2472 = vadd.f32 %v2363, %v2471
    %v2473 = vand.u32 %v1515, 4294901760
    %2474 = vmatmul.f32.gmra.mxu0 %v2473
    %v2475 = vpop.f32.mrf.mxu0
    %v2476 = vadd.f32 %v2371, %v2475
    %2477 = vdwg.mxu0
    %v2478 = vand.u32 %v1578, 4294901760
    %v2479 = vsub.f32 %v1578, %v2478
    %2480 = vmatpush.msra.mxu0 %v2479
    %v2481 = vand.u32 %v1574, 4294901760
    %v2482 = vsub.f32 %v1574, %v2481
    %2483 = vmatpush.msra.mxu0 %v2482
    %v2484 = vand.u32 %v1570, 4294901760
    %v2485 = vsub.f32 %v1570, %v2484
    %2486 = vmatpush.msra.mxu0 %v2485
    %v2487 = vand.u32 %v1566, 4294901760
    %v2488 = vsub.f32 %v1566, %v2487
    %2489 = vmatpush.msra.mxu0 %v2488
    %v2490 = vand.u32 %v1562, 4294901760
    %v2491 = vsub.f32 %v1562, %v2490
    %2492 = vmatpush.msra.mxu0 %v2491
    %v2493 = vand.u32 %v1558, 4294901760
    %v2494 = vsub.f32 %v1558, %v2493
    %2495 = vmatpush.msra.mxu0 %v2494
    %v2496 = vand.u32 %v1554, 4294901760
    %v2497 = vsub.f32 %v1554, %v2496
    %2498 = vmatpush.msra.mxu0 %v2497
    %v2499 = vand.u32 %v1550, 4294901760
    %v2500 = vsub.f32 %v1550, %v2499
    %2501 = vmatpush.msra.mxu0 %v2500
    %v2502 = vand.u32 %v1546, 4294901760
    %v2503 = vsub.f32 %v1546, %v2502
    %2504 = vmatpush.msra.mxu0 %v2503
    %v2505 = vand.u32 %v1542, 4294901760
    %v2506 = vsub.f32 %v1542, %v2505
    %2507 = vmatpush.msra.mxu0 %v2506
    %v2508 = vand.u32 %v1538, 4294901760
    %v2509 = vsub.f32 %v1538, %v2508
    %2510 = vmatpush.msra.mxu0 %v2509
    %v2511 = vand.u32 %v1534, 4294901760
    %v2512 = vsub.f32 %v1534, %v2511
    %2513 = vmatpush.msra.mxu0 %v2512
    %v2514 = vand.u32 %v1530, 4294901760
    %v2515 = vsub.f32 %v1530, %v2514
    %2516 = vmatpush.msra.mxu0 %v2515
    %v2517 = vand.u32 %v1526, 4294901760
    %v2518 = vsub.f32 %v1526, %v2517
    %2519 = vmatpush.msra.mxu0 %v2518
    %v2520 = vand.u32 %v1522, 4294901760
    %v2521 = vsub.f32 %v1522, %v2520
    %2522 = vmatpush.msra.mxu0 %v2521
    %v2523 = vand.u32 %v1518, 4294901760
    %v2524 = vsub.f32 %v1518, %v2523
    %2525 = vmatpush.msra.mxu0 %v2524
    %v2526 = vand.u32 %v1514, 4294901760
    %v2527 = vsub.f32 %v1514, %v2526
    %2528 = vmatmul.f32.gmra.mxu0 %v2527
    %v2529 = vpop.f32.mrf.mxu0
    %v2530 = vadd.f32 %v2472, %v2529
    %v2531 = vand.u32 %v1515, 4294901760
    %v2532 = vsub.f32 %v1515, %v2531
    %2533 = vmatmul.f32.gmra.mxu0 %v2532
    %v2534 = vpop.f32.mrf.mxu0
    %v2535 = vadd.f32 %v2476, %v2534
    %2536 = vdwg.mxu0
    %v2537 = vand.u32 %v1578, 4294901760
    %2538 = vmatpush.msra.mxu0 %v2537
    %v2539 = vand.u32 %v1574, 4294901760
    %2540 = vmatpush.msra.mxu0 %v2539
    %v2541 = vand.u32 %v1570, 4294901760
    %2542 = vmatpush.msra.mxu0 %v2541
    %v2543 = vand.u32 %v1566, 4294901760
    %2544 = vmatpush.msra.mxu0 %v2543
    %v2545 = vand.u32 %v1562, 4294901760
    %2546 = vmatpush.msra.mxu0 %v2545
    %v2547 = vand.u32 %v1558, 4294901760
    %2548 = vmatpush.msra.mxu0 %v2547
    %v2549 = vand.u32 %v1554, 4294901760
    %2550 = vmatpush.msra.mxu0 %v2549
    %v2551 = vand.u32 %v1550, 4294901760
    %2552 = vmatpush.msra.mxu0 %v2551
    %v2553 = vand.u32 %v1546, 4294901760
    %2554 = vmatpush.msra.mxu0 %v2553
    %v2555 = vand.u32 %v1542, 4294901760
    %2556 = vmatpush.msra.mxu0 %v2555
    %v2557 = vand.u32 %v1538, 4294901760
    %2558 = vmatpush.msra.mxu0 %v2557
    %v2559 = vand.u32 %v1534, 4294901760
    %2560 = vmatpush.msra.mxu0 %v2559
    %v2561 = vand.u32 %v1530, 4294901760
    %2562 = vmatpush.msra.mxu0 %v2561
    %v2563 = vand.u32 %v1526, 4294901760
    %2564 = vmatpush.msra.mxu0 %v2563
    %v2565 = vand.u32 %v1522, 4294901760
    %2566 = vmatpush.msra.mxu0 %v2565
    %v2567 = vand.u32 %v1518, 4294901760
    %2568 = vmatpush.msra.mxu0 %v2567
    %v2569 = vand.u32 %v1514, 4294901760
    %v2570 = vsub.f32 %v1514, %v2569
    %v2571 = vand.u32 %v2570, 4294901760
    %2572 = vmatmul.f32.gmra.mxu0 %v2571
    %v2573 = vpop.f32.mrf.mxu0
    %v2574 = vadd.f32 %v2530, %v2573
    %v2575 = vand.u32 %v1515, 4294901760
    %v2576 = vsub.f32 %v1515, %v2575
    %v2577 = vand.u32 %v2576, 4294901760
    %2578 = vmatmul.f32.gmra.mxu0 %v2577
    %v2579 = vpop.f32.mrf.mxu0
    %v2580 = vadd.f32 %v2535, %v2579
    %2581 = vdwg.mxu0
    %v2582 = vand.u32 %v1578, 4294901760
    %v2583 = vsub.f32 %v1578, %v2582
    %v2584 = vand.u32 %v2583, 4294901760
    %2585 = vmatpush.msra.mxu0 %v2584
    %v2586 = vand.u32 %v1574, 4294901760
    %v2587 = vsub.f32 %v1574, %v2586
    %v2588 = vand.u32 %v2587, 4294901760
    %2589 = vmatpush.msra.mxu0 %v2588
    %v2590 = vand.u32 %v1570, 4294901760
    %v2591 = vsub.f32 %v1570, %v2590
    %v2592 = vand.u32 %v2591, 4294901760
    %2593 = vmatpush.msra.mxu0 %v2592
    %v2594 = vand.u32 %v1566, 4294901760
    %v2595 = vsub.f32 %v1566, %v2594
    %v2596 = vand.u32 %v2595, 4294901760
    %2597 = vmatpush.msra.mxu0 %v2596
    %v2598 = vand.u32 %v1562, 4294901760
    %v2599 = vsub.f32 %v1562, %v2598
    %v2600 = vand.u32 %v2599, 4294901760
    %2601 = vmatpush.msra.mxu0 %v2600
    %v2602 = vand.u32 %v1558, 4294901760
    %v2603 = vsub.f32 %v1558, %v2602
    %v2604 = vand.u32 %v2603, 4294901760
    %2605 = vmatpush.msra.mxu0 %v2604
    %v2606 = vand.u32 %v1554, 4294901760
    %v2607 = vsub.f32 %v1554, %v2606
    %v2608 = vand.u32 %v2607, 4294901760
    %2609 = vmatpush.msra.mxu0 %v2608
    %v2610 = vand.u32 %v1550, 4294901760
    %v2611 = vsub.f32 %v1550, %v2610
    %v2612 = vand.u32 %v2611, 4294901760
    %2613 = vmatpush.msra.mxu0 %v2612
    %v2614 = vand.u32 %v1546, 4294901760
    %v2615 = vsub.f32 %v1546, %v2614
    %v2616 = vand.u32 %v2615, 4294901760
    %2617 = vmatpush.msra.mxu0 %v2616
    %v2618 = vand.u32 %v1542, 4294901760
    %v2619 = vsub.f32 %v1542, %v2618
    %v2620 = vand.u32 %v2619, 4294901760
    %2621 = vmatpush.msra.mxu0 %v2620
    %v2622 = vand.u32 %v1538, 4294901760
    %v2623 = vsub.f32 %v1538, %v2622
    %v2624 = vand.u32 %v2623, 4294901760
    %2625 = vmatpush.msra.mxu0 %v2624
    %v2626 = vand.u32 %v1534, 4294901760
    %v2627 = vsub.f32 %v1534, %v2626
    %v2628 = vand.u32 %v2627, 4294901760
    %2629 = vmatpush.msra.mxu0 %v2628
    %v2630 = vand.u32 %v1530, 4294901760
    %v2631 = vsub.f32 %v1530, %v2630
    %v2632 = vand.u32 %v2631, 4294901760
    %2633 = vmatpush.msra.mxu0 %v2632
    %v2634 = vand.u32 %v1526, 4294901760
    %v2635 = vsub.f32 %v1526, %v2634
    %v2636 = vand.u32 %v2635, 4294901760
    %2637 = vmatpush.msra.mxu0 %v2636
    %v2638 = vand.u32 %v1522, 4294901760
    %v2639 = vsub.f32 %v1522, %v2638
    %v2640 = vand.u32 %v2639, 4294901760
    %2641 = vmatpush.msra.mxu0 %v2640
    %v2642 = vand.u32 %v1518, 4294901760
    %v2643 = vsub.f32 %v1518, %v2642
    %v2644 = vand.u32 %v2643, 4294901760
    %2645 = vmatpush.msra.mxu0 %v2644
    %v2646 = vand.u32 %v1514, 4294901760
    %2647 = vmatmul.f32.gmra.mxu0 %v2646
    %v2648 = vpop.f32.mrf.mxu0
    %v2649 = vadd.f32 %v2574, %v2648
    %v2650 = vand.u32 %v1515, 4294901760
    %2651 = vmatmul.f32.gmra.mxu0 %v2650
    %v2652 = vpop.f32.mrf.mxu0
    %v2653 = vadd.f32 %v2580, %v2652
    %2654 = vdwg.mxu0
    %v2655 = vand.u32 %v1578, 4294901760
    %2656 = vmatpush.msra.mxu0 %v2655
    %v2657 = vand.u32 %v1574, 4294901760
    %2658 = vmatpush.msra.mxu0 %v2657
    %v2659 = vand.u32 %v1570, 4294901760
    %2660 = vmatpush.msra.mxu0 %v2659
    %v2661 = vand.u32 %v1566, 4294901760
    %2662 = vmatpush.msra.mxu0 %v2661
    %v2663 = vand.u32 %v1562, 4294901760
    %2664 = vmatpush.msra.mxu0 %v2663
    %v2665 = vand.u32 %v1558, 4294901760
    %2666 = vmatpush.msra.mxu0 %v2665
    %v2667 = vand.u32 %v1554, 4294901760
    %2668 = vmatpush.msra.mxu0 %v2667
    %v2669 = vand.u32 %v1550, 4294901760
    %2670 = vmatpush.msra.mxu0 %v2669
    %v2671 = vand.u32 %v1546, 4294901760
    %2672 = vmatpush.msra.mxu0 %v2671
    %v2673 = vand.u32 %v1542, 4294901760
    %2674 = vmatpush.msra.mxu0 %v2673
    %v2675 = vand.u32 %v1538, 4294901760
    %2676 = vmatpush.msra.mxu0 %v2675
    %v2677 = vand.u32 %v1534, 4294901760
    %2678 = vmatpush.msra.mxu0 %v2677
    %v2679 = vand.u32 %v1530, 4294901760
    %2680 = vmatpush.msra.mxu0 %v2679
    %v2681 = vand.u32 %v1526, 4294901760
    %2682 = vmatpush.msra.mxu0 %v2681
    %v2683 = vand.u32 %v1522, 4294901760
    %2684 = vmatpush.msra.mxu0 %v2683
    %v2685 = vand.u32 %v1518, 4294901760
    %2686 = vmatpush.msra.mxu0 %v2685
    %v2687 = vand.u32 %v1514, 4294901760
    %2688 = vmatmul.f32.gmra.mxu0 %v2687
    %v2689 = vpop.f32.mrf.mxu0
    %v2690 = vadd.f32 %v2649, %v2689
    %v2691 = vand.u32 %v1515, 4294901760
    %2692 = vmatmul.f32.gmra.mxu0 %v2691
    %v2693 = vpop.f32.mrf.mxu0
    %v2694 = vadd.f32 %v2653, %v2693
    %2695 = vdwg.mxu0
    %v2696 = vand.u32 %v1579, 4294901760
    %2697 = vmatpush.msra.mxu0 %v2696
    %v2698 = vand.u32 %v1575, 4294901760
    %2699 = vmatpush.msra.mxu0 %v2698
    %v2700 = vand.u32 %v1571, 4294901760
    %2701 = vmatpush.msra.mxu0 %v2700
    %v2702 = vand.u32 %v1567, 4294901760
    %2703 = vmatpush.msra.mxu0 %v2702
    %v2704 = vand.u32 %v1563, 4294901760
    %2705 = vmatpush.msra.mxu0 %v2704
    %v2706 = vand.u32 %v1559, 4294901760
    %2707 = vmatpush.msra.mxu0 %v2706
    %v2708 = vand.u32 %v1555, 4294901760
    %2709 = vmatpush.msra.mxu0 %v2708
    %v2710 = vand.u32 %v1551, 4294901760
    %2711 = vmatpush.msra.mxu0 %v2710
    %v2712 = vand.u32 %v1547, 4294901760
    %2713 = vmatpush.msra.mxu0 %v2712
    %v2714 = vand.u32 %v1543, 4294901760
    %2715 = vmatpush.msra.mxu0 %v2714
    %v2716 = vand.u32 %v1539, 4294901760
    %2717 = vmatpush.msra.mxu0 %v2716
    %v2718 = vand.u32 %v1535, 4294901760
    %2719 = vmatpush.msra.mxu0 %v2718
    %v2720 = vand.u32 %v1531, 4294901760
    %2721 = vmatpush.msra.mxu0 %v2720
    %v2722 = vand.u32 %v1527, 4294901760
    %2723 = vmatpush.msra.mxu0 %v2722
    %v2724 = vand.u32 %v1523, 4294901760
    %2725 = vmatpush.msra.mxu0 %v2724
    %v2726 = vand.u32 %v1519, 4294901760
    %2727 = vmatpush.msra.mxu0 %v2726
    %v2728 = vand.u32 %v1514, 4294901760
    %v2729 = vsub.f32 %v1514, %v2728
    %v2730 = vand.u32 %v2729, 4294901760
    %v2731 = vsub.f32 %v2729, %v2730
    %v2732 = vand.u32 %v2731, 4294901760
    %2733 = vmatmul.f32.gmra.mxu0 %v2732
    %v2734 = vpop.f32.mrf.mxu0
    %v2735 = vadd.f32 0.0, %v2734
    %v2736 = vand.u32 %v1515, 4294901760
    %v2737 = vsub.f32 %v1515, %v2736
    %v2738 = vand.u32 %v2737, 4294901760
    %v2739 = vsub.f32 %v2737, %v2738
    %v2740 = vand.u32 %v2739, 4294901760
    %2741 = vmatmul.f32.gmra.mxu0 %v2740
    %v2742 = vpop.f32.mrf.mxu0
    %v2743 = vadd.f32 0.0, %v2742
    %2744 = vdwg.mxu0
    %v2745 = vand.u32 %v1579, 4294901760
    %v2746 = vsub.f32 %v1579, %v2745
    %v2747 = vand.u32 %v2746, 4294901760
    %v2748 = vsub.f32 %v2746, %v2747
    %v2749 = vand.u32 %v2748, 4294901760
    %2750 = vmatpush.msra.mxu0 %v2749
    %v2751 = vand.u32 %v1575, 4294901760
    %v2752 = vsub.f32 %v1575, %v2751
    %v2753 = vand.u32 %v2752, 4294901760
    %v2754 = vsub.f32 %v2752, %v2753
    %v2755 = vand.u32 %v2754, 4294901760
    %2756 = vmatpush.msra.mxu0 %v2755
    %v2757 = vand.u32 %v1571, 4294901760
    %v2758 = vsub.f32 %v1571, %v2757
    %v2759 = vand.u32 %v2758, 4294901760
    %v2760 = vsub.f32 %v2758, %v2759
    %v2761 = vand.u32 %v2760, 4294901760
    %2762 = vmatpush.msra.mxu0 %v2761
    %v2763 = vand.u32 %v1567, 4294901760
    %v2764 = vsub.f32 %v1567, %v2763
    %v2765 = vand.u32 %v2764, 4294901760
    %v2766 = vsub.f32 %v2764, %v2765
    %v2767 = vand.u32 %v2766, 4294901760
    %2768 = vmatpush.msra.mxu0 %v2767
    %v2769 = vand.u32 %v1563, 4294901760
    %v2770 = vsub.f32 %v1563, %v2769
    %v2771 = vand.u32 %v2770, 4294901760
    %v2772 = vsub.f32 %v2770, %v2771
    %v2773 = vand.u32 %v2772, 4294901760
    %2774 = vmatpush.msra.mxu0 %v2773
    %v2775 = vand.u32 %v1559, 4294901760
    %v2776 = vsub.f32 %v1559, %v2775
    %v2777 = vand.u32 %v2776, 4294901760
    %v2778 = vsub.f32 %v2776, %v2777
    %v2779 = vand.u32 %v2778, 4294901760
    %2780 = vmatpush.msra.mxu0 %v2779
    %v2781 = vand.u32 %v1555, 4294901760
    %v2782 = vsub.f32 %v1555, %v2781
    %v2783 = vand.u32 %v2782, 4294901760
    %v2784 = vsub.f32 %v2782, %v2783
    %v2785 = vand.u32 %v2784, 4294901760
    %2786 = vmatpush.msra.mxu0 %v2785
    %v2787 = vand.u32 %v1551, 4294901760
    %v2788 = vsub.f32 %v1551, %v2787
    %v2789 = vand.u32 %v2788, 4294901760
    %v2790 = vsub.f32 %v2788, %v2789
    %v2791 = vand.u32 %v2790, 4294901760
    %2792 = vmatpush.msra.mxu0 %v2791
    %v2793 = vand.u32 %v1547, 4294901760
    %v2794 = vsub.f32 %v1547, %v2793
    %v2795 = vand.u32 %v2794, 4294901760
    %v2796 = vsub.f32 %v2794, %v2795
    %v2797 = vand.u32 %v2796, 4294901760
    %2798 = vmatpush.msra.mxu0 %v2797
    %v2799 = vand.u32 %v1543, 4294901760
    %v2800 = vsub.f32 %v1543, %v2799
    %v2801 = vand.u32 %v2800, 4294901760
    %v2802 = vsub.f32 %v2800, %v2801
    %v2803 = vand.u32 %v2802, 4294901760
    %2804 = vmatpush.msra.mxu0 %v2803
    %v2805 = vand.u32 %v1539, 4294901760
    %v2806 = vsub.f32 %v1539, %v2805
    %v2807 = vand.u32 %v2806, 4294901760
    %v2808 = vsub.f32 %v2806, %v2807
    %v2809 = vand.u32 %v2808, 4294901760
    %2810 = vmatpush.msra.mxu0 %v2809
    %v2811 = vand.u32 %v1535, 4294901760
    %v2812 = vsub.f32 %v1535, %v2811
    %v2813 = vand.u32 %v2812, 4294901760
    %v2814 = vsub.f32 %v2812, %v2813
    %v2815 = vand.u32 %v2814, 4294901760
    %2816 = vmatpush.msra.mxu0 %v2815
    %v2817 = vand.u32 %v1531, 4294901760
    %v2818 = vsub.f32 %v1531, %v2817
    %v2819 = vand.u32 %v2818, 4294901760
    %v2820 = vsub.f32 %v2818, %v2819
    %v2821 = vand.u32 %v2820, 4294901760
    %2822 = vmatpush.msra.mxu0 %v2821
    %v2823 = vand.u32 %v1527, 4294901760
    %v2824 = vsub.f32 %v1527, %v2823
    %v2825 = vand.u32 %v2824, 4294901760
    %v2826 = vsub.f32 %v2824, %v2825
    %v2827 = vand.u32 %v2826, 4294901760
    %2828 = vmatpush.msra.mxu0 %v2827
    %v2829 = vand.u32 %v1523, 4294901760
    %v2830 = vsub.f32 %v1523, %v2829
    %v2831 = vand.u32 %v2830, 4294901760
    %v2832 = vsub.f32 %v2830, %v2831
    %v2833 = vand.u32 %v2832, 4294901760
    %2834 = vmatpush.msra.mxu0 %v2833
    %v2835 = vand.u32 %v1519, 4294901760
    %v2836 = vsub.f32 %v1519, %v2835
    %v2837 = vand.u32 %v2836, 4294901760
    %v2838 = vsub.f32 %v2836, %v2837
    %v2839 = vand.u32 %v2838, 4294901760
    %2840 = vmatpush.msra.mxu0 %v2839
    %v2841 = vand.u32 %v1514, 4294901760
    %2842 = vmatmul.f32.gmra.mxu0 %v2841
    %v2843 = vpop.f32.mrf.mxu0
    %v2844 = vadd.f32 %v2735, %v2843
    %v2845 = vand.u32 %v1515, 4294901760
    %2846 = vmatmul.f32.gmra.mxu0 %v2845
    %v2847 = vpop.f32.mrf.mxu0
    %v2848 = vadd.f32 %v2743, %v2847
    %2849 = vdwg.mxu0
    %v2850 = vand.u32 %v1579, 4294901760
    %v2851 = vsub.f32 %v1579, %v2850
    %2852 = vmatpush.msra.mxu0 %v2851
    %v2853 = vand.u32 %v1575, 4294901760
    %v2854 = vsub.f32 %v1575, %v2853
    %2855 = vmatpush.msra.mxu0 %v2854
    %v2856 = vand.u32 %v1571, 4294901760
    %v2857 = vsub.f32 %v1571, %v2856
    %2858 = vmatpush.msra.mxu0 %v2857
    %v2859 = vand.u32 %v1567, 4294901760
    %v2860 = vsub.f32 %v1567, %v2859
    %2861 = vmatpush.msra.mxu0 %v2860
    %v2862 = vand.u32 %v1563, 4294901760
    %v2863 = vsub.f32 %v1563, %v2862
    %2864 = vmatpush.msra.mxu0 %v2863
    %v2865 = vand.u32 %v1559, 4294901760
    %v2866 = vsub.f32 %v1559, %v2865
    %2867 = vmatpush.msra.mxu0 %v2866
    %v2868 = vand.u32 %v1555, 4294901760
    %v2869 = vsub.f32 %v1555, %v2868
    %2870 = vmatpush.msra.mxu0 %v2869
    %v2871 = vand.u32 %v1551, 4294901760
    %v2872 = vsub.f32 %v1551, %v2871
    %2873 = vmatpush.msra.mxu0 %v2872
    %v2874 = vand.u32 %v1547, 4294901760
    %v2875 = vsub.f32 %v1547, %v2874
    %2876 = vmatpush.msra.mxu0 %v2875
    %v2877 = vand.u32 %v1543, 4294901760
    %v2878 = vsub.f32 %v1543, %v2877
    %2879 = vmatpush.msra.mxu0 %v2878
    %v2880 = vand.u32 %v1539, 4294901760
    %v2881 = vsub.f32 %v1539, %v2880
    %2882 = vmatpush.msra.mxu0 %v2881
    %v2883 = vand.u32 %v1535, 4294901760
    %v2884 = vsub.f32 %v1535, %v2883
    %2885 = vmatpush.msra.mxu0 %v2884
    %v2886 = vand.u32 %v1531, 4294901760
    %v2887 = vsub.f32 %v1531, %v2886
    %2888 = vmatpush.msra.mxu0 %v2887
    %v2889 = vand.u32 %v1527, 4294901760
    %v2890 = vsub.f32 %v1527, %v2889
    %2891 = vmatpush.msra.mxu0 %v2890
    %v2892 = vand.u32 %v1523, 4294901760
    %v2893 = vsub.f32 %v1523, %v2892
    %2894 = vmatpush.msra.mxu0 %v2893
    %v2895 = vand.u32 %v1519, 4294901760
    %v2896 = vsub.f32 %v1519, %v2895
    %2897 = vmatpush.msra.mxu0 %v2896
    %v2898 = vand.u32 %v1514, 4294901760
    %v2899 = vsub.f32 %v1514, %v2898
    %2900 = vmatmul.f32.gmra.mxu0 %v2899
    %v2901 = vpop.f32.mrf.mxu0
    %v2902 = vadd.f32 %v2844, %v2901
    %v2903 = vand.u32 %v1515, 4294901760
    %v2904 = vsub.f32 %v1515, %v2903
    %2905 = vmatmul.f32.gmra.mxu0 %v2904
    %v2906 = vpop.f32.mrf.mxu0
    %v2907 = vadd.f32 %v2848, %v2906
    %2908 = vdwg.mxu0
    %v2909 = vand.u32 %v1579, 4294901760
    %2910 = vmatpush.msra.mxu0 %v2909
    %v2911 = vand.u32 %v1575, 4294901760
    %2912 = vmatpush.msra.mxu0 %v2911
    %v2913 = vand.u32 %v1571, 4294901760
    %2914 = vmatpush.msra.mxu0 %v2913
    %v2915 = vand.u32 %v1567, 4294901760
    %2916 = vmatpush.msra.mxu0 %v2915
    %v2917 = vand.u32 %v1563, 4294901760
    %2918 = vmatpush.msra.mxu0 %v2917
    %v2919 = vand.u32 %v1559, 4294901760
    %2920 = vmatpush.msra.mxu0 %v2919
    %v2921 = vand.u32 %v1555, 4294901760
    %2922 = vmatpush.msra.mxu0 %v2921
    %v2923 = vand.u32 %v1551, 4294901760
    %2924 = vmatpush.msra.mxu0 %v2923
    %v2925 = vand.u32 %v1547, 4294901760
    %2926 = vmatpush.msra.mxu0 %v2925
    %v2927 = vand.u32 %v1543, 4294901760
    %2928 = vmatpush.msra.mxu0 %v2927
    %v2929 = vand.u32 %v1539, 4294901760
    %2930 = vmatpush.msra.mxu0 %v2929
    %v2931 = vand.u32 %v1535, 4294901760
    %2932 = vmatpush.msra.mxu0 %v2931
    %v2933 = vand.u32 %v1531, 4294901760
    %2934 = vmatpush.msra.mxu0 %v2933
    %v2935 = vand.u32 %v1527, 4294901760
    %2936 = vmatpush.msra.mxu0 %v2935
    %v2937 = vand.u32 %v1523, 4294901760
    %2938 = vmatpush.msra.mxu0 %v2937
    %v2939 = vand.u32 %v1519, 4294901760
    %2940 = vmatpush.msra.mxu0 %v2939
    %v2941 = vand.u32 %v1514, 4294901760
    %v2942 = vsub.f32 %v1514, %v2941
    %v2943 = vand.u32 %v2942, 4294901760
    %2944 = vmatmul.f32.gmra.mxu0 %v2943
    %v2945 = vpop.f32.mrf.mxu0
    %v2946 = vadd.f32 %v2902, %v2945
    %v2947 = vand.u32 %v1515, 4294901760
    %v2948 = vsub.f32 %v1515, %v2947
    %v2949 = vand.u32 %v2948, 4294901760
    %2950 = vmatmul.f32.gmra.mxu0 %v2949
    %v2951 = vpop.f32.mrf.mxu0
    %v2952 = vadd.f32 %v2907, %v2951
    %2953 = vdwg.mxu0
    %v2954 = vand.u32 %v1579, 4294901760
    %v2955 = vsub.f32 %v1579, %v2954
    %v2956 = vand.u32 %v2955, 4294901760
    %2957 = vmatpush.msra.mxu0 %v2956
    %v2958 = vand.u32 %v1575, 4294901760
    %v2959 = vsub.f32 %v1575, %v2958
    %v2960 = vand.u32 %v2959, 4294901760
    %2961 = vmatpush.msra.mxu0 %v2960
    %v2962 = vand.u32 %v1571, 4294901760
    %v2963 = vsub.f32 %v1571, %v2962
    %v2964 = vand.u32 %v2963, 4294901760
    %2965 = vmatpush.msra.mxu0 %v2964
    %v2966 = vand.u32 %v1567, 4294901760
    %v2967 = vsub.f32 %v1567, %v2966
    %v2968 = vand.u32 %v2967, 4294901760
    %2969 = vmatpush.msra.mxu0 %v2968
    %v2970 = vand.u32 %v1563, 4294901760
    %v2971 = vsub.f32 %v1563, %v2970
    %v2972 = vand.u32 %v2971, 4294901760
    %2973 = vmatpush.msra.mxu0 %v2972
    %v2974 = vand.u32 %v1559, 4294901760
    %v2975 = vsub.f32 %v1559, %v2974
    %v2976 = vand.u32 %v2975, 4294901760
    %2977 = vmatpush.msra.mxu0 %v2976
    %v2978 = vand.u32 %v1555, 4294901760
    %v2979 = vsub.f32 %v1555, %v2978
    %v2980 = vand.u32 %v2979, 4294901760
    %2981 = vmatpush.msra.mxu0 %v2980
    %v2982 = vand.u32 %v1551, 4294901760
    %v2983 = vsub.f32 %v1551, %v2982
    %v2984 = vand.u32 %v2983, 4294901760
    %2985 = vmatpush.msra.mxu0 %v2984
    %v2986 = vand.u32 %v1547, 4294901760
    %v2987 = vsub.f32 %v1547, %v2986
    %v2988 = vand.u32 %v2987, 4294901760
    %2989 = vmatpush.msra.mxu0 %v2988
    %v2990 = vand.u32 %v1543, 4294901760
    %v2991 = vsub.f32 %v1543, %v2990
    %v2992 = vand.u32 %v2991, 4294901760
    %2993 = vmatpush.msra.mxu0 %v2992
    %v2994 = vand.u32 %v1539, 4294901760
    %v2995 = vsub.f32 %v1539, %v2994
    %v2996 = vand.u32 %v2995, 4294901760
    %2997 = vmatpush.msra.mxu0 %v2996
    %v2998 = vand.u32 %v1535, 4294901760
    %v2999 = vsub.f32 %v1535, %v2998
    %v3000 = vand.u32 %v2999, 4294901760
    %3001 = vmatpush.msra.mxu0 %v3000
    %v3002 = vand.u32 %v1531, 4294901760
    %v3003 = vsub.f32 %v1531, %v3002
    %v3004 = vand.u32 %v3003, 4294901760
    %3005 = vmatpush.msra.mxu0 %v3004
    %v3006 = vand.u32 %v1527, 4294901760
    %v3007 = vsub.f32 %v1527, %v3006
    %v3008 = vand.u32 %v3007, 4294901760
    %3009 = vmatpush.msra.mxu0 %v3008
    %v3010 = vand.u32 %v1523, 4294901760
    %v3011 = vsub.f32 %v1523, %v3010
    %v3012 = vand.u32 %v3011, 4294901760
    %3013 = vmatpush.msra.mxu0 %v3012
    %v3014 = vand.u32 %v1519, 4294901760
    %v3015 = vsub.f32 %v1519, %v3014
    %v3016 = vand.u32 %v3015, 4294901760
    %3017 = vmatpush.msra.mxu0 %v3016
    %v3018 = vand.u32 %v1514, 4294901760
    %3019 = vmatmul.f32.gmra.mxu0 %v3018
    %v3020 = vpop.f32.mrf.mxu0
    %v3021 = vadd.f32 %v2946, %v3020
    %v3022 = vand.u32 %v1515, 4294901760
    %3023 = vmatmul.f32.gmra.mxu0 %v3022
    %v3024 = vpop.f32.mrf.mxu0
    %v3025 = vadd.f32 %v2952, %v3024
    %3026 = vdwg.mxu0
    %v3027 = vand.u32 %v1579, 4294901760
    %3028 = vmatpush.msra.mxu0 %v3027
    %v3029 = vand.u32 %v1575, 4294901760
    %3030 = vmatpush.msra.mxu0 %v3029
    %v3031 = vand.u32 %v1571, 4294901760
    %3032 = vmatpush.msra.mxu0 %v3031
    %v3033 = vand.u32 %v1567, 4294901760
    %3034 = vmatpush.msra.mxu0 %v3033
    %v3035 = vand.u32 %v1563, 4294901760
    %3036 = vmatpush.msra.mxu0 %v3035
    %v3037 = vand.u32 %v1559, 4294901760
    %3038 = vmatpush.msra.mxu0 %v3037
    %v3039 = vand.u32 %v1555, 4294901760
    %3040 = vmatpush.msra.mxu0 %v3039
    %v3041 = vand.u32 %v1551, 4294901760
    %3042 = vmatpush.msra.mxu0 %v3041
    %v3043 = vand.u32 %v1547, 4294901760
    %3044 = vmatpush.msra.mxu0 %v3043
    %v3045 = vand.u32 %v1543, 4294901760
    %3046 = vmatpush.msra.mxu0 %v3045
    %v3047 = vand.u32 %v1539, 4294901760
    %3048 = vmatpush.msra.mxu0 %v3047
    %v3049 = vand.u32 %v1535, 4294901760
    %3050 = vmatpush.msra.mxu0 %v3049
    %v3051 = vand.u32 %v1531, 4294901760
    %3052 = vmatpush.msra.mxu0 %v3051
    %v3053 = vand.u32 %v1527, 4294901760
    %3054 = vmatpush.msra.mxu0 %v3053
    %v3055 = vand.u32 %v1523, 4294901760
    %3056 = vmatpush.msra.mxu0 %v3055
    %v3057 = vand.u32 %v1519, 4294901760
    %3058 = vmatpush.msra.mxu0 %v3057
    %v3059 = vand.u32 %v1514, 4294901760
    %3060 = vmatmul.f32.gmra.mxu0 %v3059
    %v3061 = vpop.f32.mrf.mxu0
    %v3062 = vadd.f32 %v3021, %v3061
    %v3063 = vand.u32 %v1515, 4294901760
    %3064 = vmatmul.f32.gmra.mxu0 %v3063
    %v3065 = vpop.f32.mrf.mxu0
    %v3066 = vadd.f32 %v3025, %v3065
    %3067 = vdwg.mxu0
    %v3068 = vadd.f32 %v1946, %v453
    %v3069 = vadd.f32 %v2318, %v766
    %v3070 = vadd.f32 %v2690, %v1091
    %v3071 = vadd.f32 %v3062, %v1416
    %v3072 = vadd.f32 %v1950, %v453
    %v3073 = vadd.f32 %v2322, %v766
    %v3074 = vadd.f32 %v2694, %v1091
    %v3075 = vadd.f32 %v3066, %v1416
    %v3076 = vperm.slane %v1418, 1
    %v3078 = vadd.f32 %v3068, %v1420
    %v3079 = vadd.f32 %v3069, %v3076
    %v3080 = vadd.f32 %v3070, %v1421
    %v3081 = vadd.f32 %v3071, %v1422
    %v3082 = vadd.f32 %v3072, %v1420
    %v3083 = vadd.f32 %v3073, %v3076
    %v3084 = vadd.f32 %v3074, %v1421
    %v3085 = vadd.f32 %v3075, %v1422
    %v3086 = vxor.u32 %v3078, 2147483648
    %v3087 = vxor.u32 %v3082, 2147483648
    %v3088 = vmul.f32 %v3086, 1.442695
    %v3089 = vpow.pop %v3088
    %v3090 = vmul.f32 %v3087, 1.442695
    %v3091 = vpow.pop %v3090
    %v3092 = vadd.f32 %v3089, 1.0
    %v3093 = vadd.f32 %v3091, 1.0
    %v3094 = vrcp.pop %v3092
    %v3095 = vmul.f32 %v3092, %v3094
    %v3096 = vsub.f32 1.0, %v3095
    %v3097 = vmul.f32 %v3094, %v3096
    %v3098 = vadd.f32 %v3094, %v3097
    %vm3099 = vweird.f32 %v3092
    %vm3100 = vweird.f32 %v3094
    %vm3101 = vmor %vm3099, %vm3100
    %v3102 = vsel %vm3101, %v3094, %v3098
    %v3103 = vand.u32 2147483647, %v3092
    %vm3104 = vcmp.eq.f32.partialorder %v3103, 8.507059e+37
    %v3105 = vand.u32 %v3092, 2147483648
    %v3106 = vor.u32 1.1754944e-38, %v3105
    %v3107 = vsel %vm3104, %v3106, %v3102
    %v3108 = vmul.f32 1.0, %v3107
    %v3109 = vrcp.pop %v3093
    %v3110 = vmul.f32 %v3093, %v3109
    %v3111 = vsub.f32 1.0, %v3110
    %v3112 = vmul.f32 %v3109, %v3111
    %v3113 = vadd.f32 %v3109, %v3112
    %vm3114 = vweird.f32 %v3093
    %vm3115 = vweird.f32 %v3109
    %vm3116 = vmor %vm3114, %vm3115
    %v3117 = vsel %vm3116, %v3109, %v3113
    %v3118 = vand.u32 2147483647, %v3093
    %vm3119 = vcmp.eq.f32.partialorder %v3118, 8.507059e+37
    %v3120 = vand.u32 %v3093, 2147483648
    %v3121 = vor.u32 1.1754944e-38, %v3120
    %v3122 = vsel %vm3119, %v3121, %v3117
    %v3123 = vmul.f32 1.0, %v3122
    %v3124 = vxor.u32 %v3079, 2147483648
    %v3125 = vxor.u32 %v3083, 2147483648
    %v3126 = vmul.f32 %v3124, 1.442695
    %v3127 = vpow.pop %v3126
    %v3128 = vmul.f32 %v3125, 1.442695
    %v3129 = vpow.pop %v3128
    %v3130 = vadd.f32 %v3127, 1.0
    %v3131 = vadd.f32 %v3129, 1.0
    %v3132 = vrcp.pop %v3130
    %v3133 = vmul.f32 %v3130, %v3132
    %v3134 = vsub.f32 1.0, %v3133
    %v3135 = vmul.f32 %v3132, %v3134
    %v3136 = vadd.f32 %v3132, %v3135
    %vm3137 = vweird.f32 %v3130
    %vm3138 = vweird.f32 %v3132
    %vm3139 = vmor %vm3137, %vm3138
    %v3140 = vsel %vm3139, %v3132, %v3136
    %v3141 = vand.u32 2147483647, %v3130
    %vm3142 = vcmp.eq.f32.partialorder %v3141, 8.507059e+37
    %v3143 = vand.u32 %v3130, 2147483648
    %v3144 = vor.u32 1.1754944e-38, %v3143
    %v3145 = vsel %vm3142, %v3144, %v3140
    %v3146 = vmul.f32 1.0, %v3145
    %v3147 = vrcp.pop %v3131
    %v3148 = vmul.f32 %v3131, %v3147
    %v3149 = vsub.f32 1.0, %v3148
    %v3150 = vmul.f32 %v3147, %v3149
    %v3151 = vadd.f32 %v3147, %v3150
    %vm3152 = vweird.f32 %v3131
    %vm3153 = vweird.f32 %v3147
    %vm3154 = vmor %vm3152, %vm3153
    %v3155 = vsel %vm3154, %v3147, %v3151
    %v3156 = vand.u32 2147483647, %v3131
    %vm3157 = vcmp.eq.f32.partialorder %v3156, 8.507059e+37
    %v3158 = vand.u32 %v3131, 2147483648
    %v3159 = vor.u32 1.1754944e-38, %v3158
    %v3160 = vsel %vm3157, %v3159, %v3155
    %v3161 = vmul.f32 1.0, %v3160
    %v3162 = vtanh.pop %v3080
    %v3163 = vtanh.pop %v3084
    %v3164 = vxor.u32 %v3081, 2147483648
    %v3165 = vxor.u32 %v3085, 2147483648
    %v3166 = vmul.f32 %v3164, 1.442695
    %v3167 = vpow.pop %v3166
    %v3168 = vmul.f32 %v3165, 1.442695
    %v3169 = vpow.pop %v3168
    %v3170 = vadd.f32 %v3167, 1.0
    %v3171 = vadd.f32 %v3169, 1.0
    %v3172 = vrcp.pop %v3170
    %v3173 = vmul.f32 %v3170, %v3172
    %v3174 = vsub.f32 1.0, %v3173
    %v3175 = vmul.f32 %v3172, %v3174
    %v3176 = vadd.f32 %v3172, %v3175
    %vm3177 = vweird.f32 %v3170
    %vm3178 = vweird.f32 %v3172
    %vm3179 = vmor %vm3177, %vm3178
    %v3180 = vsel %vm3179, %v3172, %v3176
    %v3181 = vand.u32 2147483647, %v3170
    %vm3182 = vcmp.eq.f32.partialorder %v3181, 8.507059e+37
    %v3183 = vand.u32 %v3170, 2147483648
    %v3184 = vor.u32 1.1754944e-38, %v3183
    %v3185 = vsel %vm3182, %v3184, %v3180
    %v3186 = vmul.f32 1.0, %v3185
    %v3187 = vrcp.pop %v3171
    %v3188 = vmul.f32 %v3171, %v3187
    %v3189 = vsub.f32 1.0, %v3188
    %v3190 = vmul.f32 %v3187, %v3189
    %v3191 = vadd.f32 %v3187, %v3190
    %vm3192 = vweird.f32 %v3171
    %vm3193 = vweird.f32 %v3187
    %vm3194 = vmor %vm3192, %vm3193
    %v3195 = vsel %vm3194, %v3187, %v3191
    %v3196 = vand.u32 2147483647, %v3171
    %vm3197 = vcmp.eq.f32.partialorder %v3196, 8.507059e+37
    %v3198 = vand.u32 %v3171, 2147483648
    %v3199 = vor.u32 1.1754944e-38, %v3198
    %v3200 = vsel %vm3197, %v3199, %v3195
    %v3201 = vmul.f32 1.0, %v3200
    %v3202 = vmul.f32 %v3146, %v1510
    %v3203 = vmul.f32 %v3161, %v1511
    %v3204 = vmul.f32 %v3108, %v3162
    %v3205 = vmul.f32 %v3123, %v3163
    %v3206 = vadd.f32 %v3202, %v3204
    %v3207 = vadd.f32 %v3203, %v3205
    %v3208 = vtanh.pop %v3206
    %v3209 = vtanh.pop %v3207
    %v3210 = vmul.f32 %v3186, %v3208
    %v3211 = vmul.f32 %v3201, %v3209
    %v3212 = vld [vmem:[%s4] sm:$0x1]
    %v3214 = vperm.slane %v3212, 0
    %v3216 = vmul.f32 %v1514, %v3214
    %v3217 = vmul.f32 %v1515, %v3214
    %v3218 = vmul.f32 %v3210, %v3214
    %v3219 = vmul.f32 %v3211, %v3214
    %3220 = vadd.xlane.f32.xlu0 %v3216
    %v3221 = vpop.xlane.xlu0 %3220
    %3222 = vadd.xlane.f32.xlu0 %v3217
    %v3223 = vpop.xlane.xlu0 %3222
    %3224 = vadd.xlane.f32.xlu0 %v3218
    %v3225 = vpop.xlane.xlu0 %3224
    %3226 = vadd.xlane.f32.xlu0 %v3219
    %v3227 = vpop.xlane.xlu0 %3226
    %v3228 = vld [vmem:[#allocation2] sm:$0x1]
    %v3230 = vperm.slane %v3228, 0
    %v3232 = vadd.f32 %v3221, %v3230
    %v3233 = vadd.f32 %v3223, %v3230
    %v3234 = vadd.f32 %v3225, %v3230
    %v3235 = vadd.f32 %v3227, %v3230
    %v3236 = vsub.f32 %v3232, %v3233
    %v3237 = vsub.f32 %v3234, %v3235
    %3239 = vrot.lane.b32.xlu0 %v3237, 1
    %v3240 = vpop.permute.xlu0 %3239
    %vm3242 = vcmask 7168
    %v3243 = vsel %vm3242, %v3236, %v3240
    %vm3244 = vcmask 15360
    %3245 = vst.msk [vmem:[%s6] sm:$0xff] %vm3244, %v3243
    // Predicated region
    $region34: #{seq_model_forward.1} parent=1 // pred_check
      _
    $region35: #{seq_model_forward.1} parent=1 // pred_check_branch
      %3247 = sbr.rel (0) target = $region37
    $region36: #{seq_model_forward.1} parent=1 // pred_region
      _
    $region37: #{seq_model_forward.1} parent=1 // pred_fallthru
      _
    // Predicated region
    $region38: #{seq_model_forward.1} parent=1 // pred_check
      _
    $region39: #{seq_model_forward.1} parent=1 // pred_check_branch
      %3249 = sbr.rel (0) target = $region41
    $region40: #{seq_model_forward.1} parent=1 // pred_region
      _
    $region41: #{seq_model_forward.1} parent=1 // pred_fallthru
      _
    %3250 = vsyncpa [#allocation4], 1
    %3251 = vsyncpa [#allocation6], 1

</llo_original>
